<compile_context>
chip_gen: v6e
topology: v6e:2x2x1
jax: 0.10.0
libtpu: 0.0.40
codegen_flags: <defaults>
</compile_context>

<pallas_src>
import jax
import jax.numpy as jnp
from jax.experimental import pallas as pl
from jax.experimental.pallas import tpu as pltpu


def _round_up(x, m):
    return ((x + m - 1) // m) * m


# ----------------------------------------------------------------------------
# Fused kernel: GRU stack (PyTorch gate order r, z, n) + dropout + classifier.
# Everything lives in VMEM; single grid step.
# ----------------------------------------------------------------------------
def generator_fused_kernel(x_ref,       # (T, Bp, INp)   embedded inputs, time-major
                           h0_ref,      # (L, Bp, Hp)    initial hidden
                           wih_ref,     # (L, INp, 3Hp)  input->gates weights
                           whh_ref,     # (L, Hp, 3Hp)   hidden->gates weights
                           bgi_ref,     # (L, 1, 3Hp)    b_ih (+ b_hh for r,z) folded
                           bhn_ref,     # (L, 1, Hp)     b_hh of the n gate
                           drop_ref,    # (T*Bp, Hp)     dropout scale (0.0 or 2.0)
                           wcls_ref,    # (Hp, Vp)       classifier weight
                           bcls_ref,    # (1, Vp)        classifier bias
                           logits_ref,  # out: (T, Bp, Vp)
                           hT_ref,      # out: (L, Bp, Hp)
                           seq_scratch,   # VMEM (T, Bp, Hp)   layer activations
                           gi_scratch):   # VMEM (T, Bp, 3Hp)  hoisted input projection
    T, Bp, INp = x_ref.shape
    L = wih_ref.shape[0]
    Hp = whh_ref.shape[1]
    Hp3 = whh_ref.shape[2]
    Vp = wcls_ref.shape[1]

    layer_in = x_ref[...].reshape(T * Bp, INp)          # layer-0 input (T*Bp, INp)

    for l in range(L):                                  # static layer unroll
        w_ih = wih_ref[l]                               # (INp, 3Hp)
        if l > 0:
            w_ih = w_ih[:Hp, :]                         # deeper layers: input width Hp
        # Hoisted input projection for ALL timesteps: one big lane-dense matmul.
        gi_all = jnp.dot(layer_in, w_ih,
                         preferred_element_type=jnp.float32) + bgi_ref[l]
        gi_scratch[...] = gi_all.reshape(T, Bp, Hp3)

        w_hh = whh_ref[l]                               # (Hp, 3Hp), hoisted load
        b_hn = bhn_ref[l]                               # (1, Hp)

        h = h0_ref[l]                                   # (Bp, Hp)
        for t in range(T):                              # static unroll (T is small)
            gi = gi_scratch[t]                          # (Bp, 3Hp)
            gh = jnp.dot(h, w_hh, preferred_element_type=jnp.float32)
            r = jax.nn.sigmoid(gi[:, :Hp] + gh[:, :Hp])
            z = jax.nn.sigmoid(gi[:, Hp:2 * Hp] + gh[:, Hp:2 * Hp])
            n = jnp.tanh(gi[:, 2 * Hp:] + r * (gh[:, 2 * Hp:] + b_hn))
            h = (1.0 - z) * n + z * h
            seq_scratch[t] = h                          # VMEM, full (8,128) vreg store

        hT_ref[l] = h
        layer_in = seq_scratch[...].reshape(T * Bp, Hp)  # feed next layer / classifier

    # Dropout(p=0.5) via the precomputed {0, 2} scale mask, then Linear.
    xd = layer_in * drop_ref[...]
    logits = jnp.dot(xd, wcls_ref[...],
                     preferred_element_type=jnp.float32) + bcls_ref[...]
    logits_ref[...] = logits.reshape(T, Bp, Vp)


def _generator_pallas(x_p, h0_p, wih_p, whh_p, bgi_p, bhn_p, drop_p,
                      wcls_p, bcls_p):
    T, Bp, _ = x_p.shape
    L, _, Hp = h0_p.shape
    Vp = wcls_p.shape[1]
    vmem = lambda: pl.BlockSpec(memory_space=pltpu.MemorySpace.VMEM)
    return pl.pallas_call(
        generator_fused_kernel,
        out_shape=(jax.ShapeDtypeStruct((T, Bp, Vp), jnp.float32),
                   jax.ShapeDtypeStruct((L, Bp, Hp), jnp.float32)),
        in_specs=[vmem() for _ in range(9)],
        out_specs=(vmem(), vmem()),
        scratch_shapes=[pltpu.VMEM((T, Bp, Hp), jnp.float32),
                        pltpu.VMEM((T, Bp, 3 * Hp), jnp.float32)],
    )(x_p, h0_p, wih_p, whh_p, bgi_p, bhn_p, drop_p, wcls_p, bcls_p)


# ----------------------------------------------------------------------------
# Parameter init (PyTorch-shaped) and padding/folding into kernel layout.
# ----------------------------------------------------------------------------
def init_generator_params(key, vocab_size, embedding_size, hidden_size, num_layers):
    keys = jax.random.split(key, 2 + num_layers)
    emb = jax.random.normal(keys[0], (vocab_size, embedding_size), jnp.float32)
    emb = emb.at[0].set(0.0)                       # padding_idx=0

    bound = 1.0 / (hidden_size ** 0.5)
    gru_layers = []
    for l in range(num_layers):
        in_size = embedding_size if l == 0 else hidden_size
        kk = jax.random.split(keys[2 + l], 4)
        # stored transposed relative to PyTorch so we can do x @ W
        wih = jax.random.uniform(kk[0], (in_size, 3 * hidden_size), jnp.float32,
                                 -bound, bound)
        whh = jax.random.uniform(kk[1], (hidden_size, 3 * hidden_size), jnp.float32,
                                 -bound, bound)
        bih = jax.random.uniform(kk[2], (3 * hidden_size,), jnp.float32, -bound, bound)
        bhh = jax.random.uniform(kk[3], (3 * hidden_size,), jnp.float32, -bound, bound)
        gru_layers.append((wih, whh, bih, bhh))

    kc = jax.random.split(keys[1], 2)
    w_cls = jax.random.uniform(kc[0], (hidden_size, vocab_size), jnp.float32,
                               -bound, bound)
    b_cls = jax.random.uniform(kc[1], (vocab_size,), jnp.float32, -bound, bound)
    return {"embedding": emb, "gru": gru_layers, "w_cls": w_cls, "b_cls": b_cls}


def pad_params(params, vocab_size, embedding_size, hidden_size, num_layers):
    V, E, H, L = vocab_size, embedding_size, hidden_size, num_layers
    Hp = _round_up(H, 128)
    INp = max(_round_up(E, 128), Hp)
    Vp = _round_up(V, 128)

    emb_p = jnp.zeros((V, INp), jnp.float32).at[:, :E].set(params["embedding"])

    wih_p = jnp.zeros((L, INp, 3 * Hp), jnp.float32)
    whh_p = jnp.zeros((L, Hp, 3 * Hp), jnp.float32)
    bgi_p = jnp.zeros((L, 1, 3 * Hp), jnp.float32)
    bhn_p = jnp.zeros((L, 1, Hp), jnp.float32)
    for l in range(L):
        wih, whh, bih, bhh = params["gru"][l]
        in_size = wih.shape[0]
        for g in range(3):                       # gate-wise padding: [r | z | n]
            wih_p = wih_p.at[l, :in_size, g * Hp:g * Hp + H].set(
                wih[:, g * H:(g + 1) * H])
            whh_p = whh_p.at[l, :H, g * Hp:g * Hp + H].set(
                whh[:, g * H:(g + 1) * H])
            b = bih[g * H:(g + 1) * H]
            if g < 2:                            # fold b_hh for r,z gates only
                b = b + bhh[g * H:(g + 1) * H]
            bgi_p = bgi_p.at[l, 0, g * Hp:g * Hp + H].set(b)
        bhn_p = bhn_p.at[l, 0, :H].set(bhh[2 * H:])  # b_hh of n gate stays separate

    wcls_p = jnp.zeros((Hp, Vp), jnp.float32).at[:H, :V].set(params["w_cls"])
    bcls_p = jnp.zeros((1, Vp), jnp.float32).at[0, :V].set(params["b_cls"])

    return {"emb": emb_p, "wih": wih_p, "whh": whh_p, "bgi": bgi_p, "bhn": bhn_p,
            "wcls": wcls_p, "bcls": bcls_p,
            "dims": {"V": V, "E": E, "H": H, "L": L,
                     "Hp": Hp, "INp": INp, "Vp": Vp}}


# ----------------------------------------------------------------------------
# Generator.forward equivalent (batch_first token ids (B, T) -> logits (B, T, V))
# ----------------------------------------------------------------------------
def generator_forward(padded, inputs, dropout_key, use_softmax=False, hidden=None):
    d = padded["dims"]
    V, H, L = d["V"], d["H"], d["L"]
    Hp, INp = d["Hp"], d["INp"]
    B, T = inputs.shape
    Bp = _round_up(max(B, 8), 8)

    # Embedding lookup (glue; padding_idx row / padded cols are zero in the table).
    x = jnp.take(padded["emb"], inputs, axis=0)            # (B, T, INp)
    x = jnp.transpose(x, (1, 0, 2))                        # (T, B, INp) time-major
    x_p = jnp.zeros((T, Bp, INp), jnp.float32).at[:, :B, :].set(x)

    if hidden is None:
        h0_p = jnp.zeros((L, Bp, Hp), jnp.float32)
    else:
        h0_p = jnp.zeros((L, Bp, Hp), jnp.float32).at[:, :B, :H].set(hidden)

    # Inverted-dropout scale mask (p=0.5 -> scale 2.0), drawn per call.
    drop_p = (jax.random.bernoulli(dropout_key, 0.5, (T * Bp, Hp))
              .astype(jnp.float32) * 2.0)

    logits_p, hT_p = _generator_pallas(
        x_p, h0_p, padded["wih"], padded["whh"], padded["bgi"], padded["bhn"],
        drop_p, padded["wcls"], padded["bcls"])

    logits = jnp.transpose(logits_p[:, :B, :V], (1, 0, 2))  # (B, T, V)
    new_hidden = hT_p[:, :B, :H]                            # (L, B, H)

    if use_softmax:
        return jax.nn.softmax(logits, axis=2), new_hidden
    return logits, new_hidden


if __name__ == "__main__":
    vocab_size, embedding_size, hidden_size, num_layers = 40, 16, 32, 2
    batch, seq = 2, 8

    key = jax.random.PRNGKey(0)
    k_params, k_inputs, k_drop = jax.random.split(key, 3)

    raw_params = init_generator_params(k_params, vocab_size, embedding_size,
                                       hidden_size, num_layers)
    params = pad_params(raw_params, vocab_size, embedding_size,
                        hidden_size, num_layers)

    inputs = jax.random.randint(k_inputs, (batch, seq), 0, vocab_size, jnp.int32)

    logits, hidden = generator_forward(params, inputs, k_drop,
                                       use_softmax=False, hidden=None)
    jax.block_until_ready((logits, hidden))

    assert logits.shape == (batch, seq, vocab_size)
    assert hidden.shape == (num_layers, batch, hidden_size)
    print("KERNEL_OK")
</pallas_src>

<mosaic_0001>
module attributes {stable_mosaic.version = 11 : i64} {
  func.func @generator_fused_kernel(%arg0: memref<8x8x128xf32, #tpu.memory_space<vmem>>, %arg1: memref<2x8x128xf32, #tpu.memory_space<vmem>>, %arg2: memref<2x128x384xf32, #tpu.memory_space<vmem>>, %arg3: memref<2x128x384xf32, #tpu.memory_space<vmem>>, %arg4: memref<2x1x384xf32, #tpu.memory_space<vmem>>, %arg5: memref<2x1x128xf32, #tpu.memory_space<vmem>>, %arg6: memref<64x128xf32, #tpu.memory_space<vmem>>, %arg7: memref<128x128xf32, #tpu.memory_space<vmem>>, %arg8: memref<1x128xf32, #tpu.memory_space<vmem>>, %arg9: memref<8x8x128xf32, #tpu.memory_space<vmem>>, %arg10: memref<2x8x128xf32, #tpu.memory_space<vmem>>, %arg11: memref<8x8x128xf32, #tpu.memory_space<vmem>>, %arg12: memref<8x8x384xf32, #tpu.memory_space<vmem>>) attributes {dimension_semantics = [], scalar_prefetch = 0 : i64, scratch_operands = 2 : i64, tpu.core_type = #tpu.core_type<tc>} {
    %c0 = arith.constant 0 : index
    %c0_0 = arith.constant 0 : index
    %c0_1 = arith.constant 0 : index
    %0 = vector.load %arg0[%c0, %c0_0, %c0_1] : memref<8x8x128xf32, #tpu.memory_space<vmem>>, vector<8x8x128xf32>
    %1 = vector.shape_cast %0 : vector<8x8x128xf32> to vector<64x128xf32>
    %c0_2 = arith.constant 0 : index
    %c0_3 = arith.constant 0 : index
    %c0_4 = arith.constant 0 : index
    %2 = vector.load %arg2[%c0_2, %c0_3, %c0_4] : memref<2x128x384xf32, #tpu.memory_space<vmem>>, vector<1x128x384xf32>
    %3 = vector.shape_cast %2 : vector<1x128x384xf32> to vector<128x384xf32>
    %cst = arith.constant dense<0.000000e+00> : vector<64x384xf32>
    %4 = tpu.matmul %1, %3, %cst {dimension_numbers = #tpu.dot_dimension_numbers<[1], [0], [0], [1], [0, 0, 1, 1], [], []>} : vector<64x128xf32>, vector<128x384xf32>, vector<64x384xf32> -> vector<64x384xf32>
    %c0_5 = arith.constant 0 : index
    %c0_6 = arith.constant 0 : index
    %c0_7 = arith.constant 0 : index
    %5 = vector.load %arg4[%c0_5, %c0_6, %c0_7] : memref<2x1x384xf32, #tpu.memory_space<vmem>>, vector<1x1x384xf32>
    %6 = vector.shape_cast %5 : vector<1x1x384xf32> to vector<1x384xf32>
    %7 = vector.broadcast %6 : vector<1x384xf32> to vector<64x384xf32>
    %8 = arith.addf %4, %7 : vector<64x384xf32>
    %9 = vector.shape_cast %8 : vector<64x384xf32> to vector<8x8x384xf32>
    %c0_8 = arith.constant 0 : index
    %c0_9 = arith.constant 0 : index
    %c0_10 = arith.constant 0 : index
    %10 = vector.load %arg12[%c0_8, %c0_9, %c0_10] : memref<8x8x384xf32, #tpu.memory_space<vmem>>, vector<8x8x384xf32>
    tpu.vector_store %arg12[%c0_8, %c0_9, %c0_10], %9 {strides = array<i32>} : memref<8x8x384xf32, #tpu.memory_space<vmem>>, vector<8x8x384xf32>,
    %c0_11 = arith.constant 0 : index
    %c0_12 = arith.constant 0 : index
    %c0_13 = arith.constant 0 : index
    %11 = vector.load %arg3[%c0_11, %c0_12, %c0_13] : memref<2x128x384xf32, #tpu.memory_space<vmem>>, vector<1x128x384xf32>
    %12 = vector.shape_cast %11 : vector<1x128x384xf32> to vector<128x384xf32>
    %c0_14 = arith.constant 0 : index
    %c0_15 = arith.constant 0 : index
    %c0_16 = arith.constant 0 : index
    %13 = vector.load %arg5[%c0_14, %c0_15, %c0_16] : memref<2x1x128xf32, #tpu.memory_space<vmem>>, vector<1x1x128xf32>
    %14 = vector.shape_cast %13 : vector<1x1x128xf32> to vector<1x128xf32>
    %c0_17 = arith.constant 0 : index
    %c0_18 = arith.constant 0 : index
    %c0_19 = arith.constant 0 : index
    %15 = vector.load %arg1[%c0_17, %c0_18, %c0_19] : memref<2x8x128xf32, #tpu.memory_space<vmem>>, vector<1x8x128xf32>
    %16 = vector.shape_cast %15 : vector<1x8x128xf32> to vector<8x128xf32>
    %c0_20 = arith.constant 0 : index
    %c0_21 = arith.constant 0 : index
    %c0_22 = arith.constant 0 : index
    %17 = vector.load %arg12[%c0_20, %c0_21, %c0_22] : memref<8x8x384xf32, #tpu.memory_space<vmem>>, vector<1x8x384xf32>
    %18 = vector.shape_cast %17 : vector<1x8x384xf32> to vector<8x384xf32>
    %cst_23 = arith.constant dense<0.000000e+00> : vector<8x384xf32>
    %19 = tpu.matmul %16, %12, %cst_23 {dimension_numbers = #tpu.dot_dimension_numbers<[1], [0], [0], [1], [0, 0, 1, 1], [], []>} : vector<8x128xf32>, vector<128x384xf32>, vector<8x384xf32> -> vector<8x384xf32>
    %20 = vector.extract_strided_slice %18 {offsets = [0, 0], sizes = [8, 128], strides = [1, 1]} : vector<8x384xf32> to vector<8x128xf32>
    %21 = vector.extract_strided_slice %19 {offsets = [0, 0], sizes = [8, 128], strides = [1, 1]} : vector<8x384xf32> to vector<8x128xf32>
    %22 = arith.addf %20, %21 : vector<8x128xf32>
    %23 = arith.negf %22 : vector<8x128xf32>
    %24 = math.exp %23 : vector<8x128xf32>
    %cst_24 = arith.constant 1.000000e+00 : f32
    %25 = vector.broadcast %cst_24 : f32 to vector<8x128xf32>
    %26 = arith.addf %25, %24 : vector<8x128xf32>
    %27 = arith.divf %25, %26 : vector<8x128xf32>
    %28 = vector.extract_strided_slice %18 {offsets = [0, 128], sizes = [8, 128], strides = [1, 1]} : vector<8x384xf32> to vector<8x128xf32>
    %29 = vector.extract_strided_slice %19 {offsets = [0, 128], sizes = [8, 128], strides = [1, 1]} : vector<8x384xf32> to vector<8x128xf32>
    %30 = arith.addf %28, %29 : vector<8x128xf32>
    %31 = arith.negf %30 : vector<8x128xf32>
    %32 = math.exp %31 : vector<8x128xf32>
    %cst_25 = arith.constant 1.000000e+00 : f32
    %33 = vector.broadcast %cst_25 : f32 to vector<8x128xf32>
    %34 = arith.addf %33, %32 : vector<8x128xf32>
    %35 = arith.divf %33, %34 : vector<8x128xf32>
    %36 = vector.extract_strided_slice %18 {offsets = [0, 256], sizes = [8, 128], strides = [1, 1]} : vector<8x384xf32> to vector<8x128xf32>
    %37 = vector.extract_strided_slice %19 {offsets = [0, 256], sizes = [8, 128], strides = [1, 1]} : vector<8x384xf32> to vector<8x128xf32>
    %38 = vector.broadcast %14 : vector<1x128xf32> to vector<8x128xf32>
    %39 = arith.addf %37, %38 : vector<8x128xf32>
    %40 = arith.mulf %27, %39 : vector<8x128xf32>
    %41 = arith.addf %36, %40 : vector<8x128xf32>
    %42 = math.tanh %41 : vector<8x128xf32>
    %cst_26 = arith.constant 1.000000e+00 : f32
    %43 = vector.broadcast %cst_26 : f32 to vector<8x128xf32>
    %44 = arith.subf %43, %35 : vector<8x128xf32>
    %45 = arith.mulf %44, %42 : vector<8x128xf32>
    %46 = arith.mulf %35, %16 : vector<8x128xf32>
    %47 = arith.addf %45, %46 : vector<8x128xf32>
    %c0_27 = arith.constant 0 : index
    %c0_28 = arith.constant 0 : index
    %c0_29 = arith.constant 0 : index
    %48 = vector.load %arg11[%c0_27, %c0_28, %c0_29] : memref<8x8x128xf32, #tpu.memory_space<vmem>>, vector<1x8x128xf32>
    %49 = vector.shape_cast %48 : vector<1x8x128xf32> to vector<8x128xf32>
    %50 = vector.shape_cast %47 : vector<8x128xf32> to vector<1x8x128xf32>
    tpu.vector_store %arg11[%c0_27, %c0_28, %c0_29], %50 {strides = array<i32>} : memref<8x8x128xf32, #tpu.memory_space<vmem>>, vector<1x8x128xf32>,
    %c1 = arith.constant 1 : index
    %c0_30 = arith.constant 0 : index
    %c0_31 = arith.constant 0 : index
    %51 = vector.load %arg12[%c1, %c0_30, %c0_31] : memref<8x8x384xf32, #tpu.memory_space<vmem>>, vector<1x8x384xf32>
    %52 = vector.shape_cast %51 : vector<1x8x384xf32> to vector<8x384xf32>
    %cst_32 = arith.constant dense<0.000000e+00> : vector<8x384xf32>
    %53 = tpu.matmul %47, %12, %cst_32 {dimension_numbers = #tpu.dot_dimension_numbers<[1], [0], [0], [1], [0, 0, 1, 1], [], []>} : vector<8x128xf32>, vector<128x384xf32>, vector<8x384xf32> -> vector<8x384xf32>
    %54 = vector.extract_strided_slice %52 {offsets = [0, 0], sizes = [8, 128], strides = [1, 1]} : vector<8x384xf32> to vector<8x128xf32>
    %55 = vector.extract_strided_slice %53 {offsets = [0, 0], sizes = [8, 128], strides = [1, 1]} : vector<8x384xf32> to vector<8x128xf32>
    %56 = arith.addf %54, %55 : vector<8x128xf32>
    %57 = arith.negf %56 : vector<8x128xf32>
    %58 = math.exp %57 : vector<8x128xf32>
    %cst_33 = arith.constant 1.000000e+00 : f32
    %59 = vector.broadcast %cst_33 : f32 to vector<8x128xf32>
    %60 = arith.addf %59, %58 : vector<8x128xf32>
    %61 = arith.divf %59, %60 : vector<8x128xf32>
    %62 = vector.extract_strided_slice %52 {offsets = [0, 128], sizes = [8, 128], strides = [1, 1]} : vector<8x384xf32> to vector<8x128xf32>
    %63 = vector.extract_strided_slice %53 {offsets = [0, 128], sizes = [8, 128], strides = [1, 1]} : vector<8x384xf32> to vector<8x128xf32>
    %64 = arith.addf %62, %63 : vector<8x128xf32>
    %65 = arith.negf %64 : vector<8x128xf32>
    %66 = math.exp %65 : vector<8x128xf32>
    %cst_34 = arith.constant 1.000000e+00 : f32
    %67 = vector.broadcast %cst_34 : f32 to vector<8x128xf32>
    %68 = arith.addf %67, %66 : vector<8x128xf32>
    %69 = arith.divf %67, %68 : vector<8x128xf32>
    %70 = vector.extract_strided_slice %52 {offsets = [0, 256], sizes = [8, 128], strides = [1, 1]} : vector<8x384xf32> to vector<8x128xf32>
    %71 = vector.extract_strided_slice %53 {offsets = [0, 256], sizes = [8, 128], strides = [1, 1]} : vector<8x384xf32> to vector<8x128xf32>
    %72 = vector.broadcast %14 : vector<1x128xf32> to vector<8x128xf32>
    %73 = arith.addf %71, %72 : vector<8x128xf32>
    %74 = arith.mulf %61, %73 : vector<8x128xf32>
    %75 = arith.addf %70, %74 : vector<8x128xf32>
    %76 = math.tanh %75 : vector<8x128xf32>
    %cst_35 = arith.constant 1.000000e+00 : f32
    %77 = vector.broadcast %cst_35 : f32 to vector<8x128xf32>
    %78 = arith.subf %77, %69 : vector<8x128xf32>
    %79 = arith.mulf %78, %76 : vector<8x128xf32>
    %80 = arith.mulf %69, %47 : vector<8x128xf32>
    %81 = arith.addf %79, %80 : vector<8x128xf32>
    %c1_36 = arith.constant 1 : index
    %c0_37 = arith.constant 0 : index
    %c0_38 = arith.constant 0 : index
    %82 = vector.load %arg11[%c1_36, %c0_37, %c0_38] : memref<8x8x128xf32, #tpu.memory_space<vmem>>, vector<1x8x128xf32>
    %83 = vector.shape_cast %82 : vector<1x8x128xf32> to vector<8x128xf32>
    %84 = vector.shape_cast %81 : vector<8x128xf32> to vector<1x8x128xf32>
    tpu.vector_store %arg11[%c1_36, %c0_37, %c0_38], %84 {strides = array<i32>} : memref<8x8x128xf32, #tpu.memory_space<vmem>>, vector<1x8x128xf32>,
    %c2 = arith.constant 2 : index
    %c0_39 = arith.constant 0 : index
    %c0_40 = arith.constant 0 : index
    %85 = vector.load %arg12[%c2, %c0_39, %c0_40] : memref<8x8x384xf32, #tpu.memory_space<vmem>>, vector<1x8x384xf32>
    %86 = vector.shape_cast %85 : vector<1x8x384xf32> to vector<8x384xf32>
    %cst_41 = arith.constant dense<0.000000e+00> : vector<8x384xf32>
    %87 = tpu.matmul %81, %12, %cst_41 {dimension_numbers = #tpu.dot_dimension_numbers<[1], [0], [0], [1], [0, 0, 1, 1], [], []>} : vector<8x128xf32>, vector<128x384xf32>, vector<8x384xf32> -> vector<8x384xf32>
    %88 = vector.extract_strided_slice %86 {offsets = [0, 0], sizes = [8, 128], strides = [1, 1]} : vector<8x384xf32> to vector<8x128xf32>
    %89 = vector.extract_strided_slice %87 {offsets = [0, 0], sizes = [8, 128], strides = [1, 1]} : vector<8x384xf32> to vector<8x128xf32>
    %90 = arith.addf %88, %89 : vector<8x128xf32>
    %91 = arith.negf %90 : vector<8x128xf32>
    %92 = math.exp %91 : vector<8x128xf32>
    %cst_42 = arith.constant 1.000000e+00 : f32
    %93 = vector.broadcast %cst_42 : f32 to vector<8x128xf32>
    %94 = arith.addf %93, %92 : vector<8x128xf32>
    %95 = arith.divf %93, %94 : vector<8x128xf32>
    %96 = vector.extract_strided_slice %86 {offsets = [0, 128], sizes = [8, 128], strides = [1, 1]} : vector<8x384xf32> to vector<8x128xf32>
    %97 = vector.extract_strided_slice %87 {offsets = [0, 128], sizes = [8, 128], strides = [1, 1]} : vector<8x384xf32> to vector<8x128xf32>
    %98 = arith.addf %96, %97 : vector<8x128xf32>
    %99 = arith.negf %98 : vector<8x128xf32>
    %100 = math.exp %99 : vector<8x128xf32>
    %cst_43 = arith.constant 1.000000e+00 : f32
    %101 = vector.broadcast %cst_43 : f32 to vector<8x128xf32>
    %102 = arith.addf %101, %100 : vector<8x128xf32>
    %103 = arith.divf %101, %102 : vector<8x128xf32>
    %104 = vector.extract_strided_slice %86 {offsets = [0, 256], sizes = [8, 128], strides = [1, 1]} : vector<8x384xf32> to vector<8x128xf32>
    %105 = vector.extract_strided_slice %87 {offsets = [0, 256], sizes = [8, 128], strides = [1, 1]} : vector<8x384xf32> to vector<8x128xf32>
    %106 = vector.broadcast %14 : vector<1x128xf32> to vector<8x128xf32>
    %107 = arith.addf %105, %106 : vector<8x128xf32>
    %108 = arith.mulf %95, %107 : vector<8x128xf32>
    %109 = arith.addf %104, %108 : vector<8x128xf32>
    %110 = math.tanh %109 : vector<8x128xf32>
    %cst_44 = arith.constant 1.000000e+00 : f32
    %111 = vector.broadcast %cst_44 : f32 to vector<8x128xf32>
    %112 = arith.subf %111, %103 : vector<8x128xf32>
    %113 = arith.mulf %112, %110 : vector<8x128xf32>
    %114 = arith.mulf %103, %81 : vector<8x128xf32>
    %115 = arith.addf %113, %114 : vector<8x128xf32>
    %c2_45 = arith.constant 2 : index
    %c0_46 = arith.constant 0 : index
    %c0_47 = arith.constant 0 : index
    %116 = vector.load %arg11[%c2_45, %c0_46, %c0_47] : memref<8x8x128xf32, #tpu.memory_space<vmem>>, vector<1x8x128xf32>
    %117 = vector.shape_cast %116 : vector<1x8x128xf32> to vector<8x128xf32>
    %118 = vector.shape_cast %115 : vector<8x128xf32> to vector<1x8x128xf32>
    tpu.vector_store %arg11[%c2_45, %c0_46, %c0_47], %118 {strides = array<i32>} : memref<8x8x128xf32, #tpu.memory_space<vmem>>, vector<1x8x128xf32>,
    %c3 = arith.constant 3 : index
    %c0_48 = arith.constant 0 : index
    %c0_49 = arith.constant 0 : index
    %119 = vector.load %arg12[%c3, %c0_48, %c0_49] : memref<8x8x384xf32, #tpu.memory_space<vmem>>, vector<1x8x384xf32>
    %120 = vector.shape_cast %119 : vector<1x8x384xf32> to vector<8x384xf32>
    %cst_50 = arith.constant dense<0.000000e+00> : vector<8x384xf32>
    %121 = tpu.matmul %115, %12, %cst_50 {dimension_numbers = #tpu.dot_dimension_numbers<[1], [0], [0], [1], [0, 0, 1, 1], [], []>} : vector<8x128xf32>, vector<128x384xf32>, vector<8x384xf32> -> vector<8x384xf32>
    %122 = vector.extract_strided_slice %120 {offsets = [0, 0], sizes = [8, 128], strides = [1, 1]} : vector<8x384xf32> to vector<8x128xf32>
    %123 = vector.extract_strided_slice %121 {offsets = [0, 0], sizes = [8, 128], strides = [1, 1]} : vector<8x384xf32> to vector<8x128xf32>
    %124 = arith.addf %122, %123 : vector<8x128xf32>
    %125 = arith.negf %124 : vector<8x128xf32>
    %126 = math.exp %125 : vector<8x128xf32>
    %cst_51 = arith.constant 1.000000e+00 : f32
    %127 = vector.broadcast %cst_51 : f32 to vector<8x128xf32>
    %128 = arith.addf %127, %126 : vector<8x128xf32>
    %129 = arith.divf %127, %128 : vector<8x128xf32>
    %130 = vector.extract_strided_slice %120 {offsets = [0, 128], sizes = [8, 128], strides = [1, 1]} : vector<8x384xf32> to vector<8x128xf32>
    %131 = vector.extract_strided_slice %121 {offsets = [0, 128], sizes = [8, 128], strides = [1, 1]} : vector<8x384xf32> to vector<8x128xf32>
    %132 = arith.addf %130, %131 : vector<8x128xf32>
    %133 = arith.negf %132 : vector<8x128xf32>
    %134 = math.exp %133 : vector<8x128xf32>
    %cst_52 = arith.constant 1.000000e+00 : f32
    %135 = vector.broadcast %cst_52 : f32 to vector<8x128xf32>
    %136 = arith.addf %135, %134 : vector<8x128xf32>
    %137 = arith.divf %135, %136 : vector<8x128xf32>
    %138 = vector.extract_strided_slice %120 {offsets = [0, 256], sizes = [8, 128], strides = [1, 1]} : vector<8x384xf32> to vector<8x128xf32>
    %139 = vector.extract_strided_slice %121 {offsets = [0, 256], sizes = [8, 128], strides = [1, 1]} : vector<8x384xf32> to vector<8x128xf32>
    %140 = vector.broadcast %14 : vector<1x128xf32> to vector<8x128xf32>
    %141 = arith.addf %139, %140 : vector<8x128xf32>
    %142 = arith.mulf %129, %141 : vector<8x128xf32>
    %143 = arith.addf %138, %142 : vector<8x128xf32>
    %144 = math.tanh %143 : vector<8x128xf32>
    %cst_53 = arith.constant 1.000000e+00 : f32
    %145 = vector.broadcast %cst_53 : f32 to vector<8x128xf32>
    %146 = arith.subf %145, %137 : vector<8x128xf32>
    %147 = arith.mulf %146, %144 : vector<8x128xf32>
    %148 = arith.mulf %137, %115 : vector<8x128xf32>
    %149 = arith.addf %147, %148 : vector<8x128xf32>
    %c3_54 = arith.constant 3 : index
    %c0_55 = arith.constant 0 : index
    %c0_56 = arith.constant 0 : index
    %150 = vector.load %arg11[%c3_54, %c0_55, %c0_56] : memref<8x8x128xf32, #tpu.memory_space<vmem>>, vector<1x8x128xf32>
    %151 = vector.shape_cast %150 : vector<1x8x128xf32> to vector<8x128xf32>
    %152 = vector.shape_cast %149 : vector<8x128xf32> to vector<1x8x128xf32>
    tpu.vector_store %arg11[%c3_54, %c0_55, %c0_56], %152 {strides = array<i32>} : memref<8x8x128xf32, #tpu.memory_space<vmem>>, vector<1x8x128xf32>,
    %c4 = arith.constant 4 : index
    %c0_57 = arith.constant 0 : index
    %c0_58 = arith.constant 0 : index
    %153 = vector.load %arg12[%c4, %c0_57, %c0_58] : memref<8x8x384xf32, #tpu.memory_space<vmem>>, vector<1x8x384xf32>
    %154 = vector.shape_cast %153 : vector<1x8x384xf32> to vector<8x384xf32>
    %cst_59 = arith.constant dense<0.000000e+00> : vector<8x384xf32>
    %155 = tpu.matmul %149, %12, %cst_59 {dimension_numbers = #tpu.dot_dimension_numbers<[1], [0], [0], [1], [0, 0, 1, 1], [], []>} : vector<8x128xf32>, vector<128x384xf32>, vector<8x384xf32> -> vector<8x384xf32>
    %156 = vector.extract_strided_slice %154 {offsets = [0, 0], sizes = [8, 128], strides = [1, 1]} : vector<8x384xf32> to vector<8x128xf32>
    %157 = vector.extract_strided_slice %155 {offsets = [0, 0], sizes = [8, 128], strides = [1, 1]} : vector<8x384xf32> to vector<8x128xf32>
    %158 = arith.addf %156, %157 : vector<8x128xf32>
    %159 = arith.negf %158 : vector<8x128xf32>
    %160 = math.exp %159 : vector<8x128xf32>
    %cst_60 = arith.constant 1.000000e+00 : f32
    %161 = vector.broadcast %cst_60 : f32 to vector<8x128xf32>
    %162 = arith.addf %161, %160 : vector<8x128xf32>
    %163 = arith.divf %161, %162 : vector<8x128xf32>
    %164 = vector.extract_strided_slice %154 {offsets = [0, 128], sizes = [8, 128], strides = [1, 1]} : vector<8x384xf32> to vector<8x128xf32>
    %165 = vector.extract_strided_slice %155 {offsets = [0, 128], sizes = [8, 128], strides = [1, 1]} : vector<8x384xf32> to vector<8x128xf32>
    %166 = arith.addf %164, %165 : vector<8x128xf32>
    %167 = arith.negf %166 : vector<8x128xf32>
    %168 = math.exp %167 : vector<8x128xf32>
    %cst_61 = arith.constant 1.000000e+00 : f32
    %169 = vector.broadcast %cst_61 : f32 to vector<8x128xf32>
    %170 = arith.addf %169, %168 : vector<8x128xf32>
    %171 = arith.divf %169, %170 : vector<8x128xf32>
    %172 = vector.extract_strided_slice %154 {offsets = [0, 256], sizes = [8, 128], strides = [1, 1]} : vector<8x384xf32> to vector<8x128xf32>
    %173 = vector.extract_strided_slice %155 {offsets = [0, 256], sizes = [8, 128], strides = [1, 1]} : vector<8x384xf32> to vector<8x128xf32>
    %174 = vector.broadcast %14 : vector<1x128xf32> to vector<8x128xf32>
    %175 = arith.addf %173, %174 : vector<8x128xf32>
    %176 = arith.mulf %163, %175 : vector<8x128xf32>
    %177 = arith.addf %172, %176 : vector<8x128xf32>
    %178 = math.tanh %177 : vector<8x128xf32>
    %cst_62 = arith.constant 1.000000e+00 : f32
    %179 = vector.broadcast %cst_62 : f32 to vector<8x128xf32>
    %180 = arith.subf %179, %171 : vector<8x128xf32>
    %181 = arith.mulf %180, %178 : vector<8x128xf32>
    %182 = arith.mulf %171, %149 : vector<8x128xf32>
    %183 = arith.addf %181, %182 : vector<8x128xf32>
    %c4_63 = arith.constant 4 : index
    %c0_64 = arith.constant 0 : index
    %c0_65 = arith.constant 0 : index
    %184 = vector.load %arg11[%c4_63, %c0_64, %c0_65] : memref<8x8x128xf32, #tpu.memory_space<vmem>>, vector<1x8x128xf32>
    %185 = vector.shape_cast %184 : vector<1x8x128xf32> to vector<8x128xf32>
    %186 = vector.shape_cast %183 : vector<8x128xf32> to vector<1x8x128xf32>
    tpu.vector_store %arg11[%c4_63, %c0_64, %c0_65], %186 {strides = array<i32>} : memref<8x8x128xf32, #tpu.memory_space<vmem>>, vector<1x8x128xf32>,
    %c5 = arith.constant 5 : index
    %c0_66 = arith.constant 0 : index
    %c0_67 = arith.constant 0 : index
    %187 = vector.load %arg12[%c5, %c0_66, %c0_67] : memref<8x8x384xf32, #tpu.memory_space<vmem>>, vector<1x8x384xf32>
    %188 = vector.shape_cast %187 : vector<1x8x384xf32> to vector<8x384xf32>
    %cst_68 = arith.constant dense<0.000000e+00> : vector<8x384xf32>
    %189 = tpu.matmul %183, %12, %cst_68 {dimension_numbers = #tpu.dot_dimension_numbers<[1], [0], [0], [1], [0, 0, 1, 1], [], []>} : vector<8x128xf32>, vector<128x384xf32>, vector<8x384xf32> -> vector<8x384xf32>
    %190 = vector.extract_strided_slice %188 {offsets = [0, 0], sizes = [8, 128], strides = [1, 1]} : vector<8x384xf32> to vector<8x128xf32>
    %191 = vector.extract_strided_slice %189 {offsets = [0, 0], sizes = [8, 128], strides = [1, 1]} : vector<8x384xf32> to vector<8x128xf32>
    %192 = arith.addf %190, %191 : vector<8x128xf32>
    %193 = arith.negf %192 : vector<8x128xf32>
    %194 = math.exp %193 : vector<8x128xf32>
    %cst_69 = arith.constant 1.000000e+00 : f32
    %195 = vector.broadcast %cst_69 : f32 to vector<8x128xf32>
    %196 = arith.addf %195, %194 : vector<8x128xf32>
    %197 = arith.divf %195, %196 : vector<8x128xf32>
    %198 = vector.extract_strided_slice %188 {offsets = [0, 128], sizes = [8, 128], strides = [1, 1]} : vector<8x384xf32> to vector<8x128xf32>
    %199 = vector.extract_strided_slice %189 {offsets = [0, 128], sizes = [8, 128], strides = [1, 1]} : vector<8x384xf32> to vector<8x128xf32>
    %200 = arith.addf %198, %199 : vector<8x128xf32>
    %201 = arith.negf %200 : vector<8x128xf32>
    %202 = math.exp %201 : vector<8x128xf32>
    %cst_70 = arith.constant 1.000000e+00 : f32
    %203 = vector.broadcast %cst_70 : f32 to vector<8x128xf32>
    %204 = arith.addf %203, %202 : vector<8x128xf32>
    %205 = arith.divf %203, %204 : vector<8x128xf32>
    %206 = vector.extract_strided_slice %188 {offsets = [0, 256], sizes = [8, 128], strides = [1, 1]} : vector<8x384xf32> to vector<8x128xf32>
    %207 = vector.extract_strided_slice %189 {offsets = [0, 256], sizes = [8, 128], strides = [1, 1]} : vector<8x384xf32> to vector<8x128xf32>
    %208 = vector.broadcast %14 : vector<1x128xf32> to vector<8x128xf32>
    %209 = arith.addf %207, %208 : vector<8x128xf32>
    %210 = arith.mulf %197, %209 : vector<8x128xf32>
    %211 = arith.addf %206, %210 : vector<8x128xf32>
    %212 = math.tanh %211 : vector<8x128xf32>
    %cst_71 = arith.constant 1.000000e+00 : f32
    %213 = vector.broadcast %cst_71 : f32 to vector<8x128xf32>
    %214 = arith.subf %213, %205 : vector<8x128xf32>
    %215 = arith.mulf %214, %212 : vector<8x128xf32>
    %216 = arith.mulf %205, %183 : vector<8x128xf32>
    %217 = arith.addf %215, %216 : vector<8x128xf32>
    %c5_72 = arith.constant 5 : index
    %c0_73 = arith.constant 0 : index
    %c0_74 = arith.constant 0 : index
    %218 = vector.load %arg11[%c5_72, %c0_73, %c0_74] : memref<8x8x128xf32, #tpu.memory_space<vmem>>, vector<1x8x128xf32>
    %219 = vector.shape_cast %218 : vector<1x8x128xf32> to vector<8x128xf32>
    %220 = vector.shape_cast %217 : vector<8x128xf32> to vector<1x8x128xf32>
    tpu.vector_store %arg11[%c5_72, %c0_73, %c0_74], %220 {strides = array<i32>} : memref<8x8x128xf32, #tpu.memory_space<vmem>>, vector<1x8x128xf32>,
    %c6 = arith.constant 6 : index
    %c0_75 = arith.constant 0 : index
    %c0_76 = arith.constant 0 : index
    %221 = vector.load %arg12[%c6, %c0_75, %c0_76] : memref<8x8x384xf32, #tpu.memory_space<vmem>>, vector<1x8x384xf32>
    %222 = vector.shape_cast %221 : vector<1x8x384xf32> to vector<8x384xf32>
    %cst_77 = arith.constant dense<0.000000e+00> : vector<8x384xf32>
    %223 = tpu.matmul %217, %12, %cst_77 {dimension_numbers = #tpu.dot_dimension_numbers<[1], [0], [0], [1], [0, 0, 1, 1], [], []>} : vector<8x128xf32>, vector<128x384xf32>, vector<8x384xf32> -> vector<8x384xf32>
    %224 = vector.extract_strided_slice %222 {offsets = [0, 0], sizes = [8, 128], strides = [1, 1]} : vector<8x384xf32> to vector<8x128xf32>
    %225 = vector.extract_strided_slice %223 {offsets = [0, 0], sizes = [8, 128], strides = [1, 1]} : vector<8x384xf32> to vector<8x128xf32>
    %226 = arith.addf %224, %225 : vector<8x128xf32>
    %227 = arith.negf %226 : vector<8x128xf32>
    %228 = math.exp %227 : vector<8x128xf32>
    %cst_78 = arith.constant 1.000000e+00 : f32
    %229 = vector.broadcast %cst_78 : f32 to vector<8x128xf32>
    %230 = arith.addf %229, %228 : vector<8x128xf32>
    %231 = arith.divf %229, %230 : vector<8x128xf32>
    %232 = vector.extract_strided_slice %222 {offsets = [0, 128], sizes = [8, 128], strides = [1, 1]} : vector<8x384xf32> to vector<8x128xf32>
    %233 = vector.extract_strided_slice %223 {offsets = [0, 128], sizes = [8, 128], strides = [1, 1]} : vector<8x384xf32> to vector<8x128xf32>
    %234 = arith.addf %232, %233 : vector<8x128xf32>
    %235 = arith.negf %234 : vector<8x128xf32>
    %236 = math.exp %235 : vector<8x128xf32>
    %cst_79 = arith.constant 1.000000e+00 : f32
    %237 = vector.broadcast %cst_79 : f32 to vector<8x128xf32>
    %238 = arith.addf %237, %236 : vector<8x128xf32>
    %239 = arith.divf %237, %238 : vector<8x128xf32>
    %240 = vector.extract_strided_slice %222 {offsets = [0, 256], sizes = [8, 128], strides = [1, 1]} : vector<8x384xf32> to vector<8x128xf32>
    %241 = vector.extract_strided_slice %223 {offsets = [0, 256], sizes = [8, 128], strides = [1, 1]} : vector<8x384xf32> to vector<8x128xf32>
    %242 = vector.broadcast %14 : vector<1x128xf32> to vector<8x128xf32>
    %243 = arith.addf %241, %242 : vector<8x128xf32>
    %244 = arith.mulf %231, %243 : vector<8x128xf32>
    %245 = arith.addf %240, %244 : vector<8x128xf32>
    %246 = math.tanh %245 : vector<8x128xf32>
    %cst_80 = arith.constant 1.000000e+00 : f32
    %247 = vector.broadcast %cst_80 : f32 to vector<8x128xf32>
    %248 = arith.subf %247, %239 : vector<8x128xf32>
    %249 = arith.mulf %248, %246 : vector<8x128xf32>
    %250 = arith.mulf %239, %217 : vector<8x128xf32>
    %251 = arith.addf %249, %250 : vector<8x128xf32>
    %c6_81 = arith.constant 6 : index
    %c0_82 = arith.constant 0 : index
    %c0_83 = arith.constant 0 : index
    %252 = vector.load %arg11[%c6_81, %c0_82, %c0_83] : memref<8x8x128xf32, #tpu.memory_space<vmem>>, vector<1x8x128xf32>
    %253 = vector.shape_cast %252 : vector<1x8x128xf32> to vector<8x128xf32>
    %254 = vector.shape_cast %251 : vector<8x128xf32> to vector<1x8x128xf32>
    tpu.vector_store %arg11[%c6_81, %c0_82, %c0_83], %254 {strides = array<i32>} : memref<8x8x128xf32, #tpu.memory_space<vmem>>, vector<1x8x128xf32>,
    %c7 = arith.constant 7 : index
    %c0_84 = arith.constant 0 : index
    %c0_85 = arith.constant 0 : index
    %255 = vector.load %arg12[%c7, %c0_84, %c0_85] : memref<8x8x384xf32, #tpu.memory_space<vmem>>, vector<1x8x384xf32>
    %256 = vector.shape_cast %255 : vector<1x8x384xf32> to vector<8x384xf32>
    %cst_86 = arith.constant dense<0.000000e+00> : vector<8x384xf32>
    %257 = tpu.matmul %251, %12, %cst_86 {dimension_numbers = #tpu.dot_dimension_numbers<[1], [0], [0], [1], [0, 0, 1, 1], [], []>} : vector<8x128xf32>, vector<128x384xf32>, vector<8x384xf32> -> vector<8x384xf32>
    %258 = vector.extract_strided_slice %256 {offsets = [0, 0], sizes = [8, 128], strides = [1, 1]} : vector<8x384xf32> to vector<8x128xf32>
    %259 = vector.extract_strided_slice %257 {offsets = [0, 0], sizes = [8, 128], strides = [1, 1]} : vector<8x384xf32> to vector<8x128xf32>
    %260 = arith.addf %258, %259 : vector<8x128xf32>
    %261 = arith.negf %260 : vector<8x128xf32>
    %262 = math.exp %261 : vector<8x128xf32>
    %cst_87 = arith.constant 1.000000e+00 : f32
    %263 = vector.broadcast %cst_87 : f32 to vector<8x128xf32>
    %264 = arith.addf %263, %262 : vector<8x128xf32>
    %265 = arith.divf %263, %264 : vector<8x128xf32>
    %266 = vector.extract_strided_slice %256 {offsets = [0, 128], sizes = [8, 128], strides = [1, 1]} : vector<8x384xf32> to vector<8x128xf32>
    %267 = vector.extract_strided_slice %257 {offsets = [0, 128], sizes = [8, 128], strides = [1, 1]} : vector<8x384xf32> to vector<8x128xf32>
    %268 = arith.addf %266, %267 : vector<8x128xf32>
    %269 = arith.negf %268 : vector<8x128xf32>
    %270 = math.exp %269 : vector<8x128xf32>
    %cst_88 = arith.constant 1.000000e+00 : f32
    %271 = vector.broadcast %cst_88 : f32 to vector<8x128xf32>
    %272 = arith.addf %271, %270 : vector<8x128xf32>
    %273 = arith.divf %271, %272 : vector<8x128xf32>
    %274 = vector.extract_strided_slice %256 {offsets = [0, 256], sizes = [8, 128], strides = [1, 1]} : vector<8x384xf32> to vector<8x128xf32>
    %275 = vector.extract_strided_slice %257 {offsets = [0, 256], sizes = [8, 128], strides = [1, 1]} : vector<8x384xf32> to vector<8x128xf32>
    %276 = vector.broadcast %14 : vector<1x128xf32> to vector<8x128xf32>
    %277 = arith.addf %275, %276 : vector<8x128xf32>
    %278 = arith.mulf %265, %277 : vector<8x128xf32>
    %279 = arith.addf %274, %278 : vector<8x128xf32>
    %280 = math.tanh %279 : vector<8x128xf32>
    %cst_89 = arith.constant 1.000000e+00 : f32
    %281 = vector.broadcast %cst_89 : f32 to vector<8x128xf32>
    %282 = arith.subf %281, %273 : vector<8x128xf32>
    %283 = arith.mulf %282, %280 : vector<8x128xf32>
    %284 = arith.mulf %273, %251 : vector<8x128xf32>
    %285 = arith.addf %283, %284 : vector<8x128xf32>
    %c7_90 = arith.constant 7 : index
    %c0_91 = arith.constant 0 : index
    %c0_92 = arith.constant 0 : index
    %286 = vector.load %arg11[%c7_90, %c0_91, %c0_92] : memref<8x8x128xf32, #tpu.memory_space<vmem>>, vector<1x8x128xf32>
    %287 = vector.shape_cast %286 : vector<1x8x128xf32> to vector<8x128xf32>
    %288 = vector.shape_cast %285 : vector<8x128xf32> to vector<1x8x128xf32>
    tpu.vector_store %arg11[%c7_90, %c0_91, %c0_92], %288 {strides = array<i32>} : memref<8x8x128xf32, #tpu.memory_space<vmem>>, vector<1x8x128xf32>,
    %c0_93 = arith.constant 0 : index
    %c0_94 = arith.constant 0 : index
    %c0_95 = arith.constant 0 : index
    %289 = vector.load %arg10[%c0_93, %c0_94, %c0_95] : memref<2x8x128xf32, #tpu.memory_space<vmem>>, vector<1x8x128xf32>
    %290 = vector.shape_cast %289 : vector<1x8x128xf32> to vector<8x128xf32>
    %291 = vector.shape_cast %285 : vector<8x128xf32> to vector<1x8x128xf32>
    tpu.vector_store %arg10[%c0_93, %c0_94, %c0_95], %291 {strides = array<i32>} : memref<2x8x128xf32, #tpu.memory_space<vmem>>, vector<1x8x128xf32>,
    %c0_96 = arith.constant 0 : index
    %c0_97 = arith.constant 0 : index
    %c0_98 = arith.constant 0 : index
    %292 = vector.load %arg11[%c0_96, %c0_97, %c0_98] : memref<8x8x128xf32, #tpu.memory_space<vmem>>, vector<8x8x128xf32>
    %293 = vector.shape_cast %292 : vector<8x8x128xf32> to vector<64x128xf32>
    %c1_99 = arith.constant 1 : index
    %c0_100 = arith.constant 0 : index
    %c0_101 = arith.constant 0 : index
    %294 = vector.load %arg2[%c1_99, %c0_100, %c0_101] : memref<2x128x384xf32, #tpu.memory_space<vmem>>, vector<1x128x384xf32>
    %295 = vector.shape_cast %294 : vector<1x128x384xf32> to vector<128x384xf32>
    %cst_102 = arith.constant dense<0.000000e+00> : vector<64x384xf32>
    %296 = tpu.matmul %293, %295, %cst_102 {dimension_numbers = #tpu.dot_dimension_numbers<[1], [0], [0], [1], [0, 0, 1, 1], [], []>} : vector<64x128xf32>, vector<128x384xf32>, vector<64x384xf32> -> vector<64x384xf32>
    %c1_103 = arith.constant 1 : index
    %c0_104 = arith.constant 0 : index
    %c0_105 = arith.constant 0 : index
    %297 = vector.load %arg4[%c1_103, %c0_104, %c0_105] : memref<2x1x384xf32, #tpu.memory_space<vmem>>, vector<1x1x384xf32>
    %298 = vector.shape_cast %297 : vector<1x1x384xf32> to vector<1x384xf32>
    %299 = vector.broadcast %298 : vector<1x384xf32> to vector<64x384xf32>
    %300 = arith.addf %296, %299 : vector<64x384xf32>
    %301 = vector.shape_cast %300 : vector<64x384xf32> to vector<8x8x384xf32>
    %c0_106 = arith.constant 0 : index
    %c0_107 = arith.constant 0 : index
    %c0_108 = arith.constant 0 : index
    %302 = vector.load %arg12[%c0_106, %c0_107, %c0_108] : memref<8x8x384xf32, #tpu.memory_space<vmem>>, vector<8x8x384xf32>
    tpu.vector_store %arg12[%c0_106, %c0_107, %c0_108], %301 {strides = array<i32>} : memref<8x8x384xf32, #tpu.memory_space<vmem>>, vector<8x8x384xf32>,
    %c1_109 = arith.constant 1 : index
    %c0_110 = arith.constant 0 : index
    %c0_111 = arith.constant 0 : index
    %303 = vector.load %arg3[%c1_109, %c0_110, %c0_111] : memref<2x128x384xf32, #tpu.memory_space<vmem>>, vector<1x128x384xf32>
    %304 = vector.shape_cast %303 : vector<1x128x384xf32> to vector<128x384xf32>
    %c1_112 = arith.constant 1 : index
    %c0_113 = arith.constant 0 : index
    %c0_114 = arith.constant 0 : index
    %305 = vector.load %arg5[%c1_112, %c0_113, %c0_114] : memref<2x1x128xf32, #tpu.memory_space<vmem>>, vector<1x1x128xf32>
    %306 = vector.shape_cast %305 : vector<1x1x128xf32> to vector<1x128xf32>
    %c1_115 = arith.constant 1 : index
    %c0_116 = arith.constant 0 : index
    %c0_117 = arith.constant 0 : index
    %307 = vector.load %arg1[%c1_115, %c0_116, %c0_117] : memref<2x8x128xf32, #tpu.memory_space<vmem>>, vector<1x8x128xf32>
    %308 = vector.shape_cast %307 : vector<1x8x128xf32> to vector<8x128xf32>
    %c0_118 = arith.constant 0 : index
    %c0_119 = arith.constant 0 : index
    %c0_120 = arith.constant 0 : index
    %309 = vector.load %arg12[%c0_118, %c0_119, %c0_120] : memref<8x8x384xf32, #tpu.memory_space<vmem>>, vector<1x8x384xf32>
    %310 = vector.shape_cast %309 : vector<1x8x384xf32> to vector<8x384xf32>
    %cst_121 = arith.constant dense<0.000000e+00> : vector<8x384xf32>
    %311 = tpu.matmul %308, %304, %cst_121 {dimension_numbers = #tpu.dot_dimension_numbers<[1], [0], [0], [1], [0, 0, 1, 1], [], []>} : vector<8x128xf32>, vector<128x384xf32>, vector<8x384xf32> -> vector<8x384xf32>
    %312 = vector.extract_strided_slice %310 {offsets = [0, 0], sizes = [8, 128], strides = [1, 1]} : vector<8x384xf32> to vector<8x128xf32>
    %313 = vector.extract_strided_slice %311 {offsets = [0, 0], sizes = [8, 128], strides = [1, 1]} : vector<8x384xf32> to vector<8x128xf32>
    %314 = arith.addf %312, %313 : vector<8x128xf32>
    %315 = arith.negf %314 : vector<8x128xf32>
    %316 = math.exp %315 : vector<8x128xf32>
    %cst_122 = arith.constant 1.000000e+00 : f32
    %317 = vector.broadcast %cst_122 : f32 to vector<8x128xf32>
    %318 = arith.addf %317, %316 : vector<8x128xf32>
    %319 = arith.divf %317, %318 : vector<8x128xf32>
    %320 = vector.extract_strided_slice %310 {offsets = [0, 128], sizes = [8, 128], strides = [1, 1]} : vector<8x384xf32> to vector<8x128xf32>
    %321 = vector.extract_strided_slice %311 {offsets = [0, 128], sizes = [8, 128], strides = [1, 1]} : vector<8x384xf32> to vector<8x128xf32>
    %322 = arith.addf %320, %321 : vector<8x128xf32>
    %323 = arith.negf %322 : vector<8x128xf32>
    %324 = math.exp %323 : vector<8x128xf32>
    %cst_123 = arith.constant 1.000000e+00 : f32
    %325 = vector.broadcast %cst_123 : f32 to vector<8x128xf32>
    %326 = arith.addf %325, %324 : vector<8x128xf32>
    %327 = arith.divf %325, %326 : vector<8x128xf32>
    %328 = vector.extract_strided_slice %310 {offsets = [0, 256], sizes = [8, 128], strides = [1, 1]} : vector<8x384xf32> to vector<8x128xf32>
    %329 = vector.extract_strided_slice %311 {offsets = [0, 256], sizes = [8, 128], strides = [1, 1]} : vector<8x384xf32> to vector<8x128xf32>
    %330 = vector.broadcast %306 : vector<1x128xf32> to vector<8x128xf32>
    %331 = arith.addf %329, %330 : vector<8x128xf32>
    %332 = arith.mulf %319, %331 : vector<8x128xf32>
    %333 = arith.addf %328, %332 : vector<8x128xf32>
    %334 = math.tanh %333 : vector<8x128xf32>
    %cst_124 = arith.constant 1.000000e+00 : f32
    %335 = vector.broadcast %cst_124 : f32 to vector<8x128xf32>
    %336 = arith.subf %335, %327 : vector<8x128xf32>
    %337 = arith.mulf %336, %334 : vector<8x128xf32>
    %338 = arith.mulf %327, %308 : vector<8x128xf32>
    %339 = arith.addf %337, %338 : vector<8x128xf32>
    %c0_125 = arith.constant 0 : index
    %c0_126 = arith.constant 0 : index
    %c0_127 = arith.constant 0 : index
    %340 = vector.load %arg11[%c0_125, %c0_126, %c0_127] : memref<8x8x128xf32, #tpu.memory_space<vmem>>, vector<1x8x128xf32>
    %341 = vector.shape_cast %340 : vector<1x8x128xf32> to vector<8x128xf32>
    %342 = vector.shape_cast %339 : vector<8x128xf32> to vector<1x8x128xf32>
    tpu.vector_store %arg11[%c0_125, %c0_126, %c0_127], %342 {strides = array<i32>} : memref<8x8x128xf32, #tpu.memory_space<vmem>>, vector<1x8x128xf32>,
    %c1_128 = arith.constant 1 : index
    %c0_129 = arith.constant 0 : index
    %c0_130 = arith.constant 0 : index
    %343 = vector.load %arg12[%c1_128, %c0_129, %c0_130] : memref<8x8x384xf32, #tpu.memory_space<vmem>>, vector<1x8x384xf32>
    %344 = vector.shape_cast %343 : vector<1x8x384xf32> to vector<8x384xf32>
    %cst_131 = arith.constant dense<0.000000e+00> : vector<8x384xf32>
    %345 = tpu.matmul %339, %304, %cst_131 {dimension_numbers = #tpu.dot_dimension_numbers<[1], [0], [0], [1], [0, 0, 1, 1], [], []>} : vector<8x128xf32>, vector<128x384xf32>, vector<8x384xf32> -> vector<8x384xf32>
    %346 = vector.extract_strided_slice %344 {offsets = [0, 0], sizes = [8, 128], strides = [1, 1]} : vector<8x384xf32> to vector<8x128xf32>
    %347 = vector.extract_strided_slice %345 {offsets = [0, 0], sizes = [8, 128], strides = [1, 1]} : vector<8x384xf32> to vector<8x128xf32>
    %348 = arith.addf %346, %347 : vector<8x128xf32>
    %349 = arith.negf %348 : vector<8x128xf32>
    %350 = math.exp %349 : vector<8x128xf32>
    %cst_132 = arith.constant 1.000000e+00 : f32
    %351 = vector.broadcast %cst_132 : f32 to vector<8x128xf32>
    %352 = arith.addf %351, %350 : vector<8x128xf32>
    %353 = arith.divf %351, %352 : vector<8x128xf32>
    %354 = vector.extract_strided_slice %344 {offsets = [0, 128], sizes = [8, 128], strides = [1, 1]} : vector<8x384xf32> to vector<8x128xf32>
    %355 = vector.extract_strided_slice %345 {offsets = [0, 128], sizes = [8, 128], strides = [1, 1]} : vector<8x384xf32> to vector<8x128xf32>
    %356 = arith.addf %354, %355 : vector<8x128xf32>
    %357 = arith.negf %356 : vector<8x128xf32>
    %358 = math.exp %357 : vector<8x128xf32>
    %cst_133 = arith.constant 1.000000e+00 : f32
    %359 = vector.broadcast %cst_133 : f32 to vector<8x128xf32>
    %360 = arith.addf %359, %358 : vector<8x128xf32>
    %361 = arith.divf %359, %360 : vector<8x128xf32>
    %362 = vector.extract_strided_slice %344 {offsets = [0, 256], sizes = [8, 128], strides = [1, 1]} : vector<8x384xf32> to vector<8x128xf32>
    %363 = vector.extract_strided_slice %345 {offsets = [0, 256], sizes = [8, 128], strides = [1, 1]} : vector<8x384xf32> to vector<8x128xf32>
    %364 = vector.broadcast %306 : vector<1x128xf32> to vector<8x128xf32>
    %365 = arith.addf %363, %364 : vector<8x128xf32>
    %366 = arith.mulf %353, %365 : vector<8x128xf32>
    %367 = arith.addf %362, %366 : vector<8x128xf32>
    %368 = math.tanh %367 : vector<8x128xf32>
    %cst_134 = arith.constant 1.000000e+00 : f32
    %369 = vector.broadcast %cst_134 : f32 to vector<8x128xf32>
    %370 = arith.subf %369, %361 : vector<8x128xf32>
    %371 = arith.mulf %370, %368 : vector<8x128xf32>
    %372 = arith.mulf %361, %339 : vector<8x128xf32>
    %373 = arith.addf %371, %372 : vector<8x128xf32>
    %c1_135 = arith.constant 1 : index
    %c0_136 = arith.constant 0 : index
    %c0_137 = arith.constant 0 : index
    %374 = vector.load %arg11[%c1_135, %c0_136, %c0_137] : memref<8x8x128xf32, #tpu.memory_space<vmem>>, vector<1x8x128xf32>
    %375 = vector.shape_cast %374 : vector<1x8x128xf32> to vector<8x128xf32>
    %376 = vector.shape_cast %373 : vector<8x128xf32> to vector<1x8x128xf32>
    tpu.vector_store %arg11[%c1_135, %c0_136, %c0_137], %376 {strides = array<i32>} : memref<8x8x128xf32, #tpu.memory_space<vmem>>, vector<1x8x128xf32>,
    %c2_138 = arith.constant 2 : index
    %c0_139 = arith.constant 0 : index
    %c0_140 = arith.constant 0 : index
    %377 = vector.load %arg12[%c2_138, %c0_139, %c0_140] : memref<8x8x384xf32, #tpu.memory_space<vmem>>, vector<1x8x384xf32>
    %378 = vector.shape_cast %377 : vector<1x8x384xf32> to vector<8x384xf32>
    %cst_141 = arith.constant dense<0.000000e+00> : vector<8x384xf32>
    %379 = tpu.matmul %373, %304, %cst_141 {dimension_numbers = #tpu.dot_dimension_numbers<[1], [0], [0], [1], [0, 0, 1, 1], [], []>} : vector<8x128xf32>, vector<128x384xf32>, vector<8x384xf32> -> vector<8x384xf32>
    %380 = vector.extract_strided_slice %378 {offsets = [0, 0], sizes = [8, 128], strides = [1, 1]} : vector<8x384xf32> to vector<8x128xf32>
    %381 = vector.extract_strided_slice %379 {offsets = [0, 0], sizes = [8, 128], strides = [1, 1]} : vector<8x384xf32> to vector<8x128xf32>
    %382 = arith.addf %380, %381 : vector<8x128xf32>
    %383 = arith.negf %382 : vector<8x128xf32>
    %384 = math.exp %383 : vector<8x128xf32>
    %cst_142 = arith.constant 1.000000e+00 : f32
    %385 = vector.broadcast %cst_142 : f32 to vector<8x128xf32>
    %386 = arith.addf %385, %384 : vector<8x128xf32>
    %387 = arith.divf %385, %386 : vector<8x128xf32>
    %388 = vector.extract_strided_slice %378 {offsets = [0, 128], sizes = [8, 128], strides = [1, 1]} : vector<8x384xf32> to vector<8x128xf32>
    %389 = vector.extract_strided_slice %379 {offsets = [0, 128], sizes = [8, 128], strides = [1, 1]} : vector<8x384xf32> to vector<8x128xf32>
    %390 = arith.addf %388, %389 : vector<8x128xf32>
    %391 = arith.negf %390 : vector<8x128xf32>
    %392 = math.exp %391 : vector<8x128xf32>
    %cst_143 = arith.constant 1.000000e+00 : f32
    %393 = vector.broadcast %cst_143 : f32 to vector<8x128xf32>
    %394 = arith.addf %393, %392 : vector<8x128xf32>
    %395 = arith.divf %393, %394 : vector<8x128xf32>
    %396 = vector.extract_strided_slice %378 {offsets = [0, 256], sizes = [8, 128], strides = [1, 1]} : vector<8x384xf32> to vector<8x128xf32>
    %397 = vector.extract_strided_slice %379 {offsets = [0, 256], sizes = [8, 128], strides = [1, 1]} : vector<8x384xf32> to vector<8x128xf32>
    %398 = vector.broadcast %306 : vector<1x128xf32> to vector<8x128xf32>
    %399 = arith.addf %397, %398 : vector<8x128xf32>
    %400 = arith.mulf %387, %399 : vector<8x128xf32>
    %401 = arith.addf %396, %400 : vector<8x128xf32>
    %402 = math.tanh %401 : vector<8x128xf32>
    %cst_144 = arith.constant 1.000000e+00 : f32
    %403 = vector.broadcast %cst_144 : f32 to vector<8x128xf32>
    %404 = arith.subf %403, %395 : vector<8x128xf32>
    %405 = arith.mulf %404, %402 : vector<8x128xf32>
    %406 = arith.mulf %395, %373 : vector<8x128xf32>
    %407 = arith.addf %405, %406 : vector<8x128xf32>
    %c2_145 = arith.constant 2 : index
    %c0_146 = arith.constant 0 : index
    %c0_147 = arith.constant 0 : index
    %408 = vector.load %arg11[%c2_145, %c0_146, %c0_147] : memref<8x8x128xf32, #tpu.memory_space<vmem>>, vector<1x8x128xf32>
    %409 = vector.shape_cast %408 : vector<1x8x128xf32> to vector<8x128xf32>
    %410 = vector.shape_cast %407 : vector<8x128xf32> to vector<1x8x128xf32>
    tpu.vector_store %arg11[%c2_145, %c0_146, %c0_147], %410 {strides = array<i32>} : memref<8x8x128xf32, #tpu.memory_space<vmem>>, vector<1x8x128xf32>,
    %c3_148 = arith.constant 3 : index
    %c0_149 = arith.constant 0 : index
    %c0_150 = arith.constant 0 : index
    %411 = vector.load %arg12[%c3_148, %c0_149, %c0_150] : memref<8x8x384xf32, #tpu.memory_space<vmem>>, vector<1x8x384xf32>
    %412 = vector.shape_cast %411 : vector<1x8x384xf32> to vector<8x384xf32>
    %cst_151 = arith.constant dense<0.000000e+00> : vector<8x384xf32>
    %413 = tpu.matmul %407, %304, %cst_151 {dimension_numbers = #tpu.dot_dimension_numbers<[1], [0], [0], [1], [0, 0, 1, 1], [], []>} : vector<8x128xf32>, vector<128x384xf32>, vector<8x384xf32> -> vector<8x384xf32>
    %414 = vector.extract_strided_slice %412 {offsets = [0, 0], sizes = [8, 128], strides = [1, 1]} : vector<8x384xf32> to vector<8x128xf32>
    %415 = vector.extract_strided_slice %413 {offsets = [0, 0], sizes = [8, 128], strides = [1, 1]} : vector<8x384xf32> to vector<8x128xf32>
    %416 = arith.addf %414, %415 : vector<8x128xf32>
    %417 = arith.negf %416 : vector<8x128xf32>
    %418 = math.exp %417 : vector<8x128xf32>
    %cst_152 = arith.constant 1.000000e+00 : f32
    %419 = vector.broadcast %cst_152 : f32 to vector<8x128xf32>
    %420 = arith.addf %419, %418 : vector<8x128xf32>
    %421 = arith.divf %419, %420 : vector<8x128xf32>
    %422 = vector.extract_strided_slice %412 {offsets = [0, 128], sizes = [8, 128], strides = [1, 1]} : vector<8x384xf32> to vector<8x128xf32>
    %423 = vector.extract_strided_slice %413 {offsets = [0, 128], sizes = [8, 128], strides = [1, 1]} : vector<8x384xf32> to vector<8x128xf32>
    %424 = arith.addf %422, %423 : vector<8x128xf32>
    %425 = arith.negf %424 : vector<8x128xf32>
    %426 = math.exp %425 : vector<8x128xf32>
    %cst_153 = arith.constant 1.000000e+00 : f32
    %427 = vector.broadcast %cst_153 : f32 to vector<8x128xf32>
    %428 = arith.addf %427, %426 : vector<8x128xf32>
    %429 = arith.divf %427, %428 : vector<8x128xf32>
    %430 = vector.extract_strided_slice %412 {offsets = [0, 256], sizes = [8, 128], strides = [1, 1]} : vector<8x384xf32> to vector<8x128xf32>
    %431 = vector.extract_strided_slice %413 {offsets = [0, 256], sizes = [8, 128], strides = [1, 1]} : vector<8x384xf32> to vector<8x128xf32>
    %432 = vector.broadcast %306 : vector<1x128xf32> to vector<8x128xf32>
    %433 = arith.addf %431, %432 : vector<8x128xf32>
    %434 = arith.mulf %421, %433 : vector<8x128xf32>
    %435 = arith.addf %430, %434 : vector<8x128xf32>
    %436 = math.tanh %435 : vector<8x128xf32>
    %cst_154 = arith.constant 1.000000e+00 : f32
    %437 = vector.broadcast %cst_154 : f32 to vector<8x128xf32>
    %438 = arith.subf %437, %429 : vector<8x128xf32>
    %439 = arith.mulf %438, %436 : vector<8x128xf32>
    %440 = arith.mulf %429, %407 : vector<8x128xf32>
    %441 = arith.addf %439, %440 : vector<8x128xf32>
    %c3_155 = arith.constant 3 : index
    %c0_156 = arith.constant 0 : index
    %c0_157 = arith.constant 0 : index
    %442 = vector.load %arg11[%c3_155, %c0_156, %c0_157] : memref<8x8x128xf32, #tpu.memory_space<vmem>>, vector<1x8x128xf32>
    %443 = vector.shape_cast %442 : vector<1x8x128xf32> to vector<8x128xf32>
    %444 = vector.shape_cast %441 : vector<8x128xf32> to vector<1x8x128xf32>
    tpu.vector_store %arg11[%c3_155, %c0_156, %c0_157], %444 {strides = array<i32>} : memref<8x8x128xf32, #tpu.memory_space<vmem>>, vector<1x8x128xf32>,
    %c4_158 = arith.constant 4 : index
    %c0_159 = arith.constant 0 : index
    %c0_160 = arith.constant 0 : index
    %445 = vector.load %arg12[%c4_158, %c0_159, %c0_160] : memref<8x8x384xf32, #tpu.memory_space<vmem>>, vector<1x8x384xf32>
    %446 = vector.shape_cast %445 : vector<1x8x384xf32> to vector<8x384xf32>
    %cst_161 = arith.constant dense<0.000000e+00> : vector<8x384xf32>
    %447 = tpu.matmul %441, %304, %cst_161 {dimension_numbers = #tpu.dot_dimension_numbers<[1], [0], [0], [1], [0, 0, 1, 1], [], []>} : vector<8x128xf32>, vector<128x384xf32>, vector<8x384xf32> -> vector<8x384xf32>
    %448 = vector.extract_strided_slice %446 {offsets = [0, 0], sizes = [8, 128], strides = [1, 1]} : vector<8x384xf32> to vector<8x128xf32>
    %449 = vector.extract_strided_slice %447 {offsets = [0, 0], sizes = [8, 128], strides = [1, 1]} : vector<8x384xf32> to vector<8x128xf32>
    %450 = arith.addf %448, %449 : vector<8x128xf32>
    %451 = arith.negf %450 : vector<8x128xf32>
    %452 = math.exp %451 : vector<8x128xf32>
    %cst_162 = arith.constant 1.000000e+00 : f32
    %453 = vector.broadcast %cst_162 : f32 to vector<8x128xf32>
    %454 = arith.addf %453, %452 : vector<8x128xf32>
    %455 = arith.divf %453, %454 : vector<8x128xf32>
    %456 = vector.extract_strided_slice %446 {offsets = [0, 128], sizes = [8, 128], strides = [1, 1]} : vector<8x384xf32> to vector<8x128xf32>
    %457 = vector.extract_strided_slice %447 {offsets = [0, 128], sizes = [8, 128], strides = [1, 1]} : vector<8x384xf32> to vector<8x128xf32>
    %458 = arith.addf %456, %457 : vector<8x128xf32>
    %459 = arith.negf %458 : vector<8x128xf32>
    %460 = math.exp %459 : vector<8x128xf32>
    %cst_163 = arith.constant 1.000000e+00 : f32
    %461 = vector.broadcast %cst_163 : f32 to vector<8x128xf32>
    %462 = arith.addf %461, %460 : vector<8x128xf32>
    %463 = arith.divf %461, %462 : vector<8x128xf32>
    %464 = vector.extract_strided_slice %446 {offsets = [0, 256], sizes = [8, 128], strides = [1, 1]} : vector<8x384xf32> to vector<8x128xf32>
    %465 = vector.extract_strided_slice %447 {offsets = [0, 256], sizes = [8, 128], strides = [1, 1]} : vector<8x384xf32> to vector<8x128xf32>
    %466 = vector.broadcast %306 : vector<1x128xf32> to vector<8x128xf32>
    %467 = arith.addf %465, %466 : vector<8x128xf32>
    %468 = arith.mulf %455, %467 : vector<8x128xf32>
    %469 = arith.addf %464, %468 : vector<8x128xf32>
    %470 = math.tanh %469 : vector<8x128xf32>
    %cst_164 = arith.constant 1.000000e+00 : f32
    %471 = vector.broadcast %cst_164 : f32 to vector<8x128xf32>
    %472 = arith.subf %471, %463 : vector<8x128xf32>
    %473 = arith.mulf %472, %470 : vector<8x128xf32>
    %474 = arith.mulf %463, %441 : vector<8x128xf32>
    %475 = arith.addf %473, %474 : vector<8x128xf32>
    %c4_165 = arith.constant 4 : index
    %c0_166 = arith.constant 0 : index
    %c0_167 = arith.constant 0 : index
    %476 = vector.load %arg11[%c4_165, %c0_166, %c0_167] : memref<8x8x128xf32, #tpu.memory_space<vmem>>, vector<1x8x128xf32>
    %477 = vector.shape_cast %476 : vector<1x8x128xf32> to vector<8x128xf32>
    %478 = vector.shape_cast %475 : vector<8x128xf32> to vector<1x8x128xf32>
    tpu.vector_store %arg11[%c4_165, %c0_166, %c0_167], %478 {strides = array<i32>} : memref<8x8x128xf32, #tpu.memory_space<vmem>>, vector<1x8x128xf32>,
    %c5_168 = arith.constant 5 : index
    %c0_169 = arith.constant 0 : index
    %c0_170 = arith.constant 0 : index
    %479 = vector.load %arg12[%c5_168, %c0_169, %c0_170] : memref<8x8x384xf32, #tpu.memory_space<vmem>>, vector<1x8x384xf32>
    %480 = vector.shape_cast %479 : vector<1x8x384xf32> to vector<8x384xf32>
    %cst_171 = arith.constant dense<0.000000e+00> : vector<8x384xf32>
    %481 = tpu.matmul %475, %304, %cst_171 {dimension_numbers = #tpu.dot_dimension_numbers<[1], [0], [0], [1], [0, 0, 1, 1], [], []>} : vector<8x128xf32>, vector<128x384xf32>, vector<8x384xf32> -> vector<8x384xf32>
    %482 = vector.extract_strided_slice %480 {offsets = [0, 0], sizes = [8, 128], strides = [1, 1]} : vector<8x384xf32> to vector<8x128xf32>
    %483 = vector.extract_strided_slice %481 {offsets = [0, 0], sizes = [8, 128], strides = [1, 1]} : vector<8x384xf32> to vector<8x128xf32>
    %484 = arith.addf %482, %483 : vector<8x128xf32>
    %485 = arith.negf %484 : vector<8x128xf32>
    %486 = math.exp %485 : vector<8x128xf32>
    %cst_172 = arith.constant 1.000000e+00 : f32
    %487 = vector.broadcast %cst_172 : f32 to vector<8x128xf32>
    %488 = arith.addf %487, %486 : vector<8x128xf32>
    %489 = arith.divf %487, %488 : vector<8x128xf32>
    %490 = vector.extract_strided_slice %480 {offsets = [0, 128], sizes = [8, 128], strides = [1, 1]} : vector<8x384xf32> to vector<8x128xf32>
    %491 = vector.extract_strided_slice %481 {offsets = [0, 128], sizes = [8, 128], strides = [1, 1]} : vector<8x384xf32> to vector<8x128xf32>
    %492 = arith.addf %490, %491 : vector<8x128xf32>
    %493 = arith.negf %492 : vector<8x128xf32>
    %494 = math.exp %493 : vector<8x128xf32>
    %cst_173 = arith.constant 1.000000e+00 : f32
    %495 = vector.broadcast %cst_173 : f32 to vector<8x128xf32>
    %496 = arith.addf %495, %494 : vector<8x128xf32>
    %497 = arith.divf %495, %496 : vector<8x128xf32>
    %498 = vector.extract_strided_slice %480 {offsets = [0, 256], sizes = [8, 128], strides = [1, 1]} : vector<8x384xf32> to vector<8x128xf32>
    %499 = vector.extract_strided_slice %481 {offsets = [0, 256], sizes = [8, 128], strides = [1, 1]} : vector<8x384xf32> to vector<8x128xf32>
    %500 = vector.broadcast %306 : vector<1x128xf32> to vector<8x128xf32>
    %501 = arith.addf %499, %500 : vector<8x128xf32>
    %502 = arith.mulf %489, %501 : vector<8x128xf32>
    %503 = arith.addf %498, %502 : vector<8x128xf32>
    %504 = math.tanh %503 : vector<8x128xf32>
    %cst_174 = arith.constant 1.000000e+00 : f32
    %505 = vector.broadcast %cst_174 : f32 to vector<8x128xf32>
    %506 = arith.subf %505, %497 : vector<8x128xf32>
    %507 = arith.mulf %506, %504 : vector<8x128xf32>
    %508 = arith.mulf %497, %475 : vector<8x128xf32>
    %509 = arith.addf %507, %508 : vector<8x128xf32>
    %c5_175 = arith.constant 5 : index
    %c0_176 = arith.constant 0 : index
    %c0_177 = arith.constant 0 : index
    %510 = vector.load %arg11[%c5_175, %c0_176, %c0_177] : memref<8x8x128xf32, #tpu.memory_space<vmem>>, vector<1x8x128xf32>
    %511 = vector.shape_cast %510 : vector<1x8x128xf32> to vector<8x128xf32>
    %512 = vector.shape_cast %509 : vector<8x128xf32> to vector<1x8x128xf32>
    tpu.vector_store %arg11[%c5_175, %c0_176, %c0_177], %512 {strides = array<i32>} : memref<8x8x128xf32, #tpu.memory_space<vmem>>, vector<1x8x128xf32>,
    %c6_178 = arith.constant 6 : index
    %c0_179 = arith.constant 0 : index
    %c0_180 = arith.constant 0 : index
    %513 = vector.load %arg12[%c6_178, %c0_179, %c0_180] : memref<8x8x384xf32, #tpu.memory_space<vmem>>, vector<1x8x384xf32>
    %514 = vector.shape_cast %513 : vector<1x8x384xf32> to vector<8x384xf32>
    %cst_181 = arith.constant dense<0.000000e+00> : vector<8x384xf32>
    %515 = tpu.matmul %509, %304, %cst_181 {dimension_numbers = #tpu.dot_dimension_numbers<[1], [0], [0], [1], [0, 0, 1, 1], [], []>} : vector<8x128xf32>, vector<128x384xf32>, vector<8x384xf32> -> vector<8x384xf32>
    %516 = vector.extract_strided_slice %514 {offsets = [0, 0], sizes = [8, 128], strides = [1, 1]} : vector<8x384xf32> to vector<8x128xf32>
    %517 = vector.extract_strided_slice %515 {offsets = [0, 0], sizes = [8, 128], strides = [1, 1]} : vector<8x384xf32> to vector<8x128xf32>
    %518 = arith.addf %516, %517 : vector<8x128xf32>
    %519 = arith.negf %518 : vector<8x128xf32>
    %520 = math.exp %519 : vector<8x128xf32>
    %cst_182 = arith.constant 1.000000e+00 : f32
    %521 = vector.broadcast %cst_182 : f32 to vector<8x128xf32>
    %522 = arith.addf %521, %520 : vector<8x128xf32>
    %523 = arith.divf %521, %522 : vector<8x128xf32>
    %524 = vector.extract_strided_slice %514 {offsets = [0, 128], sizes = [8, 128], strides = [1, 1]} : vector<8x384xf32> to vector<8x128xf32>
    %525 = vector.extract_strided_slice %515 {offsets = [0, 128], sizes = [8, 128], strides = [1, 1]} : vector<8x384xf32> to vector<8x128xf32>
    %526 = arith.addf %524, %525 : vector<8x128xf32>
    %527 = arith.negf %526 : vector<8x128xf32>
    %528 = math.exp %527 : vector<8x128xf32>
    %cst_183 = arith.constant 1.000000e+00 : f32
    %529 = vector.broadcast %cst_183 : f32 to vector<8x128xf32>
    %530 = arith.addf %529, %528 : vector<8x128xf32>
    %531 = arith.divf %529, %530 : vector<8x128xf32>
    %532 = vector.extract_strided_slice %514 {offsets = [0, 256], sizes = [8, 128], strides = [1, 1]} : vector<8x384xf32> to vector<8x128xf32>
    %533 = vector.extract_strided_slice %515 {offsets = [0, 256], sizes = [8, 128], strides = [1, 1]} : vector<8x384xf32> to vector<8x128xf32>
    %534 = vector.broadcast %306 : vector<1x128xf32> to vector<8x128xf32>
    %535 = arith.addf %533, %534 : vector<8x128xf32>
    %536 = arith.mulf %523, %535 : vector<8x128xf32>
    %537 = arith.addf %532, %536 : vector<8x128xf32>
    %538 = math.tanh %537 : vector<8x128xf32>
    %cst_184 = arith.constant 1.000000e+00 : f32
    %539 = vector.broadcast %cst_184 : f32 to vector<8x128xf32>
    %540 = arith.subf %539, %531 : vector<8x128xf32>
    %541 = arith.mulf %540, %538 : vector<8x128xf32>
    %542 = arith.mulf %531, %509 : vector<8x128xf32>
    %543 = arith.addf %541, %542 : vector<8x128xf32>
    %c6_185 = arith.constant 6 : index
    %c0_186 = arith.constant 0 : index
    %c0_187 = arith.constant 0 : index
    %544 = vector.load %arg11[%c6_185, %c0_186, %c0_187] : memref<8x8x128xf32, #tpu.memory_space<vmem>>, vector<1x8x128xf32>
    %545 = vector.shape_cast %544 : vector<1x8x128xf32> to vector<8x128xf32>
    %546 = vector.shape_cast %543 : vector<8x128xf32> to vector<1x8x128xf32>
    tpu.vector_store %arg11[%c6_185, %c0_186, %c0_187], %546 {strides = array<i32>} : memref<8x8x128xf32, #tpu.memory_space<vmem>>, vector<1x8x128xf32>,
    %c7_188 = arith.constant 7 : index
    %c0_189 = arith.constant 0 : index
    %c0_190 = arith.constant 0 : index
    %547 = vector.load %arg12[%c7_188, %c0_189, %c0_190] : memref<8x8x384xf32, #tpu.memory_space<vmem>>, vector<1x8x384xf32>
    %548 = vector.shape_cast %547 : vector<1x8x384xf32> to vector<8x384xf32>
    %cst_191 = arith.constant dense<0.000000e+00> : vector<8x384xf32>
    %549 = tpu.matmul %543, %304, %cst_191 {dimension_numbers = #tpu.dot_dimension_numbers<[1], [0], [0], [1], [0, 0, 1, 1], [], []>} : vector<8x128xf32>, vector<128x384xf32>, vector<8x384xf32> -> vector<8x384xf32>
    %550 = vector.extract_strided_slice %548 {offsets = [0, 0], sizes = [8, 128], strides = [1, 1]} : vector<8x384xf32> to vector<8x128xf32>
    %551 = vector.extract_strided_slice %549 {offsets = [0, 0], sizes = [8, 128], strides = [1, 1]} : vector<8x384xf32> to vector<8x128xf32>
    %552 = arith.addf %550, %551 : vector<8x128xf32>
    %553 = arith.negf %552 : vector<8x128xf32>
    %554 = math.exp %553 : vector<8x128xf32>
    %cst_192 = arith.constant 1.000000e+00 : f32
    %555 = vector.broadcast %cst_192 : f32 to vector<8x128xf32>
    %556 = arith.addf %555, %554 : vector<8x128xf32>
    %557 = arith.divf %555, %556 : vector<8x128xf32>
    %558 = vector.extract_strided_slice %548 {offsets = [0, 128], sizes = [8, 128], strides = [1, 1]} : vector<8x384xf32> to vector<8x128xf32>
    %559 = vector.extract_strided_slice %549 {offsets = [0, 128], sizes = [8, 128], strides = [1, 1]} : vector<8x384xf32> to vector<8x128xf32>
    %560 = arith.addf %558, %559 : vector<8x128xf32>
    %561 = arith.negf %560 : vector<8x128xf32>
    %562 = math.exp %561 : vector<8x128xf32>
    %cst_193 = arith.constant 1.000000e+00 : f32
    %563 = vector.broadcast %cst_193 : f32 to vector<8x128xf32>
    %564 = arith.addf %563, %562 : vector<8x128xf32>
    %565 = arith.divf %563, %564 : vector<8x128xf32>
    %566 = vector.extract_strided_slice %548 {offsets = [0, 256], sizes = [8, 128], strides = [1, 1]} : vector<8x384xf32> to vector<8x128xf32>
    %567 = vector.extract_strided_slice %549 {offsets = [0, 256], sizes = [8, 128], strides = [1, 1]} : vector<8x384xf32> to vector<8x128xf32>
    %568 = vector.broadcast %306 : vector<1x128xf32> to vector<8x128xf32>
    %569 = arith.addf %567, %568 : vector<8x128xf32>
    %570 = arith.mulf %557, %569 : vector<8x128xf32>
    %571 = arith.addf %566, %570 : vector<8x128xf32>
    %572 = math.tanh %571 : vector<8x128xf32>
    %cst_194 = arith.constant 1.000000e+00 : f32
    %573 = vector.broadcast %cst_194 : f32 to vector<8x128xf32>
    %574 = arith.subf %573, %565 : vector<8x128xf32>
    %575 = arith.mulf %574, %572 : vector<8x128xf32>
    %576 = arith.mulf %565, %543 : vector<8x128xf32>
    %577 = arith.addf %575, %576 : vector<8x128xf32>
    %c7_195 = arith.constant 7 : index
    %c0_196 = arith.constant 0 : index
    %c0_197 = arith.constant 0 : index
    %578 = vector.load %arg11[%c7_195, %c0_196, %c0_197] : memref<8x8x128xf32, #tpu.memory_space<vmem>>, vector<1x8x128xf32>
    %579 = vector.shape_cast %578 : vector<1x8x128xf32> to vector<8x128xf32>
    %580 = vector.shape_cast %577 : vector<8x128xf32> to vector<1x8x128xf32>
    tpu.vector_store %arg11[%c7_195, %c0_196, %c0_197], %580 {strides = array<i32>} : memref<8x8x128xf32, #tpu.memory_space<vmem>>, vector<1x8x128xf32>,
    %c1_198 = arith.constant 1 : index
    %c0_199 = arith.constant 0 : index
    %c0_200 = arith.constant 0 : index
    %581 = vector.load %arg10[%c1_198, %c0_199, %c0_200] : memref<2x8x128xf32, #tpu.memory_space<vmem>>, vector<1x8x128xf32>
    %582 = vector.shape_cast %581 : vector<1x8x128xf32> to vector<8x128xf32>
    %583 = vector.shape_cast %577 : vector<8x128xf32> to vector<1x8x128xf32>
    tpu.vector_store %arg10[%c1_198, %c0_199, %c0_200], %583 {strides = array<i32>} : memref<2x8x128xf32, #tpu.memory_space<vmem>>, vector<1x8x128xf32>,
    %c0_201 = arith.constant 0 : index
    %c0_202 = arith.constant 0 : index
    %c0_203 = arith.constant 0 : index
    %584 = vector.load %arg11[%c0_201, %c0_202, %c0_203] : memref<8x8x128xf32, #tpu.memory_space<vmem>>, vector<8x8x128xf32>
    %585 = vector.shape_cast %584 : vector<8x8x128xf32> to vector<64x128xf32>
    %c0_204 = arith.constant 0 : index
    %c0_205 = arith.constant 0 : index
    %586 = vector.load %arg6[%c0_204, %c0_205] : memref<64x128xf32, #tpu.memory_space<vmem>>, vector<64x128xf32>
    %587 = arith.mulf %585, %586 : vector<64x128xf32>
    %c0_206 = arith.constant 0 : index
    %c0_207 = arith.constant 0 : index
    %588 = vector.load %arg7[%c0_206, %c0_207] : memref<128x128xf32, #tpu.memory_space<vmem>>, vector<128x128xf32>
    %cst_208 = arith.constant dense<0.000000e+00> : vector<64x128xf32>
    %589 = tpu.matmul %587, %588, %cst_208 {dimension_numbers = #tpu.dot_dimension_numbers<[1], [0], [0], [1], [0, 0, 1, 1], [], []>} : vector<64x128xf32>, vector<128x128xf32>, vector<64x128xf32> -> vector<64x128xf32>
    %c0_209 = arith.constant 0 : index
    %c0_210 = arith.constant 0 : index
    %590 = vector.load %arg8[%c0_209, %c0_210] : memref<1x128xf32, #tpu.memory_space<vmem>>, vector<1x128xf32>
    %591 = vector.broadcast %590 : vector<1x128xf32> to vector<64x128xf32>
    %592 = arith.addf %589, %591 : vector<64x128xf32>
    %593 = vector.shape_cast %592 : vector<64x128xf32> to vector<8x8x128xf32>
    %c0_211 = arith.constant 0 : index
    %c0_212 = arith.constant 0 : index
    %c0_213 = arith.constant 0 : index
    %594 = vector.load %arg9[%c0_211, %c0_212, %c0_213] : memref<8x8x128xf32, #tpu.memory_space<vmem>>, vector<8x8x128xf32>
    tpu.vector_store %arg9[%c0_211, %c0_212, %c0_213], %593 {strides = array<i32>} : memref<8x8x128xf32, #tpu.memory_space<vmem>>, vector<8x8x128xf32>,
    return
  }
}

</mosaic_0001>

<llo_original>
// kernel: tpu_custom_call.1
$region0: #{tpu_custom_call.1}
  #allocation0 [shape = 'u32[]', space=smem, size = 0x4, offset = 0x4, fixed_abs, tag = 'smem constant byte address 0x4 - core index']
  #allocation1 [shape = 'u32[144,128]{1,0:T(1,128)}', space=vmem, size = 0x12000, scoped, tag = 'internal scratch']
  #allocation2 [shape = 'f32[8,8,128]{2,1,0:T(8,128)}', space=vmem, size = 0x8000, scoped, tag = 'scratch operand']
  #allocation3 [shape = 'f32[8,8,384]{2,1,0:T(8,128)}', space=vmem, size = 0x18000, scoped, tag = 'scratch operand']
  %s0 = inlined_call_operand.hbm [shape: f32[8,8,128], index: 0, kind: input, shape index: {}]
  %s1 = inlined_call_operand.hbm [shape: f32[2,8,128], index: 1, kind: input, shape index: {}]
  %s2 = inlined_call_operand.hbm [shape: f32[2,128,384], index: 2, kind: input, shape index: {}]
  %s3 = inlined_call_operand.hbm [shape: f32[2,128,384], index: 3, kind: input, shape index: {}]
  %s4 = inlined_call_operand.vmem [shape: f32[2,1,384], index: 4, kind: input, shape index: {}]
  %s5 = inlined_call_operand.vmem [shape: f32[2,1,128], index: 5, kind: input, shape index: {}]
  %s6 = inlined_call_operand.hbm [shape: f32[64,128], index: 6, kind: input, shape index: {}]
  %s7 = inlined_call_operand.hbm [shape: f32[128,128], index: 7, kind: input, shape index: {}]
  %s8 = inlined_call_operand.vmem [shape: f32[1,128], index: 8, kind: input, shape index: {}]
  %s9 = inlined_call_operand.hbm [shape: f32[8,8,128], index: 9, kind: output, shape index: {0}]
  %s10 = inlined_call_operand.hbm [shape: f32[2,8,128], index: 10, kind: output, shape index: {1}]
  %11 = xla_tuple %s9, %s10
  %s12 = sld [smem:[#allocation0]]
  $region78: #{tpu_custom_call.1} parent=0
    _
  %s14 = ssub.s32 1, %s12
  %s15 = scalar_select 0, %s14, %s12
  $region1: #{tpu_custom_call.1} parent=0
    #allocation4 [shape = 'u8[32768]{0}', space=vmem, size = 0x8000, scoped, tag = 'input window, operand 0, single buffered']
    #allocation5 [shape = 's32[1]{0}', space=sflag, size = 0x4, scoped, tag = 'scoped memory for tpu_custom_call.1']
    #allocation6 [shape = 's32[1]{0}', space=sflag, size = 0x4, scoped, tag = 'scoped memory for tpu_custom_call.1']
    #allocation7 [shape = 'u8[8192]{0}', space=vmem, size = 0x2000, scoped, tag = 'input window, operand 1, single buffered']
    #allocation8 [shape = 's32[1]{0}', space=sflag, size = 0x4, scoped, tag = 'scoped memory for tpu_custom_call.1']
    #allocation9 [shape = 'u8[393216]{0}', space=vmem, size = 0x60000, scoped, tag = 'input window, operand 2, single buffered']
    #allocation10 [shape = 'u8[393216]{0}', space=vmem, size = 0x60000, scoped, tag = 'input window, operand 3, single buffered']
    #allocation11 [shape = 's32[1]{0}', space=sflag, size = 0x4, scoped, tag = 'scoped memory for tpu_custom_call.1']
    #allocation12 [shape = 'u8[32768]{0}', space=vmem, size = 0x8000, scoped, tag = 'input window, operand 6, single buffered']
    #allocation13 [shape = 'u8[65536]{0}', space=vmem, size = 0x10000, scoped, tag = 'input window, operand 7, single buffered']
    #allocation14 [shape = 's32[1]{0}', space=sflag, size = 0x4, scoped, tag = 'scoped memory for tpu_custom_call.1']
    #allocation15 [shape = 'u8[32768]{0}', space=vmem, size = 0x8000, scoped, tag = 'output window, operand 0, single buffered']
    #allocation16 [shape = 'u8[8192]{0}', space=vmem, size = 0x2000, scoped, tag = 'output window, operand 1, single buffered']
    #allocation17 [shape = 's32[1]{0}', space=sflag, size = 0x4, scoped, tag = 'scoped memory for tpu_custom_call.1']
    %16 = vsyncpa [#allocation5], 0
    %17 = vsyncpa [#allocation8], 0
    %18 = vsyncpa [#allocation11], 0
    %19 = vsyncpa [#allocation14], 0
    %20 = vsyncpa [#allocation6], 0
    %21 = vsyncpa [#allocation17], 0
    // Predicated region
    $region2: #{tpu_custom_call.1} parent=1 // pred_check
      _
    $region3: #{tpu_custom_call.1} parent=1 // pred_check_branch
      %23 = sbr.rel (0) target = $region5
    $region4: #{tpu_custom_call.1} parent=1 // pred_region
      %s25 = ssub.s32 1024, 1024
      %26 = vsyncadd [#allocation5], %s25
      %s27 = sshll.u32 [#allocation4], 4
      %s28 = int_to_ptr.vmem [resolvable:$true] %s27
      %33 = dma.hbm_to_vmem [thread:$0]  %s0, 1024, %s28, [#allocation5], 128, 128, 8
    $region5: #{tpu_custom_call.1} parent=1 // pred_fallthru
      _
    // Predicated region
    $region6: #{tpu_custom_call.1} parent=1 // pred_check
      _
    $region7: #{tpu_custom_call.1} parent=1 // pred_check_branch
      %35 = sbr.rel (0) target = $region9
    $region8: #{tpu_custom_call.1} parent=1 // pred_region
      %s37 = ssub.s32 256, 256
      %38 = vsyncadd [#allocation8], %s37
      %s39 = sshll.u32 [#allocation7], 4
      %s40 = int_to_ptr.vmem [resolvable:$true] %s39
      %45 = dma.hbm_to_vmem [thread:$0]  %s1, 256, %s40, [#allocation8], 128, 128, 8
    $region9: #{tpu_custom_call.1} parent=1 // pred_fallthru
      _
    // Predicated region
    $region10: #{tpu_custom_call.1} parent=1 // pred_check
      _
    $region11: #{tpu_custom_call.1} parent=1 // pred_check_branch
      %47 = sbr.rel (0) target = $region13
    $region12: #{tpu_custom_call.1} parent=1 // pred_region
      %s49 = ssub.s32 12288, 12288
      %50 = vsyncadd [#allocation8], %s49
      %s51 = sshll.u32 [#allocation9], 4
      %s52 = int_to_ptr.vmem [resolvable:$true] %s51
      %57 = dma.hbm_to_vmem [thread:$0]  %s2, 12288, %s52, [#allocation8], 384, 384, 24
    $region13: #{tpu_custom_call.1} parent=1 // pred_fallthru
      _
    // Predicated region
    $region14: #{tpu_custom_call.1} parent=1 // pred_check
      _
    $region15: #{tpu_custom_call.1} parent=1 // pred_check_branch
      %59 = sbr.rel (0) target = $region17
    $region16: #{tpu_custom_call.1} parent=1 // pred_region
      %s61 = ssub.s32 12288, 12288
      %62 = vsyncadd [#allocation11], %s61
      %s63 = sshll.u32 [#allocation10], 4
      %s64 = int_to_ptr.vmem [resolvable:$true] %s63
      %69 = dma.hbm_to_vmem [thread:$0]  %s3, 12288, %s64, [#allocation11], 384, 384, 24
    $region17: #{tpu_custom_call.1} parent=1 // pred_fallthru
      _
    // Predicated region
    $region18: #{tpu_custom_call.1} parent=1 // pred_check
      _
    $region19: #{tpu_custom_call.1} parent=1 // pred_check_branch
      %71 = sbr.rel (0) target = $region21
    $region20: #{tpu_custom_call.1} parent=1 // pred_region
      _
    $region21: #{tpu_custom_call.1} parent=1 // pred_fallthru
      _
    // Predicated region
    $region22: #{tpu_custom_call.1} parent=1 // pred_check
      _
    $region23: #{tpu_custom_call.1} parent=1 // pred_check_branch
      %73 = sbr.rel (0) target = $region25
    $region24: #{tpu_custom_call.1} parent=1 // pred_region
      _
    $region25: #{tpu_custom_call.1} parent=1 // pred_fallthru
      _
    // Predicated region
    $region26: #{tpu_custom_call.1} parent=1 // pred_check
      _
    $region27: #{tpu_custom_call.1} parent=1 // pred_check_branch
      %75 = sbr.rel (0) target = $region29
    $region28: #{tpu_custom_call.1} parent=1 // pred_region
      %s77 = ssub.s32 1024, 1024
      %78 = vsyncadd [#allocation11], %s77
      %s79 = sshll.u32 [#allocation12], 4
      %s80 = int_to_ptr.vmem [resolvable:$true] %s79
      %85 = dma.hbm_to_vmem [thread:$0]  %s6, 1024, %s80, [#allocation11], 128, 128, 8
    $region29: #{tpu_custom_call.1} parent=1 // pred_fallthru
      _
    // Predicated region
    $region30: #{tpu_custom_call.1} parent=1 // pred_check
      _
    $region31: #{tpu_custom_call.1} parent=1 // pred_check_branch
      %87 = sbr.rel (0) target = $region33
    $region32: #{tpu_custom_call.1} parent=1 // pred_region
      %s89 = ssub.s32 2048, 2048
      %90 = vsyncadd [#allocation14], %s89
      %s91 = sshll.u32 [#allocation13], 4
      %s92 = int_to_ptr.vmem [resolvable:$true] %s91
      %97 = dma.hbm_to_vmem [thread:$0]  %s7, 2048, %s92, [#allocation14], 128, 128, 8
    $region33: #{tpu_custom_call.1} parent=1 // pred_fallthru
      _
    // Predicated region
    $region34: #{tpu_custom_call.1} parent=1 // pred_check
      _
    $region35: #{tpu_custom_call.1} parent=1 // pred_check_branch
      %99 = sbr.rel (0) target = $region37
    $region36: #{tpu_custom_call.1} parent=1 // pred_region
      _
    $region37: #{tpu_custom_call.1} parent=1 // pred_fallthru
      _
    // Predicated region
    $region38: #{tpu_custom_call.1} parent=1 // pred_check
      _
    $region39: #{tpu_custom_call.1} parent=1 // pred_check_branch
      %101 = sbr.rel (0) target = $region41
    $region40: #{tpu_custom_call.1} parent=1 // pred_region
      %102 = dma.done [#allocation5], 1024
    $region41: #{tpu_custom_call.1} parent=1 // pred_fallthru
      _
    // Predicated region
    $region42: #{tpu_custom_call.1} parent=1 // pred_check
      _
    $region43: #{tpu_custom_call.1} parent=1 // pred_check_branch
      %104 = sbr.rel (0) target = $region45
    $region44: #{tpu_custom_call.1} parent=1 // pred_region
      %105 = dma.done [#allocation8], 256
    $region45: #{tpu_custom_call.1} parent=1 // pred_fallthru
      _
    // Predicated region
    $region46: #{tpu_custom_call.1} parent=1 // pred_check
      _
    $region47: #{tpu_custom_call.1} parent=1 // pred_check_branch
      %107 = sbr.rel (0) target = $region49
    $region48: #{tpu_custom_call.1} parent=1 // pred_region
      %108 = dma.done [#allocation8], 12288
    $region49: #{tpu_custom_call.1} parent=1 // pred_fallthru
      _
    // Predicated region
    $region50: #{tpu_custom_call.1} parent=1 // pred_check
      _
    $region51: #{tpu_custom_call.1} parent=1 // pred_check_branch
      %110 = sbr.rel (0) target = $region53
    $region52: #{tpu_custom_call.1} parent=1 // pred_region
      %111 = dma.done [#allocation11], 12288
    $region53: #{tpu_custom_call.1} parent=1 // pred_fallthru
      _
    // Predicated region
    $region54: #{tpu_custom_call.1} parent=1 // pred_check
      _
    $region55: #{tpu_custom_call.1} parent=1 // pred_check_branch
      %113 = sbr.rel (0) target = $region57
    $region56: #{tpu_custom_call.1} parent=1 // pred_region
      %114 = dma.done [#allocation11], 1024
    $region57: #{tpu_custom_call.1} parent=1 // pred_fallthru
      _
    // Predicated region
    $region58: #{tpu_custom_call.1} parent=1 // pred_check
      _
    $region59: #{tpu_custom_call.1} parent=1 // pred_check_branch
      %116 = sbr.rel (0) target = $region61
    $region60: #{tpu_custom_call.1} parent=1 // pred_region
      %117 = dma.done [#allocation14], 2048
    $region61: #{tpu_custom_call.1} parent=1 // pred_fallthru
      _
    %v118 = vld [vmem:[#allocation4] sm:$0xff]
    %v119 = vld [vmem:[#allocation4 + $0x8] sm:$0xff]
    %v120 = vld [vmem:[#allocation4 + $0x10] sm:$0xff]
    %v121 = vld [vmem:[#allocation4 + $0x18] sm:$0xff]
    %v122 = vld [vmem:[#allocation4 + $0x20] sm:$0xff]
    %v123 = vld [vmem:[#allocation4 + $0x28] sm:$0xff]
    %v124 = vld [vmem:[#allocation4 + $0x30] sm:$0xff]
    %v125 = vld [vmem:[#allocation4 + $0x38] sm:$0xff]
    %v126 = vld [vmem:[#allocation9] sm:$0xff]
    %v127 = vld [vmem:[#allocation9 + $0x8] sm:$0xff]
    %v128 = vld [vmem:[#allocation9 + $0x10] sm:$0xff]
    %v129 = vld [vmem:[#allocation9 + $0x18] sm:$0xff]
    %v130 = vld [vmem:[#allocation9 + $0x20] sm:$0xff]
    %v131 = vld [vmem:[#allocation9 + $0x28] sm:$0xff]
    %v132 = vld [vmem:[#allocation9 + $0x30] sm:$0xff]
    %v133 = vld [vmem:[#allocation9 + $0x38] sm:$0xff]
    %v134 = vld [vmem:[#allocation9 + $0x40] sm:$0xff]
    %v135 = vld [vmem:[#allocation9 + $0x48] sm:$0xff]
    %v136 = vld [vmem:[#allocation9 + $0x50] sm:$0xff]
    %v137 = vld [vmem:[#allocation9 + $0x58] sm:$0xff]
    %v138 = vld [vmem:[#allocation9 + $0x60] sm:$0xff]
    %v139 = vld [vmem:[#allocation9 + $0x68] sm:$0xff]
    %v140 = vld [vmem:[#allocation9 + $0x70] sm:$0xff]
    %v141 = vld [vmem:[#allocation9 + $0x78] sm:$0xff]
    %v142 = vld [vmem:[#allocation9 + $0x80] sm:$0xff]
    %v143 = vld [vmem:[#allocation9 + $0x88] sm:$0xff]
    %v144 = vld [vmem:[#allocation9 + $0x90] sm:$0xff]
    %v145 = vld [vmem:[#allocation9 + $0x98] sm:$0xff]
    %v146 = vld [vmem:[#allocation9 + $0xa0] sm:$0xff]
    %v147 = vld [vmem:[#allocation9 + $0xa8] sm:$0xff]
    %v148 = vld [vmem:[#allocation9 + $0xb0] sm:$0xff]
    %v149 = vld [vmem:[#allocation9 + $0xb8] sm:$0xff]
    %v150 = vld [vmem:[#allocation9 + $0xc0] sm:$0xff]
    %v151 = vld [vmem:[#allocation9 + $0xc8] sm:$0xff]
    %v152 = vld [vmem:[#allocation9 + $0xd0] sm:$0xff]
    %v153 = vld [vmem:[#allocation9 + $0xd8] sm:$0xff]
    %v154 = vld [vmem:[#allocation9 + $0xe0] sm:$0xff]
    %v155 = vld [vmem:[#allocation9 + $0xe8] sm:$0xff]
    %v156 = vld [vmem:[#allocation9 + $0xf0] sm:$0xff]
    %v157 = vld [vmem:[#allocation9 + $0xf8] sm:$0xff]
    %v158 = vld [vmem:[#allocation9 + $0x100] sm:$0xff]
    %v159 = vld [vmem:[#allocation9 + $0x108] sm:$0xff]
    %v160 = vld [vmem:[#allocation9 + $0x110] sm:$0xff]
    %v161 = vld [vmem:[#allocation9 + $0x118] sm:$0xff]
    %v162 = vld [vmem:[#allocation9 + $0x120] sm:$0xff]
    %v163 = vld [vmem:[#allocation9 + $0x128] sm:$0xff]
    %v164 = vld [vmem:[#allocation9 + $0x130] sm:$0xff]
    %v165 = vld [vmem:[#allocation9 + $0x138] sm:$0xff]
    %v166 = vld [vmem:[#allocation9 + $0x140] sm:$0xff]
    %v167 = vld [vmem:[#allocation9 + $0x148] sm:$0xff]
    %v168 = vld [vmem:[#allocation9 + $0x150] sm:$0xff]
    %v169 = vld [vmem:[#allocation9 + $0x158] sm:$0xff]
    %v170 = vld [vmem:[#allocation9 + $0x160] sm:$0xff]
    %v171 = vld [vmem:[#allocation9 + $0x168] sm:$0xff]
    %v172 = vld [vmem:[#allocation9 + $0x170] sm:$0xff]
    %v173 = vld [vmem:[#allocation9 + $0x178] sm:$0xff]
    %v174 = vld [vmem:[%s4] sm:$0x7]
    %v176 = vlaneseq
    %v177 = vshrl.u32 %v176, 7
    %v178 = vsub.s32 0, %v177
    %v179 = vrot.slane %v174, %v178
    %v180 = vlaneseq
    %v181 = vshrl.u32 %v180, 7
    %v182 = vsub.s32 1, %v181
    %v183 = vrot.slane %v174, %v182
    %v184 = vlaneseq
    %v185 = vshrl.u32 %v184, 7
    %v186 = vsub.s32 2, %v185
    %v187 = vrot.slane %v174, %v186
    %191 = vmatprep.subr.mxu0 %v172
    %192 = vmatpush1.msra.mxu0 %v171
    %193 = vmatprep.subr.mxu0 %v169
    %194 = vmatpush1.msra.mxu0 %v168
    %195 = vmatprep.subr.mxu0 %v166
    %196 = vmatpush1.msra.mxu0 %v165
    %197 = vmatprep.subr.mxu0 %v163
    %198 = vmatpush1.msra.mxu0 %v162
    %199 = vmatprep.subr.mxu0 %v160
    %200 = vmatpush1.msra.mxu0 %v159
    %201 = vmatprep.subr.mxu0 %v157
    %202 = vmatpush1.msra.mxu0 %v156
    %203 = vmatprep.subr.mxu0 %v154
    %204 = vmatpush1.msra.mxu0 %v153
    %205 = vmatprep.subr.mxu0 %v151
    %206 = vmatpush1.msra.mxu0 %v150
    %207 = vmatprep.subr.mxu0 %v148
    %208 = vmatpush1.msra.mxu0 %v147
    %209 = vmatprep.subr.mxu0 %v145
    %210 = vmatpush1.msra.mxu0 %v144
    %211 = vmatprep.subr.mxu0 %v142
    %212 = vmatpush1.msra.mxu0 %v141
    %213 = vmatprep.subr.mxu0 %v139
    %214 = vmatpush1.msra.mxu0 %v138
    %215 = vmatprep.subr.mxu0 %v136
    %216 = vmatpush1.msra.mxu0 %v135
    %217 = vmatprep.subr.mxu0 %v133
    %218 = vmatpush1.msra.mxu0 %v132
    %219 = vmatprep.subr.mxu0 %v130
    %220 = vmatpush1.msra.mxu0 %v129
    %221 = vmatprep.subr.mxu0 %v127
    %222 = vmatpush1.msra.mxu0 %v126
    %223 = vmatprep.subr.mxu0 0.0
    %224 = vmatpush2.msra.mxu0 0.0
    %225 = vmatprep.subr.mxu0 0.0
    %226 = vmatpush2.msra.mxu0 0.0
    %227 = vmatprep.subr.mxu0 0.0
    %228 = vmatpush2.msra.mxu0 0.0
    %229 = vmatprep.subr.mxu0 0.0
    %230 = vmatpush2.msra.mxu0 0.0
    %231 = vmatprep.subr.mxu0 0.0
    %232 = vmatpush2.msra.mxu0 0.0
    %233 = vmatprep.subr.mxu0 0.0
    %234 = vmatpush2.msra.mxu0 0.0
    %235 = vmatprep.subr.mxu0 0.0
    %236 = vmatpush2.msra.mxu0 0.0
    %237 = vmatprep.subr.mxu0 0.0
    %238 = vmatpush2.msra.mxu0 0.0
    %239 = vmatprep.subr.mxu0 0.0
    %240 = vmatpush2.msra.mxu0 0.0
    %241 = vmatprep.subr.mxu0 0.0
    %242 = vmatpush2.msra.mxu0 0.0
    %243 = vmatprep.subr.mxu0 0.0
    %244 = vmatpush2.msra.mxu0 0.0
    %245 = vmatprep.subr.mxu0 0.0
    %246 = vmatpush2.msra.mxu0 0.0
    %247 = vmatprep.subr.mxu0 0.0
    %248 = vmatpush2.msra.mxu0 0.0
    %249 = vmatprep.subr.mxu0 0.0
    %250 = vmatpush2.msra.mxu0 0.0
    %251 = vmatprep.subr.mxu0 0.0
    %252 = vmatpush2.msra.mxu0 0.0
    %253 = vmatprep.subr.mxu0 0.0
    %254 = vmatpush2.msra.mxu0 0.0
    %255 = vmatprep.mubr.f32.mxu0 0.0
    %256 = vmatmul.mubr.f32.gmra.mxu0 %v118
    %v257 = vpop.f32.mrf.mxu0
    %v258 = vadd.f32 %v179, %v257
    %v259 = vpop.f32.mrf.mxu0
    %v260 = vadd.f32 %v183, %v259
    %261 = vmatprep.mubr.f32.mxu0 0.0
    %262 = vmatmul.mubr.f32.gmra.mxu0 %v119
    %v263 = vpop.f32.mrf.mxu0
    %v264 = vadd.f32 %v179, %v263
    %v265 = vpop.f32.mrf.mxu0
    %v266 = vadd.f32 %v183, %v265
    %267 = vmatprep.mubr.f32.mxu0 0.0
    %268 = vmatmul.mubr.f32.gmra.mxu0 %v120
    %v269 = vpop.f32.mrf.mxu0
    %v270 = vadd.f32 %v179, %v269
    %v271 = vpop.f32.mrf.mxu0
    %v272 = vadd.f32 %v183, %v271
    %273 = vmatprep.mubr.f32.mxu0 0.0
    %274 = vmatmul.mubr.f32.gmra.mxu0 %v121
    %v275 = vpop.f32.mrf.mxu0
    %v276 = vadd.f32 %v179, %v275
    %v277 = vpop.f32.mrf.mxu0
    %v278 = vadd.f32 %v183, %v277
    %279 = vmatprep.mubr.f32.mxu0 0.0
    %280 = vmatmul.mubr.f32.gmra.mxu0 %v122
    %v281 = vpop.f32.mrf.mxu0
    %v282 = vadd.f32 %v179, %v281
    %v283 = vpop.f32.mrf.mxu0
    %v284 = vadd.f32 %v183, %v283
    %285 = vmatprep.mubr.f32.mxu0 0.0
    %286 = vmatmul.mubr.f32.gmra.mxu0 %v123
    %v287 = vpop.f32.mrf.mxu0
    %v288 = vadd.f32 %v179, %v287
    %v289 = vpop.f32.mrf.mxu0
    %v290 = vadd.f32 %v183, %v289
    %291 = vmatprep.mubr.f32.mxu0 0.0
    %292 = vmatmul.mubr.f32.gmra.mxu0 %v124
    %v293 = vpop.f32.mrf.mxu0
    %v294 = vadd.f32 %v179, %v293
    %v295 = vpop.f32.mrf.mxu0
    %v296 = vadd.f32 %v183, %v295
    %297 = vmatprep.mubr.f32.mxu0 0.0
    %298 = vmatmul.mubr.f32.gmra.mxu0 %v125
    %v299 = vpop.f32.mrf.mxu0
    %v300 = vadd.f32 %v179, %v299
    %v301 = vpop.f32.mrf.mxu0
    %v302 = vadd.f32 %v183, %v301
    %303 = vdwg.mxu0
    %304 = vmatprep.subr.mxu0 0.0
    %305 = vmatpush1.msra.mxu0 %v173
    %306 = vmatprep.subr.mxu0 0.0
    %307 = vmatpush1.msra.mxu0 %v170
    %308 = vmatprep.subr.mxu0 0.0
    %309 = vmatpush1.msra.mxu0 %v167
    %310 = vmatprep.subr.mxu0 0.0
    %311 = vmatpush1.msra.mxu0 %v164
    %312 = vmatprep.subr.mxu0 0.0
    %313 = vmatpush1.msra.mxu0 %v161
    %314 = vmatprep.subr.mxu0 0.0
    %315 = vmatpush1.msra.mxu0 %v158
    %316 = vmatprep.subr.mxu0 0.0
    %317 = vmatpush1.msra.mxu0 %v155
    %318 = vmatprep.subr.mxu0 0.0
    %319 = vmatpush1.msra.mxu0 %v152
    %320 = vmatprep.subr.mxu0 0.0
    %321 = vmatpush1.msra.mxu0 %v149
    %322 = vmatprep.subr.mxu0 0.0
    %323 = vmatpush1.msra.mxu0 %v146
    %324 = vmatprep.subr.mxu0 0.0
    %325 = vmatpush1.msra.mxu0 %v143
    %326 = vmatprep.subr.mxu0 0.0
    %327 = vmatpush1.msra.mxu0 %v140
    %328 = vmatprep.subr.mxu0 0.0
    %329 = vmatpush1.msra.mxu0 %v137
    %330 = vmatprep.subr.mxu0 0.0
    %331 = vmatpush1.msra.mxu0 %v134
    %332 = vmatprep.subr.mxu0 0.0
    %333 = vmatpush1.msra.mxu0 %v131
    %334 = vmatprep.subr.mxu0 0.0
    %335 = vmatpush1.msra.mxu0 %v128
    %336 = vmatprep.subr.mxu0 0.0
    %337 = vmatpush2.msra.mxu0 0.0
    %338 = vmatprep.subr.mxu0 0.0
    %339 = vmatpush2.msra.mxu0 0.0
    %340 = vmatprep.subr.mxu0 0.0
    %341 = vmatpush2.msra.mxu0 0.0
    %342 = vmatprep.subr.mxu0 0.0
    %343 = vmatpush2.msra.mxu0 0.0
    %344 = vmatprep.subr.mxu0 0.0
    %345 = vmatpush2.msra.mxu0 0.0
    %346 = vmatprep.subr.mxu0 0.0
    %347 = vmatpush2.msra.mxu0 0.0
    %348 = vmatprep.subr.mxu0 0.0
    %349 = vmatpush2.msra.mxu0 0.0
    %350 = vmatprep.subr.mxu0 0.0
    %351 = vmatpush2.msra.mxu0 0.0
    %352 = vmatprep.subr.mxu0 0.0
    %353 = vmatpush2.msra.mxu0 0.0
    %354 = vmatprep.subr.mxu0 0.0
    %355 = vmatpush2.msra.mxu0 0.0
    %356 = vmatprep.subr.mxu0 0.0
    %357 = vmatpush2.msra.mxu0 0.0
    %358 = vmatprep.subr.mxu0 0.0
    %359 = vmatpush2.msra.mxu0 0.0
    %360 = vmatprep.subr.mxu0 0.0
    %361 = vmatpush2.msra.mxu0 0.0
    %362 = vmatprep.subr.mxu0 0.0
    %363 = vmatpush2.msra.mxu0 0.0
    %364 = vmatprep.subr.mxu0 0.0
    %365 = vmatpush2.msra.mxu0 0.0
    %366 = vmatprep.subr.mxu0 0.0
    %367 = vmatpush2.msra.mxu0 0.0
    %368 = vmatprep.mubr.f32.mxu0 0.0
    %369 = vmatmul.mubr.f32.gmra.mxu0 %v118
    %v370 = vpop.f32.mrf.mxu0
    %v371 = vadd.f32 %v187, %v370
    %v372 = vpop.f32.mrf.mxu0
    %373 = vmatprep.mubr.f32.mxu0 0.0
    %374 = vmatmul.mubr.f32.gmra.mxu0 %v119
    %v375 = vpop.f32.mrf.mxu0
    %v376 = vadd.f32 %v187, %v375
    %v377 = vpop.f32.mrf.mxu0
    %378 = vmatprep.mubr.f32.mxu0 0.0
    %379 = vmatmul.mubr.f32.gmra.mxu0 %v120
    %v380 = vpop.f32.mrf.mxu0
    %v381 = vadd.f32 %v187, %v380
    %v382 = vpop.f32.mrf.mxu0
    %383 = vmatprep.mubr.f32.mxu0 0.0
    %384 = vmatmul.mubr.f32.gmra.mxu0 %v121
    %v385 = vpop.f32.mrf.mxu0
    %v386 = vadd.f32 %v187, %v385
    %v387 = vpop.f32.mrf.mxu0
    %388 = vmatprep.mubr.f32.mxu0 0.0
    %389 = vmatmul.mubr.f32.gmra.mxu0 %v122
    %v390 = vpop.f32.mrf.mxu0
    %v391 = vadd.f32 %v187, %v390
    %v392 = vpop.f32.mrf.mxu0
    %393 = vmatprep.mubr.f32.mxu0 0.0
    %394 = vmatmul.mubr.f32.gmra.mxu0 %v123
    %v395 = vpop.f32.mrf.mxu0
    %v396 = vadd.f32 %v187, %v395
    %v397 = vpop.f32.mrf.mxu0
    %398 = vmatprep.mubr.f32.mxu0 0.0
    %399 = vmatmul.mubr.f32.gmra.mxu0 %v124
    %v400 = vpop.f32.mrf.mxu0
    %v401 = vadd.f32 %v187, %v400
    %v402 = vpop.f32.mrf.mxu0
    %403 = vmatprep.mubr.f32.mxu0 0.0
    %404 = vmatmul.mubr.f32.gmra.mxu0 %v125
    %v405 = vpop.f32.mrf.mxu0
    %v406 = vadd.f32 %v187, %v405
    %v407 = vpop.f32.mrf.mxu0
    %408 = vdwg.mxu0
    %409 = vst [vmem:[#allocation3] sm:$0xff] %v258
    %410 = vst [vmem:[#allocation3 + $0x8] sm:$0xff] %v260
    %411 = vst [vmem:[#allocation3 + $0x10] sm:$0xff] %v371
    %412 = vst [vmem:[#allocation3 + $0x18] sm:$0xff] %v264
    %413 = vst [vmem:[#allocation3 + $0x20] sm:$0xff] %v266
    %414 = vst [vmem:[#allocation3 + $0x28] sm:$0xff] %v376
    %415 = vst [vmem:[#allocation3 + $0x30] sm:$0xff] %v270
    %416 = vst [vmem:[#allocation3 + $0x38] sm:$0xff] %v272
    %417 = vst [vmem:[#allocation3 + $0x40] sm:$0xff] %v381
    %418 = vst [vmem:[#allocation3 + $0x48] sm:$0xff] %v276
    %419 = vst [vmem:[#allocation3 + $0x50] sm:$0xff] %v278
    %420 = vst [vmem:[#allocation3 + $0x58] sm:$0xff] %v386
    %421 = vst [vmem:[#allocation3 + $0x60] sm:$0xff] %v282
    %422 = vst [vmem:[#allocation3 + $0x68] sm:$0xff] %v284
    %423 = vst [vmem:[#allocation3 + $0x70] sm:$0xff] %v391
    %424 = vst [vmem:[#allocation3 + $0x78] sm:$0xff] %v288
    %425 = vst [vmem:[#allocation3 + $0x80] sm:$0xff] %v290
    %426 = vst [vmem:[#allocation3 + $0x88] sm:$0xff] %v396
    %427 = vst [vmem:[#allocation3 + $0x90] sm:$0xff] %v294
    %428 = vst [vmem:[#allocation3 + $0x98] sm:$0xff] %v296
    %429 = vst [vmem:[#allocation3 + $0xa0] sm:$0xff] %v401
    %430 = vst [vmem:[#allocation3 + $0xa8] sm:$0xff] %v300
    %431 = vst [vmem:[#allocation3 + $0xb0] sm:$0xff] %v302
    %432 = vst [vmem:[#allocation3 + $0xb8] sm:$0xff] %v406
    %v433 = vld [vmem:[#allocation10] sm:$0xff]
    %v434 = vld [vmem:[#allocation10 + $0x8] sm:$0xff]
    %v435 = vld [vmem:[#allocation10 + $0x10] sm:$0xff]
    %v436 = vld [vmem:[#allocation10 + $0x18] sm:$0xff]
    %v437 = vld [vmem:[#allocation10 + $0x20] sm:$0xff]
    %v438 = vld [vmem:[#allocation10 + $0x28] sm:$0xff]
    %v439 = vld [vmem:[#allocation10 + $0x30] sm:$0xff]
    %v440 = vld [vmem:[#allocation10 + $0x38] sm:$0xff]
    %v441 = vld [vmem:[#allocation10 + $0x40] sm:$0xff]
    %v442 = vld [vmem:[#allocation10 + $0x48] sm:$0xff]
    %v443 = vld [vmem:[#allocation10 + $0x50] sm:$0xff]
    %v444 = vld [vmem:[#allocation10 + $0x58] sm:$0xff]
    %v445 = vld [vmem:[#allocation10 + $0x60] sm:$0xff]
    %v446 = vld [vmem:[#allocation10 + $0x68] sm:$0xff]
    %v447 = vld [vmem:[#allocation10 + $0x70] sm:$0xff]
    %v448 = vld [vmem:[#allocation10 + $0x78] sm:$0xff]
    %v449 = vld [vmem:[#allocation10 + $0x80] sm:$0xff]
    %v450 = vld [vmem:[#allocation10 + $0x88] sm:$0xff]
    %v451 = vld [vmem:[#allocation10 + $0x90] sm:$0xff]
    %v452 = vld [vmem:[#allocation10 + $0x98] sm:$0xff]
    %v453 = vld [vmem:[#allocation10 + $0xa0] sm:$0xff]
    %v454 = vld [vmem:[#allocation10 + $0xa8] sm:$0xff]
    %v455 = vld [vmem:[#allocation10 + $0xb0] sm:$0xff]
    %v456 = vld [vmem:[#allocation10 + $0xb8] sm:$0xff]
    %v457 = vld [vmem:[#allocation10 + $0xc0] sm:$0xff]
    %v458 = vld [vmem:[#allocation10 + $0xc8] sm:$0xff]
    %v459 = vld [vmem:[#allocation10 + $0xd0] sm:$0xff]
    %v460 = vld [vmem:[#allocation10 + $0xd8] sm:$0xff]
    %v461 = vld [vmem:[#allocation10 + $0xe0] sm:$0xff]
    %v462 = vld [vmem:[#allocation10 + $0xe8] sm:$0xff]
    %v463 = vld [vmem:[#allocation10 + $0xf0] sm:$0xff]
    %v464 = vld [vmem:[#allocation10 + $0xf8] sm:$0xff]
    %v465 = vld [vmem:[#allocation10 + $0x100] sm:$0xff]
    %v466 = vld [vmem:[#allocation10 + $0x108] sm:$0xff]
    %v467 = vld [vmem:[#allocation10 + $0x110] sm:$0xff]
    %v468 = vld [vmem:[#allocation10 + $0x118] sm:$0xff]
    %v469 = vld [vmem:[#allocation10 + $0x120] sm:$0xff]
    %v470 = vld [vmem:[#allocation10 + $0x128] sm:$0xff]
    %v471 = vld [vmem:[#allocation10 + $0x130] sm:$0xff]
    %v472 = vld [vmem:[#allocation10 + $0x138] sm:$0xff]
    %v473 = vld [vmem:[#allocation10 + $0x140] sm:$0xff]
    %v474 = vld [vmem:[#allocation10 + $0x148] sm:$0xff]
    %v475 = vld [vmem:[#allocation10 + $0x150] sm:$0xff]
    %v476 = vld [vmem:[#allocation10 + $0x158] sm:$0xff]
    %v477 = vld [vmem:[#allocation10 + $0x160] sm:$0xff]
    %v478 = vld [vmem:[#allocation10 + $0x168] sm:$0xff]
    %v479 = vld [vmem:[#allocation10 + $0x170] sm:$0xff]
    %v480 = vld [vmem:[#allocation10 + $0x178] sm:$0xff]
    %v481 = vld [vmem:[%s5] sm:$0x1]
    %v482 = vld [vmem:[#allocation7] sm:$0xff]
    %v483 = vld [vmem:[#allocation3] sm:$0xff]
    %v484 = vld [vmem:[#allocation3 + $0x8] sm:$0xff]
    %v485 = vld [vmem:[#allocation3 + $0x10] sm:$0xff]
    %486 = vmatprep.subr.mxu0 %v479
    %487 = vmatpush1.msra.mxu0 %v478
    %488 = vmatprep.subr.mxu0 %v476
    %489 = vmatpush1.msra.mxu0 %v475
    %490 = vmatprep.subr.mxu0 %v473
    %491 = vmatpush1.msra.mxu0 %v472
    %492 = vmatprep.subr.mxu0 %v470
    %493 = vmatpush1.msra.mxu0 %v469
    %494 = vmatprep.subr.mxu0 %v467
    %495 = vmatpush1.msra.mxu0 %v466
    %496 = vmatprep.subr.mxu0 %v464
    %497 = vmatpush1.msra.mxu0 %v463
    %498 = vmatprep.subr.mxu0 %v461
    %499 = vmatpush1.msra.mxu0 %v460
    %500 = vmatprep.subr.mxu0 %v458
    %501 = vmatpush1.msra.mxu0 %v457
    %502 = vmatprep.subr.mxu0 %v455
    %503 = vmatpush1.msra.mxu0 %v454
    %504 = vmatprep.subr.mxu0 %v452
    %505 = vmatpush1.msra.mxu0 %v451
    %506 = vmatprep.subr.mxu0 %v449
    %507 = vmatpush1.msra.mxu0 %v448
    %508 = vmatprep.subr.mxu0 %v446
    %509 = vmatpush1.msra.mxu0 %v445
    %510 = vmatprep.subr.mxu0 %v443
    %511 = vmatpush1.msra.mxu0 %v442
    %512 = vmatprep.subr.mxu0 %v440
    %513 = vmatpush1.msra.mxu0 %v439
    %514 = vmatprep.subr.mxu0 %v437
    %515 = vmatpush1.msra.mxu0 %v436
    %516 = vmatprep.subr.mxu0 %v434
    %517 = vmatpush1.msra.mxu0 %v433
    %518 = vmatprep.subr.mxu0 0.0
    %519 = vmatpush2.msra.mxu0 0.0
    %520 = vmatprep.subr.mxu0 0.0
    %521 = vmatpush2.msra.mxu0 0.0
    %522 = vmatprep.subr.mxu0 0.0
    %523 = vmatpush2.msra.mxu0 0.0
    %524 = vmatprep.subr.mxu0 0.0
    %525 = vmatpush2.msra.mxu0 0.0
    %526 = vmatprep.subr.mxu0 0.0
    %527 = vmatpush2.msra.mxu0 0.0
    %528 = vmatprep.subr.mxu0 0.0
    %529 = vmatpush2.msra.mxu0 0.0
    %530 = vmatprep.subr.mxu0 0.0
    %531 = vmatpush2.msra.mxu0 0.0
    %532 = vmatprep.subr.mxu0 0.0
    %533 = vmatpush2.msra.mxu0 0.0
    %534 = vmatprep.subr.mxu0 0.0
    %535 = vmatpush2.msra.mxu0 0.0
    %536 = vmatprep.subr.mxu0 0.0
    %537 = vmatpush2.msra.mxu0 0.0
    %538 = vmatprep.subr.mxu0 0.0
    %539 = vmatpush2.msra.mxu0 0.0
    %540 = vmatprep.subr.mxu0 0.0
    %541 = vmatpush2.msra.mxu0 0.0
    %542 = vmatprep.subr.mxu0 0.0
    %543 = vmatpush2.msra.mxu0 0.0
    %544 = vmatprep.subr.mxu0 0.0
    %545 = vmatpush2.msra.mxu0 0.0
    %546 = vmatprep.subr.mxu0 0.0
    %547 = vmatpush2.msra.mxu0 0.0
    %548 = vmatprep.subr.mxu0 0.0
    %549 = vmatpush2.msra.mxu0 0.0
    %550 = vmatprep.mubr.f32.mxu0 0.0
    %551 = vmatmul.mubr.f32.gmra.mxu0 %v482
    %v552 = vpop.f32.mrf.mxu0
    %v553 = vadd.f32 0.0, %v552
    %v554 = vpop.f32.mrf.mxu0
    %v555 = vadd.f32 0.0, %v554
    %556 = vdwg.mxu0
    %557 = vmatprep.subr.mxu0 0.0
    %558 = vmatpush1.msra.mxu0 %v480
    %559 = vmatprep.subr.mxu0 0.0
    %560 = vmatpush1.msra.mxu0 %v477
    %561 = vmatprep.subr.mxu0 0.0
    %562 = vmatpush1.msra.mxu0 %v474
    %563 = vmatprep.subr.mxu0 0.0
    %564 = vmatpush1.msra.mxu0 %v471
    %565 = vmatprep.subr.mxu0 0.0
    %566 = vmatpush1.msra.mxu0 %v468
    %567 = vmatprep.subr.mxu0 0.0
    %568 = vmatpush1.msra.mxu0 %v465
    %569 = vmatprep.subr.mxu0 0.0
    %570 = vmatpush1.msra.mxu0 %v462
    %571 = vmatprep.subr.mxu0 0.0
    %572 = vmatpush1.msra.mxu0 %v459
    %573 = vmatprep.subr.mxu0 0.0
    %574 = vmatpush1.msra.mxu0 %v456
    %575 = vmatprep.subr.mxu0 0.0
    %576 = vmatpush1.msra.mxu0 %v453
    %577 = vmatprep.subr.mxu0 0.0
    %578 = vmatpush1.msra.mxu0 %v450
    %579 = vmatprep.subr.mxu0 0.0
    %580 = vmatpush1.msra.mxu0 %v447
    %581 = vmatprep.subr.mxu0 0.0
    %582 = vmatpush1.msra.mxu0 %v444
    %583 = vmatprep.subr.mxu0 0.0
    %584 = vmatpush1.msra.mxu0 %v441
    %585 = vmatprep.subr.mxu0 0.0
    %586 = vmatpush1.msra.mxu0 %v438
    %587 = vmatprep.subr.mxu0 0.0
    %588 = vmatpush1.msra.mxu0 %v435
    %589 = vmatprep.subr.mxu0 0.0
    %590 = vmatpush2.msra.mxu0 0.0
    %591 = vmatprep.subr.mxu0 0.0
    %592 = vmatpush2.msra.mxu0 0.0
    %593 = vmatprep.subr.mxu0 0.0
    %594 = vmatpush2.msra.mxu0 0.0
    %595 = vmatprep.subr.mxu0 0.0
    %596 = vmatpush2.msra.mxu0 0.0
    %597 = vmatprep.subr.mxu0 0.0
    %598 = vmatpush2.msra.mxu0 0.0
    %599 = vmatprep.subr.mxu0 0.0
    %600 = vmatpush2.msra.mxu0 0.0
    %601 = vmatprep.subr.mxu0 0.0
    %602 = vmatpush2.msra.mxu0 0.0
    %603 = vmatprep.subr.mxu0 0.0
    %604 = vmatpush2.msra.mxu0 0.0
    %605 = vmatprep.subr.mxu0 0.0
    %606 = vmatpush2.msra.mxu0 0.0
    %607 = vmatprep.subr.mxu0 0.0
    %608 = vmatpush2.msra.mxu0 0.0
    %609 = vmatprep.subr.mxu0 0.0
    %610 = vmatpush2.msra.mxu0 0.0
    %611 = vmatprep.subr.mxu0 0.0
    %612 = vmatpush2.msra.mxu0 0.0
    %613 = vmatprep.subr.mxu0 0.0
    %614 = vmatpush2.msra.mxu0 0.0
    %615 = vmatprep.subr.mxu0 0.0
    %616 = vmatpush2.msra.mxu0 0.0
    %617 = vmatprep.subr.mxu0 0.0
    %618 = vmatpush2.msra.mxu0 0.0
    %619 = vmatprep.subr.mxu0 0.0
    %620 = vmatpush2.msra.mxu0 0.0
    %621 = vmatprep.mubr.f32.mxu0 0.0
    %622 = vmatmul.mubr.f32.gmra.mxu0 %v482
    %v623 = vpop.f32.mrf.mxu0
    %v624 = vadd.f32 0.0, %v623
    %v625 = vpop.f32.mrf.mxu0
    %626 = vdwg.mxu0
    %v627 = vadd.f32 %v483, %v553
    %v628 = vxor.u32 %v627, 2147483648
    %v629 = vmul.f32 %v628, 1.442695
    %v630 = vpow.pop %v629
    %v631 = vadd.f32 %v630, 1.0
    %v632 = vrcp.pop %v631
    %v633 = vmul.f32 1.0, %v632
    %v634 = vadd.f32 %v484, %v555
    %v635 = vxor.u32 %v634, 2147483648
    %v636 = vmul.f32 %v635, 1.442695
    %v637 = vpow.pop %v636
    %v638 = vadd.f32 %v637, 1.0
    %v639 = vrcp.pop %v638
    %v640 = vmul.f32 1.0, %v639
    %v642 = vlaneseq
    %v643 = vshrl.u32 %v642, 7
    %v644 = vsub.s32 0, %v643
    %v645 = vrot.slane %v481, %v644
    %v647 = vadd.f32 %v624, %v645
    %v648 = vmul.f32 %v633, %v647
    %v649 = vadd.f32 %v485, %v648
    %v650 = vtanh.pop %v649
    %v651 = vsub.f32 1.0, %v640
    %v652 = vmul.f32 %v651, %v650
    %v653 = vmul.f32 %v640, %v482
    %v654 = vadd.f32 %v652, %v653
    %655 = vst [vmem:[#allocation2] sm:$0xff] %v654
    %s656 = scalar_lea.vmem [#allocation3], 24
    %v657 = vld [vmem:[%s656] sm:$0xff]
    %v658 = vld [vmem:[%s656 + $0x8] sm:$0xff]
    %v659 = vld [vmem:[%s656 + $0x10] sm:$0xff]
    %660 = vmatprep.subr.mxu0 %v479
    %661 = vmatpush1.msra.mxu0 %v478
    %662 = vmatprep.subr.mxu0 %v476
    %663 = vmatpush1.msra.mxu0 %v475
    %664 = vmatprep.subr.mxu0 %v473
    %665 = vmatpush1.msra.mxu0 %v472
    %666 = vmatprep.subr.mxu0 %v470
    %667 = vmatpush1.msra.mxu0 %v469
    %668 = vmatprep.subr.mxu0 %v467
    %669 = vmatpush1.msra.mxu0 %v466
    %670 = vmatprep.subr.mxu0 %v464
    %671 = vmatpush1.msra.mxu0 %v463
    %672 = vmatprep.subr.mxu0 %v461
    %673 = vmatpush1.msra.mxu0 %v460
    %674 = vmatprep.subr.mxu0 %v458
    %675 = vmatpush1.msra.mxu0 %v457
    %676 = vmatprep.subr.mxu0 %v455
    %677 = vmatpush1.msra.mxu0 %v454
    %678 = vmatprep.subr.mxu0 %v452
    %679 = vmatpush1.msra.mxu0 %v451
    %680 = vmatprep.subr.mxu0 %v449
    %681 = vmatpush1.msra.mxu0 %v448
    %682 = vmatprep.subr.mxu0 %v446
    %683 = vmatpush1.msra.mxu0 %v445
    %684 = vmatprep.subr.mxu0 %v443
    %685 = vmatpush1.msra.mxu0 %v442
    %686 = vmatprep.subr.mxu0 %v440
    %687 = vmatpush1.msra.mxu0 %v439
    %688 = vmatprep.subr.mxu0 %v437
    %689 = vmatpush1.msra.mxu0 %v436
    %690 = vmatprep.subr.mxu0 %v434
    %691 = vmatpush1.msra.mxu0 %v433
    %692 = vmatprep.subr.mxu0 0.0
    %693 = vmatpush2.msra.mxu0 0.0
    %694 = vmatprep.subr.mxu0 0.0
    %695 = vmatpush2.msra.mxu0 0.0
    %696 = vmatprep.subr.mxu0 0.0
    %697 = vmatpush2.msra.mxu0 0.0
    %698 = vmatprep.subr.mxu0 0.0
    %699 = vmatpush2.msra.mxu0 0.0
    %700 = vmatprep.subr.mxu0 0.0
    %701 = vmatpush2.msra.mxu0 0.0
    %702 = vmatprep.subr.mxu0 0.0
    %703 = vmatpush2.msra.mxu0 0.0
    %704 = vmatprep.subr.mxu0 0.0
    %705 = vmatpush2.msra.mxu0 0.0
    %706 = vmatprep.subr.mxu0 0.0
    %707 = vmatpush2.msra.mxu0 0.0
    %708 = vmatprep.subr.mxu0 0.0
    %709 = vmatpush2.msra.mxu0 0.0
    %710 = vmatprep.subr.mxu0 0.0
    %711 = vmatpush2.msra.mxu0 0.0
    %712 = vmatprep.subr.mxu0 0.0
    %713 = vmatpush2.msra.mxu0 0.0
    %714 = vmatprep.subr.mxu0 0.0
    %715 = vmatpush2.msra.mxu0 0.0
    %716 = vmatprep.subr.mxu0 0.0
    %717 = vmatpush2.msra.mxu0 0.0
    %718 = vmatprep.subr.mxu0 0.0
    %719 = vmatpush2.msra.mxu0 0.0
    %720 = vmatprep.subr.mxu0 0.0
    %721 = vmatpush2.msra.mxu0 0.0
    %722 = vmatprep.subr.mxu0 0.0
    %723 = vmatpush2.msra.mxu0 0.0
    %724 = vmatprep.mubr.f32.mxu0 0.0
    %725 = vmatmul.mubr.f32.gmra.mxu0 %v654
    %v726 = vpop.f32.mrf.mxu0
    %v727 = vadd.f32 0.0, %v726
    %v728 = vpop.f32.mrf.mxu0
    %v729 = vadd.f32 0.0, %v728
    %730 = vdwg.mxu0
    %731 = vmatprep.subr.mxu0 0.0
    %732 = vmatpush1.msra.mxu0 %v480
    %733 = vmatprep.subr.mxu0 0.0
    %734 = vmatpush1.msra.mxu0 %v477
    %735 = vmatprep.subr.mxu0 0.0
    %736 = vmatpush1.msra.mxu0 %v474
    %737 = vmatprep.subr.mxu0 0.0
    %738 = vmatpush1.msra.mxu0 %v471
    %739 = vmatprep.subr.mxu0 0.0
    %740 = vmatpush1.msra.mxu0 %v468
    %741 = vmatprep.subr.mxu0 0.0
    %742 = vmatpush1.msra.mxu0 %v465
    %743 = vmatprep.subr.mxu0 0.0
    %744 = vmatpush1.msra.mxu0 %v462
    %745 = vmatprep.subr.mxu0 0.0
    %746 = vmatpush1.msra.mxu0 %v459
    %747 = vmatprep.subr.mxu0 0.0
    %748 = vmatpush1.msra.mxu0 %v456
    %749 = vmatprep.subr.mxu0 0.0
    %750 = vmatpush1.msra.mxu0 %v453
    %751 = vmatprep.subr.mxu0 0.0
    %752 = vmatpush1.msra.mxu0 %v450
    %753 = vmatprep.subr.mxu0 0.0
    %754 = vmatpush1.msra.mxu0 %v447
    %755 = vmatprep.subr.mxu0 0.0
    %756 = vmatpush1.msra.mxu0 %v444
    %757 = vmatprep.subr.mxu0 0.0
    %758 = vmatpush1.msra.mxu0 %v441
    %759 = vmatprep.subr.mxu0 0.0
    %760 = vmatpush1.msra.mxu0 %v438
    %761 = vmatprep.subr.mxu0 0.0
    %762 = vmatpush1.msra.mxu0 %v435
    %763 = vmatprep.subr.mxu0 0.0
    %764 = vmatpush2.msra.mxu0 0.0
    %765 = vmatprep.subr.mxu0 0.0
    %766 = vmatpush2.msra.mxu0 0.0
    %767 = vmatprep.subr.mxu0 0.0
    %768 = vmatpush2.msra.mxu0 0.0
    %769 = vmatprep.subr.mxu0 0.0
    %770 = vmatpush2.msra.mxu0 0.0
    %771 = vmatprep.subr.mxu0 0.0
    %772 = vmatpush2.msra.mxu0 0.0
    %773 = vmatprep.subr.mxu0 0.0
    %774 = vmatpush2.msra.mxu0 0.0
    %775 = vmatprep.subr.mxu0 0.0
    %776 = vmatpush2.msra.mxu0 0.0
    %777 = vmatprep.subr.mxu0 0.0
    %778 = vmatpush2.msra.mxu0 0.0
    %779 = vmatprep.subr.mxu0 0.0
    %780 = vmatpush2.msra.mxu0 0.0
    %781 = vmatprep.subr.mxu0 0.0
    %782 = vmatpush2.msra.mxu0 0.0
    %783 = vmatprep.subr.mxu0 0.0
    %784 = vmatpush2.msra.mxu0 0.0
    %785 = vmatprep.subr.mxu0 0.0
    %786 = vmatpush2.msra.mxu0 0.0
    %787 = vmatprep.subr.mxu0 0.0
    %788 = vmatpush2.msra.mxu0 0.0
    %789 = vmatprep.subr.mxu0 0.0
    %790 = vmatpush2.msra.mxu0 0.0
    %791 = vmatprep.subr.mxu0 0.0
    %792 = vmatpush2.msra.mxu0 0.0
    %793 = vmatprep.subr.mxu0 0.0
    %794 = vmatpush2.msra.mxu0 0.0
    %795 = vmatprep.mubr.f32.mxu0 0.0
    %796 = vmatmul.mubr.f32.gmra.mxu0 %v654
    %v797 = vpop.f32.mrf.mxu0
    %v798 = vadd.f32 0.0, %v797
    %v799 = vpop.f32.mrf.mxu0
    %800 = vdwg.mxu0
    %v801 = vadd.f32 %v657, %v727
    %v802 = vxor.u32 %v801, 2147483648
    %v803 = vmul.f32 %v802, 1.442695
    %v804 = vpow.pop %v803
    %v805 = vadd.f32 %v804, 1.0
    %v806 = vrcp.pop %v805
    %v807 = vmul.f32 1.0, %v806
    %v808 = vadd.f32 %v658, %v729
    %v809 = vxor.u32 %v808, 2147483648
    %v810 = vmul.f32 %v809, 1.442695
    %v811 = vpow.pop %v810
    %v812 = vadd.f32 %v811, 1.0
    %v813 = vrcp.pop %v812
    %v814 = vmul.f32 1.0, %v813
    %v815 = vadd.f32 %v798, %v645
    %v816 = vmul.f32 %v807, %v815
    %v817 = vadd.f32 %v659, %v816
    %v818 = vtanh.pop %v817
    %v819 = vsub.f32 1.0, %v814
    %v820 = vmul.f32 %v819, %v818
    %v821 = vmul.f32 %v814, %v654
    %v822 = vadd.f32 %v820, %v821
    %s823 = scalar_lea.vmem [#allocation2], 8
    %824 = vst [vmem:[%s823] sm:$0xff] %v822
    %s825 = scalar_lea.vmem [#allocation3], 48
    %v826 = vld [vmem:[%s825] sm:$0xff]
    %v827 = vld [vmem:[%s825 + $0x8] sm:$0xff]
    %v828 = vld [vmem:[%s825 + $0x10] sm:$0xff]
    %829 = vmatprep.subr.mxu0 %v479
    %830 = vmatpush1.msra.mxu0 %v478
    %831 = vmatprep.subr.mxu0 %v476
    %832 = vmatpush1.msra.mxu0 %v475
    %833 = vmatprep.subr.mxu0 %v473
    %834 = vmatpush1.msra.mxu0 %v472
    %835 = vmatprep.subr.mxu0 %v470
    %836 = vmatpush1.msra.mxu0 %v469
    %837 = vmatprep.subr.mxu0 %v467
    %838 = vmatpush1.msra.mxu0 %v466
    %839 = vmatprep.subr.mxu0 %v464
    %840 = vmatpush1.msra.mxu0 %v463
    %841 = vmatprep.subr.mxu0 %v461
    %842 = vmatpush1.msra.mxu0 %v460
    %843 = vmatprep.subr.mxu0 %v458
    %844 = vmatpush1.msra.mxu0 %v457
    %845 = vmatprep.subr.mxu0 %v455
    %846 = vmatpush1.msra.mxu0 %v454
    %847 = vmatprep.subr.mxu0 %v452
    %848 = vmatpush1.msra.mxu0 %v451
    %849 = vmatprep.subr.mxu0 %v449
    %850 = vmatpush1.msra.mxu0 %v448
    %851 = vmatprep.subr.mxu0 %v446
    %852 = vmatpush1.msra.mxu0 %v445
    %853 = vmatprep.subr.mxu0 %v443
    %854 = vmatpush1.msra.mxu0 %v442
    %855 = vmatprep.subr.mxu0 %v440
    %856 = vmatpush1.msra.mxu0 %v439
    %857 = vmatprep.subr.mxu0 %v437
    %858 = vmatpush1.msra.mxu0 %v436
    %859 = vmatprep.subr.mxu0 %v434
    %860 = vmatpush1.msra.mxu0 %v433
    %861 = vmatprep.subr.mxu0 0.0
    %862 = vmatpush2.msra.mxu0 0.0
    %863 = vmatprep.subr.mxu0 0.0
    %864 = vmatpush2.msra.mxu0 0.0
    %865 = vmatprep.subr.mxu0 0.0
    %866 = vmatpush2.msra.mxu0 0.0
    %867 = vmatprep.subr.mxu0 0.0
    %868 = vmatpush2.msra.mxu0 0.0
    %869 = vmatprep.subr.mxu0 0.0
    %870 = vmatpush2.msra.mxu0 0.0
    %871 = vmatprep.subr.mxu0 0.0
    %872 = vmatpush2.msra.mxu0 0.0
    %873 = vmatprep.subr.mxu0 0.0
    %874 = vmatpush2.msra.mxu0 0.0
    %875 = vmatprep.subr.mxu0 0.0
    %876 = vmatpush2.msra.mxu0 0.0
    %877 = vmatprep.subr.mxu0 0.0
    %878 = vmatpush2.msra.mxu0 0.0
    %879 = vmatprep.subr.mxu0 0.0
    %880 = vmatpush2.msra.mxu0 0.0
    %881 = vmatprep.subr.mxu0 0.0
    %882 = vmatpush2.msra.mxu0 0.0
    %883 = vmatprep.subr.mxu0 0.0
    %884 = vmatpush2.msra.mxu0 0.0
    %885 = vmatprep.subr.mxu0 0.0
    %886 = vmatpush2.msra.mxu0 0.0
    %887 = vmatprep.subr.mxu0 0.0
    %888 = vmatpush2.msra.mxu0 0.0
    %889 = vmatprep.subr.mxu0 0.0
    %890 = vmatpush2.msra.mxu0 0.0
    %891 = vmatprep.subr.mxu0 0.0
    %892 = vmatpush2.msra.mxu0 0.0
    %893 = vmatprep.mubr.f32.mxu0 0.0
    %894 = vmatmul.mubr.f32.gmra.mxu0 %v822
    %v895 = vpop.f32.mrf.mxu0
    %v896 = vadd.f32 0.0, %v895
    %v897 = vpop.f32.mrf.mxu0
    %v898 = vadd.f32 0.0, %v897
    %899 = vdwg.mxu0
    %900 = vmatprep.subr.mxu0 0.0
    %901 = vmatpush1.msra.mxu0 %v480
    %902 = vmatprep.subr.mxu0 0.0
    %903 = vmatpush1.msra.mxu0 %v477
    %904 = vmatprep.subr.mxu0 0.0
    %905 = vmatpush1.msra.mxu0 %v474
    %906 = vmatprep.subr.mxu0 0.0
    %907 = vmatpush1.msra.mxu0 %v471
    %908 = vmatprep.subr.mxu0 0.0
    %909 = vmatpush1.msra.mxu0 %v468
    %910 = vmatprep.subr.mxu0 0.0
    %911 = vmatpush1.msra.mxu0 %v465
    %912 = vmatprep.subr.mxu0 0.0
    %913 = vmatpush1.msra.mxu0 %v462
    %914 = vmatprep.subr.mxu0 0.0
    %915 = vmatpush1.msra.mxu0 %v459
    %916 = vmatprep.subr.mxu0 0.0
    %917 = vmatpush1.msra.mxu0 %v456
    %918 = vmatprep.subr.mxu0 0.0
    %919 = vmatpush1.msra.mxu0 %v453
    %920 = vmatprep.subr.mxu0 0.0
    %921 = vmatpush1.msra.mxu0 %v450
    %922 = vmatprep.subr.mxu0 0.0
    %923 = vmatpush1.msra.mxu0 %v447
    %924 = vmatprep.subr.mxu0 0.0
    %925 = vmatpush1.msra.mxu0 %v444
    %926 = vmatprep.subr.mxu0 0.0
    %927 = vmatpush1.msra.mxu0 %v441
    %928 = vmatprep.subr.mxu0 0.0
    %929 = vmatpush1.msra.mxu0 %v438
    %930 = vmatprep.subr.mxu0 0.0
    %931 = vmatpush1.msra.mxu0 %v435
    %932 = vmatprep.subr.mxu0 0.0
    %933 = vmatpush2.msra.mxu0 0.0
    %934 = vmatprep.subr.mxu0 0.0
    %935 = vmatpush2.msra.mxu0 0.0
    %936 = vmatprep.subr.mxu0 0.0
    %937 = vmatpush2.msra.mxu0 0.0
    %938 = vmatprep.subr.mxu0 0.0
    %939 = vmatpush2.msra.mxu0 0.0
    %940 = vmatprep.subr.mxu0 0.0
    %941 = vmatpush2.msra.mxu0 0.0
    %942 = vmatprep.subr.mxu0 0.0
    %943 = vmatpush2.msra.mxu0 0.0
    %944 = vmatprep.subr.mxu0 0.0
    %945 = vmatpush2.msra.mxu0 0.0
    %946 = vmatprep.subr.mxu0 0.0
    %947 = vmatpush2.msra.mxu0 0.0
    %948 = vmatprep.subr.mxu0 0.0
    %949 = vmatpush2.msra.mxu0 0.0
    %950 = vmatprep.subr.mxu0 0.0
    %951 = vmatpush2.msra.mxu0 0.0
    %952 = vmatprep.subr.mxu0 0.0
    %953 = vmatpush2.msra.mxu0 0.0
    %954 = vmatprep.subr.mxu0 0.0
    %955 = vmatpush2.msra.mxu0 0.0
    %956 = vmatprep.subr.mxu0 0.0
    %957 = vmatpush2.msra.mxu0 0.0
    %958 = vmatprep.subr.mxu0 0.0
    %959 = vmatpush2.msra.mxu0 0.0
    %960 = vmatprep.subr.mxu0 0.0
    %961 = vmatpush2.msra.mxu0 0.0
    %962 = vmatprep.subr.mxu0 0.0
    %963 = vmatpush2.msra.mxu0 0.0
    %964 = vmatprep.mubr.f32.mxu0 0.0
    %965 = vmatmul.mubr.f32.gmra.mxu0 %v822
    %v966 = vpop.f32.mrf.mxu0
    %v967 = vadd.f32 0.0, %v966
    %v968 = vpop.f32.mrf.mxu0
    %969 = vdwg.mxu0
    %v970 = vadd.f32 %v826, %v896
    %v971 = vxor.u32 %v970, 2147483648
    %v972 = vmul.f32 %v971, 1.442695
    %v973 = vpow.pop %v972
    %v974 = vadd.f32 %v973, 1.0
    %v975 = vrcp.pop %v974
    %v976 = vmul.f32 1.0, %v975
    %v977 = vadd.f32 %v827, %v898
    %v978 = vxor.u32 %v977, 2147483648
    %v979 = vmul.f32 %v978, 1.442695
    %v980 = vpow.pop %v979
    %v981 = vadd.f32 %v980, 1.0
    %v982 = vrcp.pop %v981
    %v983 = vmul.f32 1.0, %v982
    %v984 = vadd.f32 %v967, %v645
    %v985 = vmul.f32 %v976, %v984
    %v986 = vadd.f32 %v828, %v985
    %v987 = vtanh.pop %v986
    %v988 = vsub.f32 1.0, %v983
    %v989 = vmul.f32 %v988, %v987
    %v990 = vmul.f32 %v983, %v822
    %v991 = vadd.f32 %v989, %v990
    %s992 = scalar_lea.vmem [#allocation2], 16
    %993 = vst [vmem:[%s992] sm:$0xff] %v991
    %s994 = scalar_lea.vmem [#allocation3], 72
    %v995 = vld [vmem:[%s994] sm:$0xff]
    %v996 = vld [vmem:[%s994 + $0x8] sm:$0xff]
    %v997 = vld [vmem:[%s994 + $0x10] sm:$0xff]
    %998 = vmatprep.subr.mxu0 %v479
    %999 = vmatpush1.msra.mxu0 %v478
    %1000 = vmatprep.subr.mxu0 %v476
    %1001 = vmatpush1.msra.mxu0 %v475
    %1002 = vmatprep.subr.mxu0 %v473
    %1003 = vmatpush1.msra.mxu0 %v472
    %1004 = vmatprep.subr.mxu0 %v470
    %1005 = vmatpush1.msra.mxu0 %v469
    %1006 = vmatprep.subr.mxu0 %v467
    %1007 = vmatpush1.msra.mxu0 %v466
    %1008 = vmatprep.subr.mxu0 %v464
    %1009 = vmatpush1.msra.mxu0 %v463
    %1010 = vmatprep.subr.mxu0 %v461
    %1011 = vmatpush1.msra.mxu0 %v460
    %1012 = vmatprep.subr.mxu0 %v458
    %1013 = vmatpush1.msra.mxu0 %v457
    %1014 = vmatprep.subr.mxu0 %v455
    %1015 = vmatpush1.msra.mxu0 %v454
    %1016 = vmatprep.subr.mxu0 %v452
    %1017 = vmatpush1.msra.mxu0 %v451
    %1018 = vmatprep.subr.mxu0 %v449
    %1019 = vmatpush1.msra.mxu0 %v448
    %1020 = vmatprep.subr.mxu0 %v446
    %1021 = vmatpush1.msra.mxu0 %v445
    %1022 = vmatprep.subr.mxu0 %v443
    %1023 = vmatpush1.msra.mxu0 %v442
    %1024 = vmatprep.subr.mxu0 %v440
    %1025 = vmatpush1.msra.mxu0 %v439
    %1026 = vmatprep.subr.mxu0 %v437
    %1027 = vmatpush1.msra.mxu0 %v436
    %1028 = vmatprep.subr.mxu0 %v434
    %1029 = vmatpush1.msra.mxu0 %v433
    %1030 = vmatprep.subr.mxu0 0.0
    %1031 = vmatpush2.msra.mxu0 0.0
    %1032 = vmatprep.subr.mxu0 0.0
    %1033 = vmatpush2.msra.mxu0 0.0
    %1034 = vmatprep.subr.mxu0 0.0
    %1035 = vmatpush2.msra.mxu0 0.0
    %1036 = vmatprep.subr.mxu0 0.0
    %1037 = vmatpush2.msra.mxu0 0.0
    %1038 = vmatprep.subr.mxu0 0.0
    %1039 = vmatpush2.msra.mxu0 0.0
    %1040 = vmatprep.subr.mxu0 0.0
    %1041 = vmatpush2.msra.mxu0 0.0
    %1042 = vmatprep.subr.mxu0 0.0
    %1043 = vmatpush2.msra.mxu0 0.0
    %1044 = vmatprep.subr.mxu0 0.0
    %1045 = vmatpush2.msra.mxu0 0.0
    %1046 = vmatprep.subr.mxu0 0.0
    %1047 = vmatpush2.msra.mxu0 0.0
    %1048 = vmatprep.subr.mxu0 0.0
    %1049 = vmatpush2.msra.mxu0 0.0
    %1050 = vmatprep.subr.mxu0 0.0
    %1051 = vmatpush2.msra.mxu0 0.0
    %1052 = vmatprep.subr.mxu0 0.0
    %1053 = vmatpush2.msra.mxu0 0.0
    %1054 = vmatprep.subr.mxu0 0.0
    %1055 = vmatpush2.msra.mxu0 0.0
    %1056 = vmatprep.subr.mxu0 0.0
    %1057 = vmatpush2.msra.mxu0 0.0
    %1058 = vmatprep.subr.mxu0 0.0
    %1059 = vmatpush2.msra.mxu0 0.0
    %1060 = vmatprep.subr.mxu0 0.0
    %1061 = vmatpush2.msra.mxu0 0.0
    %1062 = vmatprep.mubr.f32.mxu0 0.0
    %1063 = vmatmul.mubr.f32.gmra.mxu0 %v991
    %v1064 = vpop.f32.mrf.mxu0
    %v1065 = vadd.f32 0.0, %v1064
    %v1066 = vpop.f32.mrf.mxu0
    %v1067 = vadd.f32 0.0, %v1066
    %1068 = vdwg.mxu0
    %1069 = vmatprep.subr.mxu0 0.0
    %1070 = vmatpush1.msra.mxu0 %v480
    %1071 = vmatprep.subr.mxu0 0.0
    %1072 = vmatpush1.msra.mxu0 %v477
    %1073 = vmatprep.subr.mxu0 0.0
    %1074 = vmatpush1.msra.mxu0 %v474
    %1075 = vmatprep.subr.mxu0 0.0
    %1076 = vmatpush1.msra.mxu0 %v471
    %1077 = vmatprep.subr.mxu0 0.0
    %1078 = vmatpush1.msra.mxu0 %v468
    %1079 = vmatprep.subr.mxu0 0.0
    %1080 = vmatpush1.msra.mxu0 %v465
    %1081 = vmatprep.subr.mxu0 0.0
    %1082 = vmatpush1.msra.mxu0 %v462
    %1083 = vmatprep.subr.mxu0 0.0
    %1084 = vmatpush1.msra.mxu0 %v459
    %1085 = vmatprep.subr.mxu0 0.0
    %1086 = vmatpush1.msra.mxu0 %v456
    %1087 = vmatprep.subr.mxu0 0.0
    %1088 = vmatpush1.msra.mxu0 %v453
    %1089 = vmatprep.subr.mxu0 0.0
    %1090 = vmatpush1.msra.mxu0 %v450
    %1091 = vmatprep.subr.mxu0 0.0
    %1092 = vmatpush1.msra.mxu0 %v447
    %1093 = vmatprep.subr.mxu0 0.0
    %1094 = vmatpush1.msra.mxu0 %v444
    %1095 = vmatprep.subr.mxu0 0.0
    %1096 = vmatpush1.msra.mxu0 %v441
    %1097 = vmatprep.subr.mxu0 0.0
    %1098 = vmatpush1.msra.mxu0 %v438
    %1099 = vmatprep.subr.mxu0 0.0
    %1100 = vmatpush1.msra.mxu0 %v435
    %1101 = vmatprep.subr.mxu0 0.0
    %1102 = vmatpush2.msra.mxu0 0.0
    %1103 = vmatprep.subr.mxu0 0.0
    %1104 = vmatpush2.msra.mxu0 0.0
    %1105 = vmatprep.subr.mxu0 0.0
    %1106 = vmatpush2.msra.mxu0 0.0
    %1107 = vmatprep.subr.mxu0 0.0
    %1108 = vmatpush2.msra.mxu0 0.0
    %1109 = vmatprep.subr.mxu0 0.0
    %1110 = vmatpush2.msra.mxu0 0.0
    %1111 = vmatprep.subr.mxu0 0.0
    %1112 = vmatpush2.msra.mxu0 0.0
    %1113 = vmatprep.subr.mxu0 0.0
    %1114 = vmatpush2.msra.mxu0 0.0
    %1115 = vmatprep.subr.mxu0 0.0
    %1116 = vmatpush2.msra.mxu0 0.0
    %1117 = vmatprep.subr.mxu0 0.0
    %1118 = vmatpush2.msra.mxu0 0.0
    %1119 = vmatprep.subr.mxu0 0.0
    %1120 = vmatpush2.msra.mxu0 0.0
    %1121 = vmatprep.subr.mxu0 0.0
    %1122 = vmatpush2.msra.mxu0 0.0
    %1123 = vmatprep.subr.mxu0 0.0
    %1124 = vmatpush2.msra.mxu0 0.0
    %1125 = vmatprep.subr.mxu0 0.0
    %1126 = vmatpush2.msra.mxu0 0.0
    %1127 = vmatprep.subr.mxu0 0.0
    %1128 = vmatpush2.msra.mxu0 0.0
    %1129 = vmatprep.subr.mxu0 0.0
    %1130 = vmatpush2.msra.mxu0 0.0
    %1131 = vmatprep.subr.mxu0 0.0
    %1132 = vmatpush2.msra.mxu0 0.0
    %1133 = vmatprep.mubr.f32.mxu0 0.0
    %1134 = vmatmul.mubr.f32.gmra.mxu0 %v991
    %v1135 = vpop.f32.mrf.mxu0
    %v1136 = vadd.f32 0.0, %v1135
    %v1137 = vpop.f32.mrf.mxu0
    %1138 = vdwg.mxu0
    %v1139 = vadd.f32 %v995, %v1065
    %v1140 = vxor.u32 %v1139, 2147483648
    %v1141 = vmul.f32 %v1140, 1.442695
    %v1142 = vpow.pop %v1141
    %v1143 = vadd.f32 %v1142, 1.0
    %v1144 = vrcp.pop %v1143
    %v1145 = vmul.f32 1.0, %v1144
    %v1146 = vadd.f32 %v996, %v1067
    %v1147 = vxor.u32 %v1146, 2147483648
    %v1148 = vmul.f32 %v1147, 1.442695
    %v1149 = vpow.pop %v1148
    %v1150 = vadd.f32 %v1149, 1.0
    %v1151 = vrcp.pop %v1150
    %v1152 = vmul.f32 1.0, %v1151
    %v1153 = vadd.f32 %v1136, %v645
    %v1154 = vmul.f32 %v1145, %v1153
    %v1155 = vadd.f32 %v997, %v1154
    %v1156 = vtanh.pop %v1155
    %v1157 = vsub.f32 1.0, %v1152
    %v1158 = vmul.f32 %v1157, %v1156
    %v1159 = vmul.f32 %v1152, %v991
    %v1160 = vadd.f32 %v1158, %v1159
    %s1161 = scalar_lea.vmem [#allocation2], 24
    %1162 = vst [vmem:[%s1161] sm:$0xff] %v1160
    %s1163 = scalar_lea.vmem [#allocation3], 96
    %v1164 = vld [vmem:[%s1163] sm:$0xff]
    %v1165 = vld [vmem:[%s1163 + $0x8] sm:$0xff]
    %v1166 = vld [vmem:[%s1163 + $0x10] sm:$0xff]
    %1167 = vmatprep.subr.mxu0 %v479
    %1168 = vmatpush1.msra.mxu0 %v478
    %1169 = vmatprep.subr.mxu0 %v476
    %1170 = vmatpush1.msra.mxu0 %v475
    %1171 = vmatprep.subr.mxu0 %v473
    %1172 = vmatpush1.msra.mxu0 %v472
    %1173 = vmatprep.subr.mxu0 %v470
    %1174 = vmatpush1.msra.mxu0 %v469
    %1175 = vmatprep.subr.mxu0 %v467
    %1176 = vmatpush1.msra.mxu0 %v466
    %1177 = vmatprep.subr.mxu0 %v464
    %1178 = vmatpush1.msra.mxu0 %v463
    %1179 = vmatprep.subr.mxu0 %v461
    %1180 = vmatpush1.msra.mxu0 %v460
    %1181 = vmatprep.subr.mxu0 %v458
    %1182 = vmatpush1.msra.mxu0 %v457
    %1183 = vmatprep.subr.mxu0 %v455
    %1184 = vmatpush1.msra.mxu0 %v454
    %1185 = vmatprep.subr.mxu0 %v452
    %1186 = vmatpush1.msra.mxu0 %v451
    %1187 = vmatprep.subr.mxu0 %v449
    %1188 = vmatpush1.msra.mxu0 %v448
    %1189 = vmatprep.subr.mxu0 %v446
    %1190 = vmatpush1.msra.mxu0 %v445
    %1191 = vmatprep.subr.mxu0 %v443
    %1192 = vmatpush1.msra.mxu0 %v442
    %1193 = vmatprep.subr.mxu0 %v440
    %1194 = vmatpush1.msra.mxu0 %v439
    %1195 = vmatprep.subr.mxu0 %v437
    %1196 = vmatpush1.msra.mxu0 %v436
    %1197 = vmatprep.subr.mxu0 %v434
    %1198 = vmatpush1.msra.mxu0 %v433
    %1199 = vmatprep.subr.mxu0 0.0
    %1200 = vmatpush2.msra.mxu0 0.0
    %1201 = vmatprep.subr.mxu0 0.0
    %1202 = vmatpush2.msra.mxu0 0.0
    %1203 = vmatprep.subr.mxu0 0.0
    %1204 = vmatpush2.msra.mxu0 0.0
    %1205 = vmatprep.subr.mxu0 0.0
    %1206 = vmatpush2.msra.mxu0 0.0
    %1207 = vmatprep.subr.mxu0 0.0
    %1208 = vmatpush2.msra.mxu0 0.0
    %1209 = vmatprep.subr.mxu0 0.0
    %1210 = vmatpush2.msra.mxu0 0.0
    %1211 = vmatprep.subr.mxu0 0.0
    %1212 = vmatpush2.msra.mxu0 0.0
    %1213 = vmatprep.subr.mxu0 0.0
    %1214 = vmatpush2.msra.mxu0 0.0
    %1215 = vmatprep.subr.mxu0 0.0
    %1216 = vmatpush2.msra.mxu0 0.0
    %1217 = vmatprep.subr.mxu0 0.0
    %1218 = vmatpush2.msra.mxu0 0.0
    %1219 = vmatprep.subr.mxu0 0.0
    %1220 = vmatpush2.msra.mxu0 0.0
    %1221 = vmatprep.subr.mxu0 0.0
    %1222 = vmatpush2.msra.mxu0 0.0
    %1223 = vmatprep.subr.mxu0 0.0
    %1224 = vmatpush2.msra.mxu0 0.0
    %1225 = vmatprep.subr.mxu0 0.0
    %1226 = vmatpush2.msra.mxu0 0.0
    %1227 = vmatprep.subr.mxu0 0.0
    %1228 = vmatpush2.msra.mxu0 0.0
    %1229 = vmatprep.subr.mxu0 0.0
    %1230 = vmatpush2.msra.mxu0 0.0
    %1231 = vmatprep.mubr.f32.mxu0 0.0
    %1232 = vmatmul.mubr.f32.gmra.mxu0 %v1160
    %v1233 = vpop.f32.mrf.mxu0
    %v1234 = vadd.f32 0.0, %v1233
    %v1235 = vpop.f32.mrf.mxu0
    %v1236 = vadd.f32 0.0, %v1235
    %1237 = vdwg.mxu0
    %1238 = vmatprep.subr.mxu0 0.0
    %1239 = vmatpush1.msra.mxu0 %v480
    %1240 = vmatprep.subr.mxu0 0.0
    %1241 = vmatpush1.msra.mxu0 %v477
    %1242 = vmatprep.subr.mxu0 0.0
    %1243 = vmatpush1.msra.mxu0 %v474
    %1244 = vmatprep.subr.mxu0 0.0
    %1245 = vmatpush1.msra.mxu0 %v471
    %1246 = vmatprep.subr.mxu0 0.0
    %1247 = vmatpush1.msra.mxu0 %v468
    %1248 = vmatprep.subr.mxu0 0.0
    %1249 = vmatpush1.msra.mxu0 %v465
    %1250 = vmatprep.subr.mxu0 0.0
    %1251 = vmatpush1.msra.mxu0 %v462
    %1252 = vmatprep.subr.mxu0 0.0
    %1253 = vmatpush1.msra.mxu0 %v459
    %1254 = vmatprep.subr.mxu0 0.0
    %1255 = vmatpush1.msra.mxu0 %v456
    %1256 = vmatprep.subr.mxu0 0.0
    %1257 = vmatpush1.msra.mxu0 %v453
    %1258 = vmatprep.subr.mxu0 0.0
    %1259 = vmatpush1.msra.mxu0 %v450
    %1260 = vmatprep.subr.mxu0 0.0
    %1261 = vmatpush1.msra.mxu0 %v447
    %1262 = vmatprep.subr.mxu0 0.0
    %1263 = vmatpush1.msra.mxu0 %v444
    %1264 = vmatprep.subr.mxu0 0.0
    %1265 = vmatpush1.msra.mxu0 %v441
    %1266 = vmatprep.subr.mxu0 0.0
    %1267 = vmatpush1.msra.mxu0 %v438
    %1268 = vmatprep.subr.mxu0 0.0
    %1269 = vmatpush1.msra.mxu0 %v435
    %1270 = vmatprep.subr.mxu0 0.0
    %1271 = vmatpush2.msra.mxu0 0.0
    %1272 = vmatprep.subr.mxu0 0.0
    %1273 = vmatpush2.msra.mxu0 0.0
    %1274 = vmatprep.subr.mxu0 0.0
    %1275 = vmatpush2.msra.mxu0 0.0
    %1276 = vmatprep.subr.mxu0 0.0
    %1277 = vmatpush2.msra.mxu0 0.0
    %1278 = vmatprep.subr.mxu0 0.0
    %1279 = vmatpush2.msra.mxu0 0.0
    %1280 = vmatprep.subr.mxu0 0.0
    %1281 = vmatpush2.msra.mxu0 0.0
    %1282 = vmatprep.subr.mxu0 0.0
    %1283 = vmatpush2.msra.mxu0 0.0
    %1284 = vmatprep.subr.mxu0 0.0
    %1285 = vmatpush2.msra.mxu0 0.0
    %1286 = vmatprep.subr.mxu0 0.0
    %1287 = vmatpush2.msra.mxu0 0.0
    %1288 = vmatprep.subr.mxu0 0.0
    %1289 = vmatpush2.msra.mxu0 0.0
    %1290 = vmatprep.subr.mxu0 0.0
    %1291 = vmatpush2.msra.mxu0 0.0
    %1292 = vmatprep.subr.mxu0 0.0
    %1293 = vmatpush2.msra.mxu0 0.0
    %1294 = vmatprep.subr.mxu0 0.0
    %1295 = vmatpush2.msra.mxu0 0.0
    %1296 = vmatprep.subr.mxu0 0.0
    %1297 = vmatpush2.msra.mxu0 0.0
    %1298 = vmatprep.subr.mxu0 0.0
    %1299 = vmatpush2.msra.mxu0 0.0
    %1300 = vmatprep.subr.mxu0 0.0
    %1301 = vmatpush2.msra.mxu0 0.0
    %1302 = vmatprep.mubr.f32.mxu0 0.0
    %1303 = vmatmul.mubr.f32.gmra.mxu0 %v1160
    %v1304 = vpop.f32.mrf.mxu0
    %v1305 = vadd.f32 0.0, %v1304
    %v1306 = vpop.f32.mrf.mxu0
    %1307 = vdwg.mxu0
    %v1308 = vadd.f32 %v1164, %v1234
    %v1309 = vxor.u32 %v1308, 2147483648
    %v1310 = vmul.f32 %v1309, 1.442695
    %v1311 = vpow.pop %v1310
    %v1312 = vadd.f32 %v1311, 1.0
    %v1313 = vrcp.pop %v1312
    %v1314 = vmul.f32 1.0, %v1313
    %v1315 = vadd.f32 %v1165, %v1236
    %v1316 = vxor.u32 %v1315, 2147483648
    %v1317 = vmul.f32 %v1316, 1.442695
    %v1318 = vpow.pop %v1317
    %v1319 = vadd.f32 %v1318, 1.0
    %v1320 = vrcp.pop %v1319
    %v1321 = vmul.f32 1.0, %v1320
    %v1322 = vadd.f32 %v1305, %v645
    %v1323 = vmul.f32 %v1314, %v1322
    %v1324 = vadd.f32 %v1166, %v1323
    %v1325 = vtanh.pop %v1324
    %v1326 = vsub.f32 1.0, %v1321
    %v1327 = vmul.f32 %v1326, %v1325
    %v1328 = vmul.f32 %v1321, %v1160
    %v1329 = vadd.f32 %v1327, %v1328
    %s1330 = scalar_lea.vmem [#allocation2], 32
    %1331 = vst [vmem:[%s1330] sm:$0xff] %v1329
    %s1332 = scalar_lea.vmem [#allocation3], 120
    %v1333 = vld [vmem:[%s1332] sm:$0xff]
    %v1334 = vld [vmem:[%s1332 + $0x8] sm:$0xff]
    %v1335 = vld [vmem:[%s1332 + $0x10] sm:$0xff]
    %1336 = vmatprep.subr.mxu0 %v479
    %1337 = vmatpush1.msra.mxu0 %v478
    %1338 = vmatprep.subr.mxu0 %v476
    %1339 = vmatpush1.msra.mxu0 %v475
    %1340 = vmatprep.subr.mxu0 %v473
    %1341 = vmatpush1.msra.mxu0 %v472
    %1342 = vmatprep.subr.mxu0 %v470
    %1343 = vmatpush1.msra.mxu0 %v469
    %1344 = vmatprep.subr.mxu0 %v467
    %1345 = vmatpush1.msra.mxu0 %v466
    %1346 = vmatprep.subr.mxu0 %v464
    %1347 = vmatpush1.msra.mxu0 %v463
    %1348 = vmatprep.subr.mxu0 %v461
    %1349 = vmatpush1.msra.mxu0 %v460
    %1350 = vmatprep.subr.mxu0 %v458
    %1351 = vmatpush1.msra.mxu0 %v457
    %1352 = vmatprep.subr.mxu0 %v455
    %1353 = vmatpush1.msra.mxu0 %v454
    %1354 = vmatprep.subr.mxu0 %v452
    %1355 = vmatpush1.msra.mxu0 %v451
    %1356 = vmatprep.subr.mxu0 %v449
    %1357 = vmatpush1.msra.mxu0 %v448
    %1358 = vmatprep.subr.mxu0 %v446
    %1359 = vmatpush1.msra.mxu0 %v445
    %1360 = vmatprep.subr.mxu0 %v443
    %1361 = vmatpush1.msra.mxu0 %v442
    %1362 = vmatprep.subr.mxu0 %v440
    %1363 = vmatpush1.msra.mxu0 %v439
    %1364 = vmatprep.subr.mxu0 %v437
    %1365 = vmatpush1.msra.mxu0 %v436
    %1366 = vmatprep.subr.mxu0 %v434
    %1367 = vmatpush1.msra.mxu0 %v433
    %1368 = vmatprep.subr.mxu0 0.0
    %1369 = vmatpush2.msra.mxu0 0.0
    %1370 = vmatprep.subr.mxu0 0.0
    %1371 = vmatpush2.msra.mxu0 0.0
    %1372 = vmatprep.subr.mxu0 0.0
    %1373 = vmatpush2.msra.mxu0 0.0
    %1374 = vmatprep.subr.mxu0 0.0
    %1375 = vmatpush2.msra.mxu0 0.0
    %1376 = vmatprep.subr.mxu0 0.0
    %1377 = vmatpush2.msra.mxu0 0.0
    %1378 = vmatprep.subr.mxu0 0.0
    %1379 = vmatpush2.msra.mxu0 0.0
    %1380 = vmatprep.subr.mxu0 0.0
    %1381 = vmatpush2.msra.mxu0 0.0
    %1382 = vmatprep.subr.mxu0 0.0
    %1383 = vmatpush2.msra.mxu0 0.0
    %1384 = vmatprep.subr.mxu0 0.0
    %1385 = vmatpush2.msra.mxu0 0.0
    %1386 = vmatprep.subr.mxu0 0.0
    %1387 = vmatpush2.msra.mxu0 0.0
    %1388 = vmatprep.subr.mxu0 0.0
    %1389 = vmatpush2.msra.mxu0 0.0
    %1390 = vmatprep.subr.mxu0 0.0
    %1391 = vmatpush2.msra.mxu0 0.0
    %1392 = vmatprep.subr.mxu0 0.0
    %1393 = vmatpush2.msra.mxu0 0.0
    %1394 = vmatprep.subr.mxu0 0.0
    %1395 = vmatpush2.msra.mxu0 0.0
    %1396 = vmatprep.subr.mxu0 0.0
    %1397 = vmatpush2.msra.mxu0 0.0
    %1398 = vmatprep.subr.mxu0 0.0
    %1399 = vmatpush2.msra.mxu0 0.0
    %1400 = vmatprep.mubr.f32.mxu0 0.0
    %1401 = vmatmul.mubr.f32.gmra.mxu0 %v1329
    %v1402 = vpop.f32.mrf.mxu0
    %v1403 = vadd.f32 0.0, %v1402
    %v1404 = vpop.f32.mrf.mxu0
    %v1405 = vadd.f32 0.0, %v1404
    %1406 = vdwg.mxu0
    %1407 = vmatprep.subr.mxu0 0.0
    %1408 = vmatpush1.msra.mxu0 %v480
    %1409 = vmatprep.subr.mxu0 0.0
    %1410 = vmatpush1.msra.mxu0 %v477
    %1411 = vmatprep.subr.mxu0 0.0
    %1412 = vmatpush1.msra.mxu0 %v474
    %1413 = vmatprep.subr.mxu0 0.0
    %1414 = vmatpush1.msra.mxu0 %v471
    %1415 = vmatprep.subr.mxu0 0.0
    %1416 = vmatpush1.msra.mxu0 %v468
    %1417 = vmatprep.subr.mxu0 0.0
    %1418 = vmatpush1.msra.mxu0 %v465
    %1419 = vmatprep.subr.mxu0 0.0
    %1420 = vmatpush1.msra.mxu0 %v462
    %1421 = vmatprep.subr.mxu0 0.0
    %1422 = vmatpush1.msra.mxu0 %v459
    %1423 = vmatprep.subr.mxu0 0.0
    %1424 = vmatpush1.msra.mxu0 %v456
    %1425 = vmatprep.subr.mxu0 0.0
    %1426 = vmatpush1.msra.mxu0 %v453
    %1427 = vmatprep.subr.mxu0 0.0
    %1428 = vmatpush1.msra.mxu0 %v450
    %1429 = vmatprep.subr.mxu0 0.0
    %1430 = vmatpush1.msra.mxu0 %v447
    %1431 = vmatprep.subr.mxu0 0.0
    %1432 = vmatpush1.msra.mxu0 %v444
    %1433 = vmatprep.subr.mxu0 0.0
    %1434 = vmatpush1.msra.mxu0 %v441
    %1435 = vmatprep.subr.mxu0 0.0
    %1436 = vmatpush1.msra.mxu0 %v438
    %1437 = vmatprep.subr.mxu0 0.0
    %1438 = vmatpush1.msra.mxu0 %v435
    %1439 = vmatprep.subr.mxu0 0.0
    %1440 = vmatpush2.msra.mxu0 0.0
    %1441 = vmatprep.subr.mxu0 0.0
    %1442 = vmatpush2.msra.mxu0 0.0
    %1443 = vmatprep.subr.mxu0 0.0
    %1444 = vmatpush2.msra.mxu0 0.0
    %1445 = vmatprep.subr.mxu0 0.0
    %1446 = vmatpush2.msra.mxu0 0.0
    %1447 = vmatprep.subr.mxu0 0.0
    %1448 = vmatpush2.msra.mxu0 0.0
    %1449 = vmatprep.subr.mxu0 0.0
    %1450 = vmatpush2.msra.mxu0 0.0
    %1451 = vmatprep.subr.mxu0 0.0
    %1452 = vmatpush2.msra.mxu0 0.0
    %1453 = vmatprep.subr.mxu0 0.0
    %1454 = vmatpush2.msra.mxu0 0.0
    %1455 = vmatprep.subr.mxu0 0.0
    %1456 = vmatpush2.msra.mxu0 0.0
    %1457 = vmatprep.subr.mxu0 0.0
    %1458 = vmatpush2.msra.mxu0 0.0
    %1459 = vmatprep.subr.mxu0 0.0
    %1460 = vmatpush2.msra.mxu0 0.0
    %1461 = vmatprep.subr.mxu0 0.0
    %1462 = vmatpush2.msra.mxu0 0.0
    %1463 = vmatprep.subr.mxu0 0.0
    %1464 = vmatpush2.msra.mxu0 0.0
    %1465 = vmatprep.subr.mxu0 0.0
    %1466 = vmatpush2.msra.mxu0 0.0
    %1467 = vmatprep.subr.mxu0 0.0
    %1468 = vmatpush2.msra.mxu0 0.0
    %1469 = vmatprep.subr.mxu0 0.0
    %1470 = vmatpush2.msra.mxu0 0.0
    %1471 = vmatprep.mubr.f32.mxu0 0.0
    %1472 = vmatmul.mubr.f32.gmra.mxu0 %v1329
    %v1473 = vpop.f32.mrf.mxu0
    %v1474 = vadd.f32 0.0, %v1473
    %v1475 = vpop.f32.mrf.mxu0
    %1476 = vdwg.mxu0
    %v1477 = vadd.f32 %v1333, %v1403
    %v1478 = vxor.u32 %v1477, 2147483648
    %v1479 = vmul.f32 %v1478, 1.442695
    %v1480 = vpow.pop %v1479
    %v1481 = vadd.f32 %v1480, 1.0
    %v1482 = vrcp.pop %v1481
    %v1483 = vmul.f32 1.0, %v1482
    %v1484 = vadd.f32 %v1334, %v1405
    %v1485 = vxor.u32 %v1484, 2147483648
    %v1486 = vmul.f32 %v1485, 1.442695
    %v1487 = vpow.pop %v1486
    %v1488 = vadd.f32 %v1487, 1.0
    %v1489 = vrcp.pop %v1488
    %v1490 = vmul.f32 1.0, %v1489
    %v1491 = vadd.f32 %v1474, %v645
    %v1492 = vmul.f32 %v1483, %v1491
    %v1493 = vadd.f32 %v1335, %v1492
    %v1494 = vtanh.pop %v1493
    %v1495 = vsub.f32 1.0, %v1490
    %v1496 = vmul.f32 %v1495, %v1494
    %v1497 = vmul.f32 %v1490, %v1329
    %v1498 = vadd.f32 %v1496, %v1497
    %s1499 = scalar_lea.vmem [#allocation2], 40
    %1500 = vst [vmem:[%s1499] sm:$0xff] %v1498
    %s1501 = scalar_lea.vmem [#allocation3], 144
    %v1502 = vld [vmem:[%s1501] sm:$0xff]
    %v1503 = vld [vmem:[%s1501 + $0x8] sm:$0xff]
    %v1504 = vld [vmem:[%s1501 + $0x10] sm:$0xff]
    %1505 = vmatprep.subr.mxu0 %v479
    %1506 = vmatpush1.msra.mxu0 %v478
    %1507 = vmatprep.subr.mxu0 %v476
    %1508 = vmatpush1.msra.mxu0 %v475
    %1509 = vmatprep.subr.mxu0 %v473
    %1510 = vmatpush1.msra.mxu0 %v472
    %1511 = vmatprep.subr.mxu0 %v470
    %1512 = vmatpush1.msra.mxu0 %v469
    %1513 = vmatprep.subr.mxu0 %v467
    %1514 = vmatpush1.msra.mxu0 %v466
    %1515 = vmatprep.subr.mxu0 %v464
    %1516 = vmatpush1.msra.mxu0 %v463
    %1517 = vmatprep.subr.mxu0 %v461
    %1518 = vmatpush1.msra.mxu0 %v460
    %1519 = vmatprep.subr.mxu0 %v458
    %1520 = vmatpush1.msra.mxu0 %v457
    %1521 = vmatprep.subr.mxu0 %v455
    %1522 = vmatpush1.msra.mxu0 %v454
    %1523 = vmatprep.subr.mxu0 %v452
    %1524 = vmatpush1.msra.mxu0 %v451
    %1525 = vmatprep.subr.mxu0 %v449
    %1526 = vmatpush1.msra.mxu0 %v448
    %1527 = vmatprep.subr.mxu0 %v446
    %1528 = vmatpush1.msra.mxu0 %v445
    %1529 = vmatprep.subr.mxu0 %v443
    %1530 = vmatpush1.msra.mxu0 %v442
    %1531 = vmatprep.subr.mxu0 %v440
    %1532 = vmatpush1.msra.mxu0 %v439
    %1533 = vmatprep.subr.mxu0 %v437
    %1534 = vmatpush1.msra.mxu0 %v436
    %1535 = vmatprep.subr.mxu0 %v434
    %1536 = vmatpush1.msra.mxu0 %v433
    %1537 = vmatprep.subr.mxu0 0.0
    %1538 = vmatpush2.msra.mxu0 0.0
    %1539 = vmatprep.subr.mxu0 0.0
    %1540 = vmatpush2.msra.mxu0 0.0
    %1541 = vmatprep.subr.mxu0 0.0
    %1542 = vmatpush2.msra.mxu0 0.0
    %1543 = vmatprep.subr.mxu0 0.0
    %1544 = vmatpush2.msra.mxu0 0.0
    %1545 = vmatprep.subr.mxu0 0.0
    %1546 = vmatpush2.msra.mxu0 0.0
    %1547 = vmatprep.subr.mxu0 0.0
    %1548 = vmatpush2.msra.mxu0 0.0
    %1549 = vmatprep.subr.mxu0 0.0
    %1550 = vmatpush2.msra.mxu0 0.0
    %1551 = vmatprep.subr.mxu0 0.0
    %1552 = vmatpush2.msra.mxu0 0.0
    %1553 = vmatprep.subr.mxu0 0.0
    %1554 = vmatpush2.msra.mxu0 0.0
    %1555 = vmatprep.subr.mxu0 0.0
    %1556 = vmatpush2.msra.mxu0 0.0
    %1557 = vmatprep.subr.mxu0 0.0
    %1558 = vmatpush2.msra.mxu0 0.0
    %1559 = vmatprep.subr.mxu0 0.0
    %1560 = vmatpush2.msra.mxu0 0.0
    %1561 = vmatprep.subr.mxu0 0.0
    %1562 = vmatpush2.msra.mxu0 0.0
    %1563 = vmatprep.subr.mxu0 0.0
    %1564 = vmatpush2.msra.mxu0 0.0
    %1565 = vmatprep.subr.mxu0 0.0
    %1566 = vmatpush2.msra.mxu0 0.0
    %1567 = vmatprep.subr.mxu0 0.0
    %1568 = vmatpush2.msra.mxu0 0.0
    %1569 = vmatprep.mubr.f32.mxu0 0.0
    %1570 = vmatmul.mubr.f32.gmra.mxu0 %v1498
    %v1571 = vpop.f32.mrf.mxu0
    %v1572 = vadd.f32 0.0, %v1571
    %v1573 = vpop.f32.mrf.mxu0
    %v1574 = vadd.f32 0.0, %v1573
    %1575 = vdwg.mxu0
    %1576 = vmatprep.subr.mxu0 0.0
    %1577 = vmatpush1.msra.mxu0 %v480
    %1578 = vmatprep.subr.mxu0 0.0
    %1579 = vmatpush1.msra.mxu0 %v477
    %1580 = vmatprep.subr.mxu0 0.0
    %1581 = vmatpush1.msra.mxu0 %v474
    %1582 = vmatprep.subr.mxu0 0.0
    %1583 = vmatpush1.msra.mxu0 %v471
    %1584 = vmatprep.subr.mxu0 0.0
    %1585 = vmatpush1.msra.mxu0 %v468
    %1586 = vmatprep.subr.mxu0 0.0
    %1587 = vmatpush1.msra.mxu0 %v465
    %1588 = vmatprep.subr.mxu0 0.0
    %1589 = vmatpush1.msra.mxu0 %v462
    %1590 = vmatprep.subr.mxu0 0.0
    %1591 = vmatpush1.msra.mxu0 %v459
    %1592 = vmatprep.subr.mxu0 0.0
    %1593 = vmatpush1.msra.mxu0 %v456
    %1594 = vmatprep.subr.mxu0 0.0
    %1595 = vmatpush1.msra.mxu0 %v453
    %1596 = vmatprep.subr.mxu0 0.0
    %1597 = vmatpush1.msra.mxu0 %v450
    %1598 = vmatprep.subr.mxu0 0.0
    %1599 = vmatpush1.msra.mxu0 %v447
    %1600 = vmatprep.subr.mxu0 0.0
    %1601 = vmatpush1.msra.mxu0 %v444
    %1602 = vmatprep.subr.mxu0 0.0
    %1603 = vmatpush1.msra.mxu0 %v441
    %1604 = vmatprep.subr.mxu0 0.0
    %1605 = vmatpush1.msra.mxu0 %v438
    %1606 = vmatprep.subr.mxu0 0.0
    %1607 = vmatpush1.msra.mxu0 %v435
    %1608 = vmatprep.subr.mxu0 0.0
    %1609 = vmatpush2.msra.mxu0 0.0
    %1610 = vmatprep.subr.mxu0 0.0
    %1611 = vmatpush2.msra.mxu0 0.0
    %1612 = vmatprep.subr.mxu0 0.0
    %1613 = vmatpush2.msra.mxu0 0.0
    %1614 = vmatprep.subr.mxu0 0.0
    %1615 = vmatpush2.msra.mxu0 0.0
    %1616 = vmatprep.subr.mxu0 0.0
    %1617 = vmatpush2.msra.mxu0 0.0
    %1618 = vmatprep.subr.mxu0 0.0
    %1619 = vmatpush2.msra.mxu0 0.0
    %1620 = vmatprep.subr.mxu0 0.0
    %1621 = vmatpush2.msra.mxu0 0.0
    %1622 = vmatprep.subr.mxu0 0.0
    %1623 = vmatpush2.msra.mxu0 0.0
    %1624 = vmatprep.subr.mxu0 0.0
    %1625 = vmatpush2.msra.mxu0 0.0
    %1626 = vmatprep.subr.mxu0 0.0
    %1627 = vmatpush2.msra.mxu0 0.0
    %1628 = vmatprep.subr.mxu0 0.0
    %1629 = vmatpush2.msra.mxu0 0.0
    %1630 = vmatprep.subr.mxu0 0.0
    %1631 = vmatpush2.msra.mxu0 0.0
    %1632 = vmatprep.subr.mxu0 0.0
    %1633 = vmatpush2.msra.mxu0 0.0
    %1634 = vmatprep.subr.mxu0 0.0
    %1635 = vmatpush2.msra.mxu0 0.0
    %1636 = vmatprep.subr.mxu0 0.0
    %1637 = vmatpush2.msra.mxu0 0.0
    %1638 = vmatprep.subr.mxu0 0.0
    %1639 = vmatpush2.msra.mxu0 0.0
    %1640 = vmatprep.mubr.f32.mxu0 0.0
    %1641 = vmatmul.mubr.f32.gmra.mxu0 %v1498
    %v1642 = vpop.f32.mrf.mxu0
    %v1643 = vadd.f32 0.0, %v1642
    %v1644 = vpop.f32.mrf.mxu0
    %1645 = vdwg.mxu0
    %v1646 = vadd.f32 %v1502, %v1572
    %v1647 = vxor.u32 %v1646, 2147483648
    %v1648 = vmul.f32 %v1647, 1.442695
    %v1649 = vpow.pop %v1648
    %v1650 = vadd.f32 %v1649, 1.0
    %v1651 = vrcp.pop %v1650
    %v1652 = vmul.f32 1.0, %v1651
    %v1653 = vadd.f32 %v1503, %v1574
    %v1654 = vxor.u32 %v1653, 2147483648
    %v1655 = vmul.f32 %v1654, 1.442695
    %v1656 = vpow.pop %v1655
    %v1657 = vadd.f32 %v1656, 1.0
    %v1658 = vrcp.pop %v1657
    %v1659 = vmul.f32 1.0, %v1658
    %v1660 = vadd.f32 %v1643, %v645
    %v1661 = vmul.f32 %v1652, %v1660
    %v1662 = vadd.f32 %v1504, %v1661
    %v1663 = vtanh.pop %v1662
    %v1664 = vsub.f32 1.0, %v1659
    %v1665 = vmul.f32 %v1664, %v1663
    %v1666 = vmul.f32 %v1659, %v1498
    %v1667 = vadd.f32 %v1665, %v1666
    %s1668 = scalar_lea.vmem [#allocation2], 48
    %1669 = vst [vmem:[%s1668] sm:$0xff] %v1667
    %s1670 = scalar_lea.vmem [#allocation3], 168
    %v1671 = vld [vmem:[%s1670] sm:$0xff]
    %v1672 = vld [vmem:[%s1670 + $0x8] sm:$0xff]
    %v1673 = vld [vmem:[%s1670 + $0x10] sm:$0xff]
    %1674 = vmatprep.subr.mxu0 %v479
    %1675 = vmatpush1.msra.mxu0 %v478
    %1676 = vmatprep.subr.mxu0 %v476
    %1677 = vmatpush1.msra.mxu0 %v475
    %1678 = vmatprep.subr.mxu0 %v473
    %1679 = vmatpush1.msra.mxu0 %v472
    %1680 = vmatprep.subr.mxu0 %v470
    %1681 = vmatpush1.msra.mxu0 %v469
    %1682 = vmatprep.subr.mxu0 %v467
    %1683 = vmatpush1.msra.mxu0 %v466
    %1684 = vmatprep.subr.mxu0 %v464
    %1685 = vmatpush1.msra.mxu0 %v463
    %1686 = vmatprep.subr.mxu0 %v461
    %1687 = vmatpush1.msra.mxu0 %v460
    %1688 = vmatprep.subr.mxu0 %v458
    %1689 = vmatpush1.msra.mxu0 %v457
    %1690 = vmatprep.subr.mxu0 %v455
    %1691 = vmatpush1.msra.mxu0 %v454
    %1692 = vmatprep.subr.mxu0 %v452
    %1693 = vmatpush1.msra.mxu0 %v451
    %1694 = vmatprep.subr.mxu0 %v449
    %1695 = vmatpush1.msra.mxu0 %v448
    %1696 = vmatprep.subr.mxu0 %v446
    %1697 = vmatpush1.msra.mxu0 %v445
    %1698 = vmatprep.subr.mxu0 %v443
    %1699 = vmatpush1.msra.mxu0 %v442
    %1700 = vmatprep.subr.mxu0 %v440
    %1701 = vmatpush1.msra.mxu0 %v439
    %1702 = vmatprep.subr.mxu0 %v437
    %1703 = vmatpush1.msra.mxu0 %v436
    %1704 = vmatprep.subr.mxu0 %v434
    %1705 = vmatpush1.msra.mxu0 %v433
    %1706 = vmatprep.subr.mxu0 0.0
    %1707 = vmatpush2.msra.mxu0 0.0
    %1708 = vmatprep.subr.mxu0 0.0
    %1709 = vmatpush2.msra.mxu0 0.0
    %1710 = vmatprep.subr.mxu0 0.0
    %1711 = vmatpush2.msra.mxu0 0.0
    %1712 = vmatprep.subr.mxu0 0.0
    %1713 = vmatpush2.msra.mxu0 0.0
    %1714 = vmatprep.subr.mxu0 0.0
    %1715 = vmatpush2.msra.mxu0 0.0
    %1716 = vmatprep.subr.mxu0 0.0
    %1717 = vmatpush2.msra.mxu0 0.0
    %1718 = vmatprep.subr.mxu0 0.0
    %1719 = vmatpush2.msra.mxu0 0.0
    %1720 = vmatprep.subr.mxu0 0.0
    %1721 = vmatpush2.msra.mxu0 0.0
    %1722 = vmatprep.subr.mxu0 0.0
    %1723 = vmatpush2.msra.mxu0 0.0
    %1724 = vmatprep.subr.mxu0 0.0
    %1725 = vmatpush2.msra.mxu0 0.0
    %1726 = vmatprep.subr.mxu0 0.0
    %1727 = vmatpush2.msra.mxu0 0.0
    %1728 = vmatprep.subr.mxu0 0.0
    %1729 = vmatpush2.msra.mxu0 0.0
    %1730 = vmatprep.subr.mxu0 0.0
    %1731 = vmatpush2.msra.mxu0 0.0
    %1732 = vmatprep.subr.mxu0 0.0
    %1733 = vmatpush2.msra.mxu0 0.0
    %1734 = vmatprep.subr.mxu0 0.0
    %1735 = vmatpush2.msra.mxu0 0.0
    %1736 = vmatprep.subr.mxu0 0.0
    %1737 = vmatpush2.msra.mxu0 0.0
    %1738 = vmatprep.mubr.f32.mxu0 0.0
    %1739 = vmatmul.mubr.f32.gmra.mxu0 %v1667
    %v1740 = vpop.f32.mrf.mxu0
    %v1741 = vadd.f32 0.0, %v1740
    %v1742 = vpop.f32.mrf.mxu0
    %v1743 = vadd.f32 0.0, %v1742
    %1744 = vdwg.mxu0
    %1745 = vmatprep.subr.mxu0 0.0
    %1746 = vmatpush1.msra.mxu0 %v480
    %1747 = vmatprep.subr.mxu0 0.0
    %1748 = vmatpush1.msra.mxu0 %v477
    %1749 = vmatprep.subr.mxu0 0.0
    %1750 = vmatpush1.msra.mxu0 %v474
    %1751 = vmatprep.subr.mxu0 0.0
    %1752 = vmatpush1.msra.mxu0 %v471
    %1753 = vmatprep.subr.mxu0 0.0
    %1754 = vmatpush1.msra.mxu0 %v468
    %1755 = vmatprep.subr.mxu0 0.0
    %1756 = vmatpush1.msra.mxu0 %v465
    %1757 = vmatprep.subr.mxu0 0.0
    %1758 = vmatpush1.msra.mxu0 %v462
    %1759 = vmatprep.subr.mxu0 0.0
    %1760 = vmatpush1.msra.mxu0 %v459
    %1761 = vmatprep.subr.mxu0 0.0
    %1762 = vmatpush1.msra.mxu0 %v456
    %1763 = vmatprep.subr.mxu0 0.0
    %1764 = vmatpush1.msra.mxu0 %v453
    %1765 = vmatprep.subr.mxu0 0.0
    %1766 = vmatpush1.msra.mxu0 %v450
    %1767 = vmatprep.subr.mxu0 0.0
    %1768 = vmatpush1.msra.mxu0 %v447
    %1769 = vmatprep.subr.mxu0 0.0
    %1770 = vmatpush1.msra.mxu0 %v444
    %1771 = vmatprep.subr.mxu0 0.0
    %1772 = vmatpush1.msra.mxu0 %v441
    %1773 = vmatprep.subr.mxu0 0.0
    %1774 = vmatpush1.msra.mxu0 %v438
    %1775 = vmatprep.subr.mxu0 0.0
    %1776 = vmatpush1.msra.mxu0 %v435
    %1777 = vmatprep.subr.mxu0 0.0
    %1778 = vmatpush2.msra.mxu0 0.0
    %1779 = vmatprep.subr.mxu0 0.0
    %1780 = vmatpush2.msra.mxu0 0.0
    %1781 = vmatprep.subr.mxu0 0.0
    %1782 = vmatpush2.msra.mxu0 0.0
    %1783 = vmatprep.subr.mxu0 0.0
    %1784 = vmatpush2.msra.mxu0 0.0
    %1785 = vmatprep.subr.mxu0 0.0
    %1786 = vmatpush2.msra.mxu0 0.0
    %1787 = vmatprep.subr.mxu0 0.0
    %1788 = vmatpush2.msra.mxu0 0.0
    %1789 = vmatprep.subr.mxu0 0.0
    %1790 = vmatpush2.msra.mxu0 0.0
    %1791 = vmatprep.subr.mxu0 0.0
    %1792 = vmatpush2.msra.mxu0 0.0
    %1793 = vmatprep.subr.mxu0 0.0
    %1794 = vmatpush2.msra.mxu0 0.0
    %1795 = vmatprep.subr.mxu0 0.0
    %1796 = vmatpush2.msra.mxu0 0.0
    %1797 = vmatprep.subr.mxu0 0.0
    %1798 = vmatpush2.msra.mxu0 0.0
    %1799 = vmatprep.subr.mxu0 0.0
    %1800 = vmatpush2.msra.mxu0 0.0
    %1801 = vmatprep.subr.mxu0 0.0
    %1802 = vmatpush2.msra.mxu0 0.0
    %1803 = vmatprep.subr.mxu0 0.0
    %1804 = vmatpush2.msra.mxu0 0.0
    %1805 = vmatprep.subr.mxu0 0.0
    %1806 = vmatpush2.msra.mxu0 0.0
    %1807 = vmatprep.subr.mxu0 0.0
    %1808 = vmatpush2.msra.mxu0 0.0
    %1809 = vmatprep.mubr.f32.mxu0 0.0
    %1810 = vmatmul.mubr.f32.gmra.mxu0 %v1667
    %v1811 = vpop.f32.mrf.mxu0
    %v1812 = vadd.f32 0.0, %v1811
    %v1813 = vpop.f32.mrf.mxu0
    %1814 = vdwg.mxu0
    %v1815 = vadd.f32 %v1671, %v1741
    %v1816 = vxor.u32 %v1815, 2147483648
    %v1817 = vmul.f32 %v1816, 1.442695
    %v1818 = vpow.pop %v1817
    %v1819 = vadd.f32 %v1818, 1.0
    %v1820 = vrcp.pop %v1819
    %v1821 = vmul.f32 1.0, %v1820
    %v1822 = vadd.f32 %v1672, %v1743
    %v1823 = vxor.u32 %v1822, 2147483648
    %v1824 = vmul.f32 %v1823, 1.442695
    %v1825 = vpow.pop %v1824
    %v1826 = vadd.f32 %v1825, 1.0
    %v1827 = vrcp.pop %v1826
    %v1828 = vmul.f32 1.0, %v1827
    %v1829 = vadd.f32 %v1812, %v645
    %v1830 = vmul.f32 %v1821, %v1829
    %v1831 = vadd.f32 %v1673, %v1830
    %v1832 = vtanh.pop %v1831
    %v1833 = vsub.f32 1.0, %v1828
    %v1834 = vmul.f32 %v1833, %v1832
    %v1835 = vmul.f32 %v1828, %v1667
    %v1836 = vadd.f32 %v1834, %v1835
    %s1837 = scalar_lea.vmem [#allocation2], 56
    %1838 = vst [vmem:[%s1837] sm:$0xff] %v1836
    %1839 = vst [vmem:[#allocation16] sm:$0xff] %v1836
    %v1840 = vld [vmem:[#allocation2] sm:$0xff]
    %v1841 = vld [vmem:[#allocation2 + $0x8] sm:$0xff]
    %v1842 = vld [vmem:[#allocation2 + $0x10] sm:$0xff]
    %v1843 = vld [vmem:[#allocation2 + $0x18] sm:$0xff]
    %v1844 = vld [vmem:[#allocation2 + $0x20] sm:$0xff]
    %v1845 = vld [vmem:[#allocation2 + $0x28] sm:$0xff]
    %v1846 = vld [vmem:[#allocation2 + $0x30] sm:$0xff]
    %v1847 = vld [vmem:[#allocation2 + $0x38] sm:$0xff]
    %s1848 = scalar_lea.vmem [#allocation9], 384
    %v1849 = vld [vmem:[%s1848] sm:$0xff]
    %v1850 = vld [vmem:[%s1848 + $0x8] sm:$0xff]
    %v1851 = vld [vmem:[%s1848 + $0x10] sm:$0xff]
    %v1852 = vld [vmem:[%s1848 + $0x18] sm:$0xff]
    %v1853 = vld [vmem:[%s1848 + $0x20] sm:$0xff]
    %v1854 = vld [vmem:[%s1848 + $0x28] sm:$0xff]
    %v1855 = vld [vmem:[%s1848 + $0x30] sm:$0xff]
    %v1856 = vld [vmem:[%s1848 + $0x38] sm:$0xff]
    %v1857 = vld [vmem:[%s1848 + $0x40] sm:$0xff]
    %v1858 = vld [vmem:[%s1848 + $0x48] sm:$0xff]
    %v1859 = vld [vmem:[%s1848 + $0x50] sm:$0xff]
    %v1860 = vld [vmem:[%s1848 + $0x58] sm:$0xff]
    %v1861 = vld [vmem:[%s1848 + $0x60] sm:$0xff]
    %v1862 = vld [vmem:[%s1848 + $0x68] sm:$0xff]
    %v1863 = vld [vmem:[%s1848 + $0x70] sm:$0xff]
    %v1864 = vld [vmem:[%s1848 + $0x78] sm:$0xff]
    %v1865 = vld [vmem:[%s1848 + $0x80] sm:$0xff]
    %v1866 = vld [vmem:[%s1848 + $0x88] sm:$0xff]
    %v1867 = vld [vmem:[%s1848 + $0x90] sm:$0xff]
    %v1868 = vld [vmem:[%s1848 + $0x98] sm:$0xff]
    %v1869 = vld [vmem:[%s1848 + $0xa0] sm:$0xff]
    %v1870 = vld [vmem:[%s1848 + $0xa8] sm:$0xff]
    %v1871 = vld [vmem:[%s1848 + $0xb0] sm:$0xff]
    %v1872 = vld [vmem:[%s1848 + $0xb8] sm:$0xff]
    %v1873 = vld [vmem:[%s1848 + $0xc0] sm:$0xff]
    %v1874 = vld [vmem:[%s1848 + $0xc8] sm:$0xff]
    %v1875 = vld [vmem:[%s1848 + $0xd0] sm:$0xff]
    %v1876 = vld [vmem:[%s1848 + $0xd8] sm:$0xff]
    %v1877 = vld [vmem:[%s1848 + $0xe0] sm:$0xff]
    %v1878 = vld [vmem:[%s1848 + $0xe8] sm:$0xff]
    %v1879 = vld [vmem:[%s1848 + $0xf0] sm:$0xff]
    %v1880 = vld [vmem:[%s1848 + $0xf8] sm:$0xff]
    %v1881 = vld [vmem:[%s1848 + $0x100] sm:$0xff]
    %v1882 = vld [vmem:[%s1848 + $0x108] sm:$0xff]
    %v1883 = vld [vmem:[%s1848 + $0x110] sm:$0xff]
    %v1884 = vld [vmem:[%s1848 + $0x118] sm:$0xff]
    %v1885 = vld [vmem:[%s1848 + $0x120] sm:$0xff]
    %v1886 = vld [vmem:[%s1848 + $0x128] sm:$0xff]
    %v1887 = vld [vmem:[%s1848 + $0x130] sm:$0xff]
    %v1888 = vld [vmem:[%s1848 + $0x138] sm:$0xff]
    %v1889 = vld [vmem:[%s1848 + $0x140] sm:$0xff]
    %v1890 = vld [vmem:[%s1848 + $0x148] sm:$0xff]
    %v1891 = vld [vmem:[%s1848 + $0x150] sm:$0xff]
    %v1892 = vld [vmem:[%s1848 + $0x158] sm:$0xff]
    %v1893 = vld [vmem:[%s1848 + $0x160] sm:$0xff]
    %v1894 = vld [vmem:[%s1848 + $0x168] sm:$0xff]
    %v1895 = vld [vmem:[%s1848 + $0x170] sm:$0xff]
    %v1896 = vld [vmem:[%s1848 + $0x178] sm:$0xff]
    %s1897 = scalar_lea.vmem %s4, 3
    %v1898 = vld [vmem:[%s1897] sm:$0x7]
    %v1900 = vlaneseq
    %v1901 = vshrl.u32 %v1900, 7
    %v1902 = vsub.s32 0, %v1901
    %v1903 = vrot.slane %v1898, %v1902
    %v1904 = vlaneseq
    %v1905 = vshrl.u32 %v1904, 7
    %v1906 = vsub.s32 1, %v1905
    %v1907 = vrot.slane %v1898, %v1906
    %v1908 = vlaneseq
    %v1909 = vshrl.u32 %v1908, 7
    %v1910 = vsub.s32 2, %v1909
    %v1911 = vrot.slane %v1898, %v1910
    %1915 = vmatprep.subr.mxu0 %v1895
    %1916 = vmatpush1.msra.mxu0 %v1894
    %1917 = vmatprep.subr.mxu0 %v1892
    %1918 = vmatpush1.msra.mxu0 %v1891
    %1919 = vmatprep.subr.mxu0 %v1889
    %1920 = vmatpush1.msra.mxu0 %v1888
    %1921 = vmatprep.subr.mxu0 %v1886
    %1922 = vmatpush1.msra.mxu0 %v1885
    %1923 = vmatprep.subr.mxu0 %v1883
    %1924 = vmatpush1.msra.mxu0 %v1882
    %1925 = vmatprep.subr.mxu0 %v1880
    %1926 = vmatpush1.msra.mxu0 %v1879
    %1927 = vmatprep.subr.mxu0 %v1877
    %1928 = vmatpush1.msra.mxu0 %v1876
    %1929 = vmatprep.subr.mxu0 %v1874
    %1930 = vmatpush1.msra.mxu0 %v1873
    %1931 = vmatprep.subr.mxu0 %v1871
    %1932 = vmatpush1.msra.mxu0 %v1870
    %1933 = vmatprep.subr.mxu0 %v1868
    %1934 = vmatpush1.msra.mxu0 %v1867
    %1935 = vmatprep.subr.mxu0 %v1865
    %1936 = vmatpush1.msra.mxu0 %v1864
    %1937 = vmatprep.subr.mxu0 %v1862
    %1938 = vmatpush1.msra.mxu0 %v1861
    %1939 = vmatprep.subr.mxu0 %v1859
    %1940 = vmatpush1.msra.mxu0 %v1858
    %1941 = vmatprep.subr.mxu0 %v1856
    %1942 = vmatpush1.msra.mxu0 %v1855
    %1943 = vmatprep.subr.mxu0 %v1853
    %1944 = vmatpush1.msra.mxu0 %v1852
    %1945 = vmatprep.subr.mxu0 %v1850
    %1946 = vmatpush1.msra.mxu0 %v1849
    %1947 = vmatprep.subr.mxu0 0.0
    %1948 = vmatpush2.msra.mxu0 0.0
    %1949 = vmatprep.subr.mxu0 0.0
    %1950 = vmatpush2.msra.mxu0 0.0
    %1951 = vmatprep.subr.mxu0 0.0
    %1952 = vmatpush2.msra.mxu0 0.0
    %1953 = vmatprep.subr.mxu0 0.0
    %1954 = vmatpush2.msra.mxu0 0.0
    %1955 = vmatprep.subr.mxu0 0.0
    %1956 = vmatpush2.msra.mxu0 0.0
    %1957 = vmatprep.subr.mxu0 0.0
    %1958 = vmatpush2.msra.mxu0 0.0
    %1959 = vmatprep.subr.mxu0 0.0
    %1960 = vmatpush2.msra.mxu0 0.0
    %1961 = vmatprep.subr.mxu0 0.0
    %1962 = vmatpush2.msra.mxu0 0.0
    %1963 = vmatprep.subr.mxu0 0.0
    %1964 = vmatpush2.msra.mxu0 0.0
    %1965 = vmatprep.subr.mxu0 0.0
    %1966 = vmatpush2.msra.mxu0 0.0
    %1967 = vmatprep.subr.mxu0 0.0
    %1968 = vmatpush2.msra.mxu0 0.0
    %1969 = vmatprep.subr.mxu0 0.0
    %1970 = vmatpush2.msra.mxu0 0.0
    %1971 = vmatprep.subr.mxu0 0.0
    %1972 = vmatpush2.msra.mxu0 0.0
    %1973 = vmatprep.subr.mxu0 0.0
    %1974 = vmatpush2.msra.mxu0 0.0
    %1975 = vmatprep.subr.mxu0 0.0
    %1976 = vmatpush2.msra.mxu0 0.0
    %1977 = vmatprep.subr.mxu0 0.0
    %1978 = vmatpush2.msra.mxu0 0.0
    %1979 = vmatprep.mubr.f32.mxu0 0.0
    %1980 = vmatmul.mubr.f32.gmra.mxu0 %v1840
    %v1981 = vpop.f32.mrf.mxu0
    %v1982 = vadd.f32 %v1903, %v1981
    %v1983 = vpop.f32.mrf.mxu0
    %v1984 = vadd.f32 %v1907, %v1983
    %1985 = vmatprep.mubr.f32.mxu0 0.0
    %1986 = vmatmul.mubr.f32.gmra.mxu0 %v1841
    %v1987 = vpop.f32.mrf.mxu0
    %v1988 = vadd.f32 %v1903, %v1987
    %v1989 = vpop.f32.mrf.mxu0
    %v1990 = vadd.f32 %v1907, %v1989
    %1991 = vmatprep.mubr.f32.mxu0 0.0
    %1992 = vmatmul.mubr.f32.gmra.mxu0 %v1842
    %v1993 = vpop.f32.mrf.mxu0
    %v1994 = vadd.f32 %v1903, %v1993
    %v1995 = vpop.f32.mrf.mxu0
    %v1996 = vadd.f32 %v1907, %v1995
    %1997 = vmatprep.mubr.f32.mxu0 0.0
    %1998 = vmatmul.mubr.f32.gmra.mxu0 %v1843
    %v1999 = vpop.f32.mrf.mxu0
    %v2000 = vadd.f32 %v1903, %v1999
    %v2001 = vpop.f32.mrf.mxu0
    %v2002 = vadd.f32 %v1907, %v2001
    %2003 = vmatprep.mubr.f32.mxu0 0.0
    %2004 = vmatmul.mubr.f32.gmra.mxu0 %v1844
    %v2005 = vpop.f32.mrf.mxu0
    %v2006 = vadd.f32 %v1903, %v2005
    %v2007 = vpop.f32.mrf.mxu0
    %v2008 = vadd.f32 %v1907, %v2007
    %2009 = vmatprep.mubr.f32.mxu0 0.0
    %2010 = vmatmul.mubr.f32.gmra.mxu0 %v1845
    %v2011 = vpop.f32.mrf.mxu0
    %v2012 = vadd.f32 %v1903, %v2011
    %v2013 = vpop.f32.mrf.mxu0
    %v2014 = vadd.f32 %v1907, %v2013
    %2015 = vmatprep.mubr.f32.mxu0 0.0
    %2016 = vmatmul.mubr.f32.gmra.mxu0 %v1846
    %v2017 = vpop.f32.mrf.mxu0
    %v2018 = vadd.f32 %v1903, %v2017
    %v2019 = vpop.f32.mrf.mxu0
    %v2020 = vadd.f32 %v1907, %v2019
    %2021 = vmatprep.mubr.f32.mxu0 0.0
    %2022 = vmatmul.mubr.f32.gmra.mxu0 %v1847
    %v2023 = vpop.f32.mrf.mxu0
    %v2024 = vadd.f32 %v1903, %v2023
    %v2025 = vpop.f32.mrf.mxu0
    %v2026 = vadd.f32 %v1907, %v2025
    %2027 = vdwg.mxu0
    %2028 = vmatprep.subr.mxu0 0.0
    %2029 = vmatpush1.msra.mxu0 %v1896
    %2030 = vmatprep.subr.mxu0 0.0
    %2031 = vmatpush1.msra.mxu0 %v1893
    %2032 = vmatprep.subr.mxu0 0.0
    %2033 = vmatpush1.msra.mxu0 %v1890
    %2034 = vmatprep.subr.mxu0 0.0
    %2035 = vmatpush1.msra.mxu0 %v1887
    %2036 = vmatprep.subr.mxu0 0.0
    %2037 = vmatpush1.msra.mxu0 %v1884
    %2038 = vmatprep.subr.mxu0 0.0
    %2039 = vmatpush1.msra.mxu0 %v1881
    %2040 = vmatprep.subr.mxu0 0.0
    %2041 = vmatpush1.msra.mxu0 %v1878
    %2042 = vmatprep.subr.mxu0 0.0
    %2043 = vmatpush1.msra.mxu0 %v1875
    %2044 = vmatprep.subr.mxu0 0.0
    %2045 = vmatpush1.msra.mxu0 %v1872
    %2046 = vmatprep.subr.mxu0 0.0
    %2047 = vmatpush1.msra.mxu0 %v1869
    %2048 = vmatprep.subr.mxu0 0.0
    %2049 = vmatpush1.msra.mxu0 %v1866
    %2050 = vmatprep.subr.mxu0 0.0
    %2051 = vmatpush1.msra.mxu0 %v1863
    %2052 = vmatprep.subr.mxu0 0.0
    %2053 = vmatpush1.msra.mxu0 %v1860
    %2054 = vmatprep.subr.mxu0 0.0
    %2055 = vmatpush1.msra.mxu0 %v1857
    %2056 = vmatprep.subr.mxu0 0.0
    %2057 = vmatpush1.msra.mxu0 %v1854
    %2058 = vmatprep.subr.mxu0 0.0
    %2059 = vmatpush1.msra.mxu0 %v1851
    %2060 = vmatprep.subr.mxu0 0.0
    %2061 = vmatpush2.msra.mxu0 0.0
    %2062 = vmatprep.subr.mxu0 0.0
    %2063 = vmatpush2.msra.mxu0 0.0
    %2064 = vmatprep.subr.mxu0 0.0
    %2065 = vmatpush2.msra.mxu0 0.0
    %2066 = vmatprep.subr.mxu0 0.0
    %2067 = vmatpush2.msra.mxu0 0.0
    %2068 = vmatprep.subr.mxu0 0.0
    %2069 = vmatpush2.msra.mxu0 0.0
    %2070 = vmatprep.subr.mxu0 0.0
    %2071 = vmatpush2.msra.mxu0 0.0
    %2072 = vmatprep.subr.mxu0 0.0
    %2073 = vmatpush2.msra.mxu0 0.0
    %2074 = vmatprep.subr.mxu0 0.0
    %2075 = vmatpush2.msra.mxu0 0.0
    %2076 = vmatprep.subr.mxu0 0.0
    %2077 = vmatpush2.msra.mxu0 0.0
    %2078 = vmatprep.subr.mxu0 0.0
    %2079 = vmatpush2.msra.mxu0 0.0
    %2080 = vmatprep.subr.mxu0 0.0
    %2081 = vmatpush2.msra.mxu0 0.0
    %2082 = vmatprep.subr.mxu0 0.0
    %2083 = vmatpush2.msra.mxu0 0.0
    %2084 = vmatprep.subr.mxu0 0.0
    %2085 = vmatpush2.msra.mxu0 0.0
    %2086 = vmatprep.subr.mxu0 0.0
    %2087 = vmatpush2.msra.mxu0 0.0
    %2088 = vmatprep.subr.mxu0 0.0
    %2089 = vmatpush2.msra.mxu0 0.0
    %2090 = vmatprep.subr.mxu0 0.0
    %2091 = vmatpush2.msra.mxu0 0.0
    %2092 = vmatprep.mubr.f32.mxu0 0.0
    %2093 = vmatmul.mubr.f32.gmra.mxu0 %v1840
    %v2094 = vpop.f32.mrf.mxu0
    %v2095 = vadd.f32 %v1911, %v2094
    %v2096 = vpop.f32.mrf.mxu0
    %2097 = vmatprep.mubr.f32.mxu0 0.0
    %2098 = vmatmul.mubr.f32.gmra.mxu0 %v1841
    %v2099 = vpop.f32.mrf.mxu0
    %v2100 = vadd.f32 %v1911, %v2099
    %v2101 = vpop.f32.mrf.mxu0
    %2102 = vmatprep.mubr.f32.mxu0 0.0
    %2103 = vmatmul.mubr.f32.gmra.mxu0 %v1842
    %v2104 = vpop.f32.mrf.mxu0
    %v2105 = vadd.f32 %v1911, %v2104
    %v2106 = vpop.f32.mrf.mxu0
    %2107 = vmatprep.mubr.f32.mxu0 0.0
    %2108 = vmatmul.mubr.f32.gmra.mxu0 %v1843
    %v2109 = vpop.f32.mrf.mxu0
    %v2110 = vadd.f32 %v1911, %v2109
    %v2111 = vpop.f32.mrf.mxu0
    %2112 = vmatprep.mubr.f32.mxu0 0.0
    %2113 = vmatmul.mubr.f32.gmra.mxu0 %v1844
    %v2114 = vpop.f32.mrf.mxu0
    %v2115 = vadd.f32 %v1911, %v2114
    %v2116 = vpop.f32.mrf.mxu0
    %2117 = vmatprep.mubr.f32.mxu0 0.0
    %2118 = vmatmul.mubr.f32.gmra.mxu0 %v1845
    %v2119 = vpop.f32.mrf.mxu0
    %v2120 = vadd.f32 %v1911, %v2119
    %v2121 = vpop.f32.mrf.mxu0
    %2122 = vmatprep.mubr.f32.mxu0 0.0
    %2123 = vmatmul.mubr.f32.gmra.mxu0 %v1846
    %v2124 = vpop.f32.mrf.mxu0
    %v2125 = vadd.f32 %v1911, %v2124
    %v2126 = vpop.f32.mrf.mxu0
    %2127 = vmatprep.mubr.f32.mxu0 0.0
    %2128 = vmatmul.mubr.f32.gmra.mxu0 %v1847
    %v2129 = vpop.f32.mrf.mxu0
    %v2130 = vadd.f32 %v1911, %v2129
    %v2131 = vpop.f32.mrf.mxu0
    %2132 = vdwg.mxu0
    %2133 = vst [vmem:[#allocation3] sm:$0xff] %v1982
    %2134 = vst [vmem:[#allocation3 + $0x8] sm:$0xff] %v1984
    %2135 = vst [vmem:[#allocation3 + $0x10] sm:$0xff] %v2095
    %2136 = vst [vmem:[#allocation3 + $0x18] sm:$0xff] %v1988
    %2137 = vst [vmem:[#allocation3 + $0x20] sm:$0xff] %v1990
    %2138 = vst [vmem:[#allocation3 + $0x28] sm:$0xff] %v2100
    %2139 = vst [vmem:[#allocation3 + $0x30] sm:$0xff] %v1994
    %2140 = vst [vmem:[#allocation3 + $0x38] sm:$0xff] %v1996
    %2141 = vst [vmem:[#allocation3 + $0x40] sm:$0xff] %v2105
    %2142 = vst [vmem:[#allocation3 + $0x48] sm:$0xff] %v2000
    %2143 = vst [vmem:[#allocation3 + $0x50] sm:$0xff] %v2002
    %2144 = vst [vmem:[#allocation3 + $0x58] sm:$0xff] %v2110
    %2145 = vst [vmem:[#allocation3 + $0x60] sm:$0xff] %v2006
    %2146 = vst [vmem:[#allocation3 + $0x68] sm:$0xff] %v2008
    %2147 = vst [vmem:[#allocation3 + $0x70] sm:$0xff] %v2115
    %2148 = vst [vmem:[#allocation3 + $0x78] sm:$0xff] %v2012
    %2149 = vst [vmem:[#allocation3 + $0x80] sm:$0xff] %v2014
    %2150 = vst [vmem:[#allocation3 + $0x88] sm:$0xff] %v2120
    %2151 = vst [vmem:[#allocation3 + $0x90] sm:$0xff] %v2018
    %2152 = vst [vmem:[#allocation3 + $0x98] sm:$0xff] %v2020
    %2153 = vst [vmem:[#allocation3 + $0xa0] sm:$0xff] %v2125
    %2154 = vst [vmem:[#allocation3 + $0xa8] sm:$0xff] %v2024
    %2155 = vst [vmem:[#allocation3 + $0xb0] sm:$0xff] %v2026
    %2156 = vst [vmem:[#allocation3 + $0xb8] sm:$0xff] %v2130
    %s2157 = scalar_lea.vmem [#allocation10], 384
    %v2158 = vld [vmem:[%s2157] sm:$0xff]
    %v2159 = vld [vmem:[%s2157 + $0x8] sm:$0xff]
    %v2160 = vld [vmem:[%s2157 + $0x10] sm:$0xff]
    %v2161 = vld [vmem:[%s2157 + $0x18] sm:$0xff]
    %v2162 = vld [vmem:[%s2157 + $0x20] sm:$0xff]
    %v2163 = vld [vmem:[%s2157 + $0x28] sm:$0xff]
    %v2164 = vld [vmem:[%s2157 + $0x30] sm:$0xff]
    %v2165 = vld [vmem:[%s2157 + $0x38] sm:$0xff]
    %v2166 = vld [vmem:[%s2157 + $0x40] sm:$0xff]
    %v2167 = vld [vmem:[%s2157 + $0x48] sm:$0xff]
    %v2168 = vld [vmem:[%s2157 + $0x50] sm:$0xff]
    %v2169 = vld [vmem:[%s2157 + $0x58] sm:$0xff]
    %v2170 = vld [vmem:[%s2157 + $0x60] sm:$0xff]
    %v2171 = vld [vmem:[%s2157 + $0x68] sm:$0xff]
    %v2172 = vld [vmem:[%s2157 + $0x70] sm:$0xff]
    %v2173 = vld [vmem:[%s2157 + $0x78] sm:$0xff]
    %v2174 = vld [vmem:[%s2157 + $0x80] sm:$0xff]
    %v2175 = vld [vmem:[%s2157 + $0x88] sm:$0xff]
    %v2176 = vld [vmem:[%s2157 + $0x90] sm:$0xff]
    %v2177 = vld [vmem:[%s2157 + $0x98] sm:$0xff]
    %v2178 = vld [vmem:[%s2157 + $0xa0] sm:$0xff]
    %v2179 = vld [vmem:[%s2157 + $0xa8] sm:$0xff]
    %v2180 = vld [vmem:[%s2157 + $0xb0] sm:$0xff]
    %v2181 = vld [vmem:[%s2157 + $0xb8] sm:$0xff]
    %v2182 = vld [vmem:[%s2157 + $0xc0] sm:$0xff]
    %v2183 = vld [vmem:[%s2157 + $0xc8] sm:$0xff]
    %v2184 = vld [vmem:[%s2157 + $0xd0] sm:$0xff]
    %v2185 = vld [vmem:[%s2157 + $0xd8] sm:$0xff]
    %v2186 = vld [vmem:[%s2157 + $0xe0] sm:$0xff]
    %v2187 = vld [vmem:[%s2157 + $0xe8] sm:$0xff]
    %v2188 = vld [vmem:[%s2157 + $0xf0] sm:$0xff]
    %v2189 = vld [vmem:[%s2157 + $0xf8] sm:$0xff]
    %v2190 = vld [vmem:[%s2157 + $0x100] sm:$0xff]
    %v2191 = vld [vmem:[%s2157 + $0x108] sm:$0xff]
    %v2192 = vld [vmem:[%s2157 + $0x110] sm:$0xff]
    %v2193 = vld [vmem:[%s2157 + $0x118] sm:$0xff]
    %v2194 = vld [vmem:[%s2157 + $0x120] sm:$0xff]
    %v2195 = vld [vmem:[%s2157 + $0x128] sm:$0xff]
    %v2196 = vld [vmem:[%s2157 + $0x130] sm:$0xff]
    %v2197 = vld [vmem:[%s2157 + $0x138] sm:$0xff]
    %v2198 = vld [vmem:[%s2157 + $0x140] sm:$0xff]
    %v2199 = vld [vmem:[%s2157 + $0x148] sm:$0xff]
    %v2200 = vld [vmem:[%s2157 + $0x150] sm:$0xff]
    %v2201 = vld [vmem:[%s2157 + $0x158] sm:$0xff]
    %v2202 = vld [vmem:[%s2157 + $0x160] sm:$0xff]
    %v2203 = vld [vmem:[%s2157 + $0x168] sm:$0xff]
    %v2204 = vld [vmem:[%s2157 + $0x170] sm:$0xff]
    %v2205 = vld [vmem:[%s2157 + $0x178] sm:$0xff]
    %s2206 = scalar_lea.vmem %s5, 1
    %v2207 = vld [vmem:[%s2206] sm:$0x1]
    %s2208 = scalar_lea.vmem [#allocation7], 8
    %v2209 = vld [vmem:[%s2208] sm:$0xff]
    %v2210 = vld [vmem:[#allocation3] sm:$0xff]
    %v2211 = vld [vmem:[#allocation3 + $0x8] sm:$0xff]
    %v2212 = vld [vmem:[#allocation3 + $0x10] sm:$0xff]
    %2213 = vmatprep.subr.mxu0 %v2204
    %2214 = vmatpush1.msra.mxu0 %v2203
    %2215 = vmatprep.subr.mxu0 %v2201
    %2216 = vmatpush1.msra.mxu0 %v2200
    %2217 = vmatprep.subr.mxu0 %v2198
    %2218 = vmatpush1.msra.mxu0 %v2197
    %2219 = vmatprep.subr.mxu0 %v2195
    %2220 = vmatpush1.msra.mxu0 %v2194
    %2221 = vmatprep.subr.mxu0 %v2192
    %2222 = vmatpush1.msra.mxu0 %v2191
    %2223 = vmatprep.subr.mxu0 %v2189
    %2224 = vmatpush1.msra.mxu0 %v2188
    %2225 = vmatprep.subr.mxu0 %v2186
    %2226 = vmatpush1.msra.mxu0 %v2185
    %2227 = vmatprep.subr.mxu0 %v2183
    %2228 = vmatpush1.msra.mxu0 %v2182
    %2229 = vmatprep.subr.mxu0 %v2180
    %2230 = vmatpush1.msra.mxu0 %v2179
    %2231 = vmatprep.subr.mxu0 %v2177
    %2232 = vmatpush1.msra.mxu0 %v2176
    %2233 = vmatprep.subr.mxu0 %v2174
    %2234 = vmatpush1.msra.mxu0 %v2173
    %2235 = vmatprep.subr.mxu0 %v2171
    %2236 = vmatpush1.msra.mxu0 %v2170
    %2237 = vmatprep.subr.mxu0 %v2168
    %2238 = vmatpush1.msra.mxu0 %v2167
    %2239 = vmatprep.subr.mxu0 %v2165
    %2240 = vmatpush1.msra.mxu0 %v2164
    %2241 = vmatprep.subr.mxu0 %v2162
    %2242 = vmatpush1.msra.mxu0 %v2161
    %2243 = vmatprep.subr.mxu0 %v2159
    %2244 = vmatpush1.msra.mxu0 %v2158
    %2245 = vmatprep.subr.mxu0 0.0
    %2246 = vmatpush2.msra.mxu0 0.0
    %2247 = vmatprep.subr.mxu0 0.0
    %2248 = vmatpush2.msra.mxu0 0.0
    %2249 = vmatprep.subr.mxu0 0.0
    %2250 = vmatpush2.msra.mxu0 0.0
    %2251 = vmatprep.subr.mxu0 0.0
    %2252 = vmatpush2.msra.mxu0 0.0
    %2253 = vmatprep.subr.mxu0 0.0
    %2254 = vmatpush2.msra.mxu0 0.0
    %2255 = vmatprep.subr.mxu0 0.0
    %2256 = vmatpush2.msra.mxu0 0.0
    %2257 = vmatprep.subr.mxu0 0.0
    %2258 = vmatpush2.msra.mxu0 0.0
    %2259 = vmatprep.subr.mxu0 0.0
    %2260 = vmatpush2.msra.mxu0 0.0
    %2261 = vmatprep.subr.mxu0 0.0
    %2262 = vmatpush2.msra.mxu0 0.0
    %2263 = vmatprep.subr.mxu0 0.0
    %2264 = vmatpush2.msra.mxu0 0.0
    %2265 = vmatprep.subr.mxu0 0.0
    %2266 = vmatpush2.msra.mxu0 0.0
    %2267 = vmatprep.subr.mxu0 0.0
    %2268 = vmatpush2.msra.mxu0 0.0
    %2269 = vmatprep.subr.mxu0 0.0
    %2270 = vmatpush2.msra.mxu0 0.0
    %2271 = vmatprep.subr.mxu0 0.0
    %2272 = vmatpush2.msra.mxu0 0.0
    %2273 = vmatprep.subr.mxu0 0.0
    %2274 = vmatpush2.msra.mxu0 0.0
    %2275 = vmatprep.subr.mxu0 0.0
    %2276 = vmatpush2.msra.mxu0 0.0
    %2277 = vmatprep.mubr.f32.mxu0 0.0
    %2278 = vmatmul.mubr.f32.gmra.mxu0 %v2209
    %v2279 = vpop.f32.mrf.mxu0
    %v2280 = vadd.f32 0.0, %v2279
    %v2281 = vpop.f32.mrf.mxu0
    %v2282 = vadd.f32 0.0, %v2281
    %2283 = vdwg.mxu0
    %2284 = vmatprep.subr.mxu0 0.0
    %2285 = vmatpush1.msra.mxu0 %v2205
    %2286 = vmatprep.subr.mxu0 0.0
    %2287 = vmatpush1.msra.mxu0 %v2202
    %2288 = vmatprep.subr.mxu0 0.0
    %2289 = vmatpush1.msra.mxu0 %v2199
    %2290 = vmatprep.subr.mxu0 0.0
    %2291 = vmatpush1.msra.mxu0 %v2196
    %2292 = vmatprep.subr.mxu0 0.0
    %2293 = vmatpush1.msra.mxu0 %v2193
    %2294 = vmatprep.subr.mxu0 0.0
    %2295 = vmatpush1.msra.mxu0 %v2190
    %2296 = vmatprep.subr.mxu0 0.0
    %2297 = vmatpush1.msra.mxu0 %v2187
    %2298 = vmatprep.subr.mxu0 0.0
    %2299 = vmatpush1.msra.mxu0 %v2184
    %2300 = vmatprep.subr.mxu0 0.0
    %2301 = vmatpush1.msra.mxu0 %v2181
    %2302 = vmatprep.subr.mxu0 0.0
    %2303 = vmatpush1.msra.mxu0 %v2178
    %2304 = vmatprep.subr.mxu0 0.0
    %2305 = vmatpush1.msra.mxu0 %v2175
    %2306 = vmatprep.subr.mxu0 0.0
    %2307 = vmatpush1.msra.mxu0 %v2172
    %2308 = vmatprep.subr.mxu0 0.0
    %2309 = vmatpush1.msra.mxu0 %v2169
    %2310 = vmatprep.subr.mxu0 0.0
    %2311 = vmatpush1.msra.mxu0 %v2166
    %2312 = vmatprep.subr.mxu0 0.0
    %2313 = vmatpush1.msra.mxu0 %v2163
    %2314 = vmatprep.subr.mxu0 0.0
    %2315 = vmatpush1.msra.mxu0 %v2160
    %2316 = vmatprep.subr.mxu0 0.0
    %2317 = vmatpush2.msra.mxu0 0.0
    %2318 = vmatprep.subr.mxu0 0.0
    %2319 = vmatpush2.msra.mxu0 0.0
    %2320 = vmatprep.subr.mxu0 0.0
    %2321 = vmatpush2.msra.mxu0 0.0
    %2322 = vmatprep.subr.mxu0 0.0
    %2323 = vmatpush2.msra.mxu0 0.0
    %2324 = vmatprep.subr.mxu0 0.0
    %2325 = vmatpush2.msra.mxu0 0.0
    %2326 = vmatprep.subr.mxu0 0.0
    %2327 = vmatpush2.msra.mxu0 0.0
    %2328 = vmatprep.subr.mxu0 0.0
    %2329 = vmatpush2.msra.mxu0 0.0
    %2330 = vmatprep.subr.mxu0 0.0
    %2331 = vmatpush2.msra.mxu0 0.0
    %2332 = vmatprep.subr.mxu0 0.0
    %2333 = vmatpush2.msra.mxu0 0.0
    %2334 = vmatprep.subr.mxu0 0.0
    %2335 = vmatpush2.msra.mxu0 0.0
    %2336 = vmatprep.subr.mxu0 0.0
    %2337 = vmatpush2.msra.mxu0 0.0
    %2338 = vmatprep.subr.mxu0 0.0
    %2339 = vmatpush2.msra.mxu0 0.0
    %2340 = vmatprep.subr.mxu0 0.0
    %2341 = vmatpush2.msra.mxu0 0.0
    %2342 = vmatprep.subr.mxu0 0.0
    %2343 = vmatpush2.msra.mxu0 0.0
    %2344 = vmatprep.subr.mxu0 0.0
    %2345 = vmatpush2.msra.mxu0 0.0
    %2346 = vmatprep.subr.mxu0 0.0
    %2347 = vmatpush2.msra.mxu0 0.0
    %2348 = vmatprep.mubr.f32.mxu0 0.0
    %2349 = vmatmul.mubr.f32.gmra.mxu0 %v2209
    %v2350 = vpop.f32.mrf.mxu0
    %v2351 = vadd.f32 0.0, %v2350
    %v2352 = vpop.f32.mrf.mxu0
    %2353 = vdwg.mxu0
    %v2354 = vadd.f32 %v2210, %v2280
    %v2355 = vxor.u32 %v2354, 2147483648
    %v2356 = vmul.f32 %v2355, 1.442695
    %v2357 = vpow.pop %v2356
    %v2358 = vadd.f32 %v2357, 1.0
    %v2359 = vrcp.pop %v2358
    %v2360 = vmul.f32 1.0, %v2359
    %v2361 = vadd.f32 %v2211, %v2282
    %v2362 = vxor.u32 %v2361, 2147483648
    %v2363 = vmul.f32 %v2362, 1.442695
    %v2364 = vpow.pop %v2363
    %v2365 = vadd.f32 %v2364, 1.0
    %v2366 = vrcp.pop %v2365
    %v2367 = vmul.f32 1.0, %v2366
    %v2369 = vlaneseq
    %v2370 = vshrl.u32 %v2369, 7
    %v2371 = vsub.s32 0, %v2370
    %v2372 = vrot.slane %v2207, %v2371
    %v2374 = vadd.f32 %v2351, %v2372
    %v2375 = vmul.f32 %v2360, %v2374
    %v2376 = vadd.f32 %v2212, %v2375
    %v2377 = vtanh.pop %v2376
    %v2378 = vsub.f32 1.0, %v2367
    %v2379 = vmul.f32 %v2378, %v2377
    %v2380 = vmul.f32 %v2367, %v2209
    %v2381 = vadd.f32 %v2379, %v2380
    %2382 = vst [vmem:[#allocation2] sm:$0xff] %v2381
    %v2383 = vld [vmem:[%s656] sm:$0xff]
    %v2384 = vld [vmem:[%s656 + $0x8] sm:$0xff]
    %v2385 = vld [vmem:[%s656 + $0x10] sm:$0xff]
    %2386 = vmatprep.subr.mxu0 %v2204
    %2387 = vmatpush1.msra.mxu0 %v2203
    %2388 = vmatprep.subr.mxu0 %v2201
    %2389 = vmatpush1.msra.mxu0 %v2200
    %2390 = vmatprep.subr.mxu0 %v2198
    %2391 = vmatpush1.msra.mxu0 %v2197
    %2392 = vmatprep.subr.mxu0 %v2195
    %2393 = vmatpush1.msra.mxu0 %v2194
    %2394 = vmatprep.subr.mxu0 %v2192
    %2395 = vmatpush1.msra.mxu0 %v2191
    %2396 = vmatprep.subr.mxu0 %v2189
    %2397 = vmatpush1.msra.mxu0 %v2188
    %2398 = vmatprep.subr.mxu0 %v2186
    %2399 = vmatpush1.msra.mxu0 %v2185
    %2400 = vmatprep.subr.mxu0 %v2183
    %2401 = vmatpush1.msra.mxu0 %v2182
    %2402 = vmatprep.subr.mxu0 %v2180
    %2403 = vmatpush1.msra.mxu0 %v2179
    %2404 = vmatprep.subr.mxu0 %v2177
    %2405 = vmatpush1.msra.mxu0 %v2176
    %2406 = vmatprep.subr.mxu0 %v2174
    %2407 = vmatpush1.msra.mxu0 %v2173
    %2408 = vmatprep.subr.mxu0 %v2171
    %2409 = vmatpush1.msra.mxu0 %v2170
    %2410 = vmatprep.subr.mxu0 %v2168
    %2411 = vmatpush1.msra.mxu0 %v2167
    %2412 = vmatprep.subr.mxu0 %v2165
    %2413 = vmatpush1.msra.mxu0 %v2164
    %2414 = vmatprep.subr.mxu0 %v2162
    %2415 = vmatpush1.msra.mxu0 %v2161
    %2416 = vmatprep.subr.mxu0 %v2159
    %2417 = vmatpush1.msra.mxu0 %v2158
    %2418 = vmatprep.subr.mxu0 0.0
    %2419 = vmatpush2.msra.mxu0 0.0
    %2420 = vmatprep.subr.mxu0 0.0
    %2421 = vmatpush2.msra.mxu0 0.0
    %2422 = vmatprep.subr.mxu0 0.0
    %2423 = vmatpush2.msra.mxu0 0.0
    %2424 = vmatprep.subr.mxu0 0.0
    %2425 = vmatpush2.msra.mxu0 0.0
    %2426 = vmatprep.subr.mxu0 0.0
    %2427 = vmatpush2.msra.mxu0 0.0
    %2428 = vmatprep.subr.mxu0 0.0
    %2429 = vmatpush2.msra.mxu0 0.0
    %2430 = vmatprep.subr.mxu0 0.0
    %2431 = vmatpush2.msra.mxu0 0.0
    %2432 = vmatprep.subr.mxu0 0.0
    %2433 = vmatpush2.msra.mxu0 0.0
    %2434 = vmatprep.subr.mxu0 0.0
    %2435 = vmatpush2.msra.mxu0 0.0
    %2436 = vmatprep.subr.mxu0 0.0
    %2437 = vmatpush2.msra.mxu0 0.0
    %2438 = vmatprep.subr.mxu0 0.0
    %2439 = vmatpush2.msra.mxu0 0.0
    %2440 = vmatprep.subr.mxu0 0.0
    %2441 = vmatpush2.msra.mxu0 0.0
    %2442 = vmatprep.subr.mxu0 0.0
    %2443 = vmatpush2.msra.mxu0 0.0
    %2444 = vmatprep.subr.mxu0 0.0
    %2445 = vmatpush2.msra.mxu0 0.0
    %2446 = vmatprep.subr.mxu0 0.0
    %2447 = vmatpush2.msra.mxu0 0.0
    %2448 = vmatprep.subr.mxu0 0.0
    %2449 = vmatpush2.msra.mxu0 0.0
    %2450 = vmatprep.mubr.f32.mxu0 0.0
    %2451 = vmatmul.mubr.f32.gmra.mxu0 %v2381
    %v2452 = vpop.f32.mrf.mxu0
    %v2453 = vadd.f32 0.0, %v2452
    %v2454 = vpop.f32.mrf.mxu0
    %v2455 = vadd.f32 0.0, %v2454
    %2456 = vdwg.mxu0
    %2457 = vmatprep.subr.mxu0 0.0
    %2458 = vmatpush1.msra.mxu0 %v2205
    %2459 = vmatprep.subr.mxu0 0.0
    %2460 = vmatpush1.msra.mxu0 %v2202
    %2461 = vmatprep.subr.mxu0 0.0
    %2462 = vmatpush1.msra.mxu0 %v2199
    %2463 = vmatprep.subr.mxu0 0.0
    %2464 = vmatpush1.msra.mxu0 %v2196
    %2465 = vmatprep.subr.mxu0 0.0
    %2466 = vmatpush1.msra.mxu0 %v2193
    %2467 = vmatprep.subr.mxu0 0.0
    %2468 = vmatpush1.msra.mxu0 %v2190
    %2469 = vmatprep.subr.mxu0 0.0
    %2470 = vmatpush1.msra.mxu0 %v2187
    %2471 = vmatprep.subr.mxu0 0.0
    %2472 = vmatpush1.msra.mxu0 %v2184
    %2473 = vmatprep.subr.mxu0 0.0
    %2474 = vmatpush1.msra.mxu0 %v2181
    %2475 = vmatprep.subr.mxu0 0.0
    %2476 = vmatpush1.msra.mxu0 %v2178
    %2477 = vmatprep.subr.mxu0 0.0
    %2478 = vmatpush1.msra.mxu0 %v2175
    %2479 = vmatprep.subr.mxu0 0.0
    %2480 = vmatpush1.msra.mxu0 %v2172
    %2481 = vmatprep.subr.mxu0 0.0
    %2482 = vmatpush1.msra.mxu0 %v2169
    %2483 = vmatprep.subr.mxu0 0.0
    %2484 = vmatpush1.msra.mxu0 %v2166
    %2485 = vmatprep.subr.mxu0 0.0
    %2486 = vmatpush1.msra.mxu0 %v2163
    %2487 = vmatprep.subr.mxu0 0.0
    %2488 = vmatpush1.msra.mxu0 %v2160
    %2489 = vmatprep.subr.mxu0 0.0
    %2490 = vmatpush2.msra.mxu0 0.0
    %2491 = vmatprep.subr.mxu0 0.0
    %2492 = vmatpush2.msra.mxu0 0.0
    %2493 = vmatprep.subr.mxu0 0.0
    %2494 = vmatpush2.msra.mxu0 0.0
    %2495 = vmatprep.subr.mxu0 0.0
    %2496 = vmatpush2.msra.mxu0 0.0
    %2497 = vmatprep.subr.mxu0 0.0
    %2498 = vmatpush2.msra.mxu0 0.0
    %2499 = vmatprep.subr.mxu0 0.0
    %2500 = vmatpush2.msra.mxu0 0.0
    %2501 = vmatprep.subr.mxu0 0.0
    %2502 = vmatpush2.msra.mxu0 0.0
    %2503 = vmatprep.subr.mxu0 0.0
    %2504 = vmatpush2.msra.mxu0 0.0
    %2505 = vmatprep.subr.mxu0 0.0
    %2506 = vmatpush2.msra.mxu0 0.0
    %2507 = vmatprep.subr.mxu0 0.0
    %2508 = vmatpush2.msra.mxu0 0.0
    %2509 = vmatprep.subr.mxu0 0.0
    %2510 = vmatpush2.msra.mxu0 0.0
    %2511 = vmatprep.subr.mxu0 0.0
    %2512 = vmatpush2.msra.mxu0 0.0
    %2513 = vmatprep.subr.mxu0 0.0
    %2514 = vmatpush2.msra.mxu0 0.0
    %2515 = vmatprep.subr.mxu0 0.0
    %2516 = vmatpush2.msra.mxu0 0.0
    %2517 = vmatprep.subr.mxu0 0.0
    %2518 = vmatpush2.msra.mxu0 0.0
    %2519 = vmatprep.subr.mxu0 0.0
    %2520 = vmatpush2.msra.mxu0 0.0
    %2521 = vmatprep.mubr.f32.mxu0 0.0
    %2522 = vmatmul.mubr.f32.gmra.mxu0 %v2381
    %v2523 = vpop.f32.mrf.mxu0
    %v2524 = vadd.f32 0.0, %v2523
    %v2525 = vpop.f32.mrf.mxu0
    %2526 = vdwg.mxu0
    %v2527 = vadd.f32 %v2383, %v2453
    %v2528 = vxor.u32 %v2527, 2147483648
    %v2529 = vmul.f32 %v2528, 1.442695
    %v2530 = vpow.pop %v2529
    %v2531 = vadd.f32 %v2530, 1.0
    %v2532 = vrcp.pop %v2531
    %v2533 = vmul.f32 1.0, %v2532
    %v2534 = vadd.f32 %v2384, %v2455
    %v2535 = vxor.u32 %v2534, 2147483648
    %v2536 = vmul.f32 %v2535, 1.442695
    %v2537 = vpow.pop %v2536
    %v2538 = vadd.f32 %v2537, 1.0
    %v2539 = vrcp.pop %v2538
    %v2540 = vmul.f32 1.0, %v2539
    %v2541 = vadd.f32 %v2524, %v2372
    %v2542 = vmul.f32 %v2533, %v2541
    %v2543 = vadd.f32 %v2385, %v2542
    %v2544 = vtanh.pop %v2543
    %v2545 = vsub.f32 1.0, %v2540
    %v2546 = vmul.f32 %v2545, %v2544
    %v2547 = vmul.f32 %v2540, %v2381
    %v2548 = vadd.f32 %v2546, %v2547
    %2549 = vst [vmem:[%s823] sm:$0xff] %v2548
    %v2550 = vld [vmem:[%s825] sm:$0xff]
    %v2551 = vld [vmem:[%s825 + $0x8] sm:$0xff]
    %v2552 = vld [vmem:[%s825 + $0x10] sm:$0xff]
    %2553 = vmatprep.subr.mxu0 %v2204
    %2554 = vmatpush1.msra.mxu0 %v2203
    %2555 = vmatprep.subr.mxu0 %v2201
    %2556 = vmatpush1.msra.mxu0 %v2200
    %2557 = vmatprep.subr.mxu0 %v2198
    %2558 = vmatpush1.msra.mxu0 %v2197
    %2559 = vmatprep.subr.mxu0 %v2195
    %2560 = vmatpush1.msra.mxu0 %v2194
    %2561 = vmatprep.subr.mxu0 %v2192
    %2562 = vmatpush1.msra.mxu0 %v2191
    %2563 = vmatprep.subr.mxu0 %v2189
    %2564 = vmatpush1.msra.mxu0 %v2188
    %2565 = vmatprep.subr.mxu0 %v2186
    %2566 = vmatpush1.msra.mxu0 %v2185
    %2567 = vmatprep.subr.mxu0 %v2183
    %2568 = vmatpush1.msra.mxu0 %v2182
    %2569 = vmatprep.subr.mxu0 %v2180
    %2570 = vmatpush1.msra.mxu0 %v2179
    %2571 = vmatprep.subr.mxu0 %v2177
    %2572 = vmatpush1.msra.mxu0 %v2176
    %2573 = vmatprep.subr.mxu0 %v2174
    %2574 = vmatpush1.msra.mxu0 %v2173
    %2575 = vmatprep.subr.mxu0 %v2171
    %2576 = vmatpush1.msra.mxu0 %v2170
    %2577 = vmatprep.subr.mxu0 %v2168
    %2578 = vmatpush1.msra.mxu0 %v2167
    %2579 = vmatprep.subr.mxu0 %v2165
    %2580 = vmatpush1.msra.mxu0 %v2164
    %2581 = vmatprep.subr.mxu0 %v2162
    %2582 = vmatpush1.msra.mxu0 %v2161
    %2583 = vmatprep.subr.mxu0 %v2159
    %2584 = vmatpush1.msra.mxu0 %v2158
    %2585 = vmatprep.subr.mxu0 0.0
    %2586 = vmatpush2.msra.mxu0 0.0
    %2587 = vmatprep.subr.mxu0 0.0
    %2588 = vmatpush2.msra.mxu0 0.0
    %2589 = vmatprep.subr.mxu0 0.0
    %2590 = vmatpush2.msra.mxu0 0.0
    %2591 = vmatprep.subr.mxu0 0.0
    %2592 = vmatpush2.msra.mxu0 0.0
    %2593 = vmatprep.subr.mxu0 0.0
    %2594 = vmatpush2.msra.mxu0 0.0
    %2595 = vmatprep.subr.mxu0 0.0
    %2596 = vmatpush2.msra.mxu0 0.0
    %2597 = vmatprep.subr.mxu0 0.0
    %2598 = vmatpush2.msra.mxu0 0.0
    %2599 = vmatprep.subr.mxu0 0.0
    %2600 = vmatpush2.msra.mxu0 0.0
    %2601 = vmatprep.subr.mxu0 0.0
    %2602 = vmatpush2.msra.mxu0 0.0
    %2603 = vmatprep.subr.mxu0 0.0
    %2604 = vmatpush2.msra.mxu0 0.0
    %2605 = vmatprep.subr.mxu0 0.0
    %2606 = vmatpush2.msra.mxu0 0.0
    %2607 = vmatprep.subr.mxu0 0.0
    %2608 = vmatpush2.msra.mxu0 0.0
    %2609 = vmatprep.subr.mxu0 0.0
    %2610 = vmatpush2.msra.mxu0 0.0
    %2611 = vmatprep.subr.mxu0 0.0
    %2612 = vmatpush2.msra.mxu0 0.0
    %2613 = vmatprep.subr.mxu0 0.0
    %2614 = vmatpush2.msra.mxu0 0.0
    %2615 = vmatprep.subr.mxu0 0.0
    %2616 = vmatpush2.msra.mxu0 0.0
    %2617 = vmatprep.mubr.f32.mxu0 0.0
    %2618 = vmatmul.mubr.f32.gmra.mxu0 %v2548
    %v2619 = vpop.f32.mrf.mxu0
    %v2620 = vadd.f32 0.0, %v2619
    %v2621 = vpop.f32.mrf.mxu0
    %v2622 = vadd.f32 0.0, %v2621
    %2623 = vdwg.mxu0
    %2624 = vmatprep.subr.mxu0 0.0
    %2625 = vmatpush1.msra.mxu0 %v2205
    %2626 = vmatprep.subr.mxu0 0.0
    %2627 = vmatpush1.msra.mxu0 %v2202
    %2628 = vmatprep.subr.mxu0 0.0
    %2629 = vmatpush1.msra.mxu0 %v2199
    %2630 = vmatprep.subr.mxu0 0.0
    %2631 = vmatpush1.msra.mxu0 %v2196
    %2632 = vmatprep.subr.mxu0 0.0
    %2633 = vmatpush1.msra.mxu0 %v2193
    %2634 = vmatprep.subr.mxu0 0.0
    %2635 = vmatpush1.msra.mxu0 %v2190
    %2636 = vmatprep.subr.mxu0 0.0
    %2637 = vmatpush1.msra.mxu0 %v2187
    %2638 = vmatprep.subr.mxu0 0.0
    %2639 = vmatpush1.msra.mxu0 %v2184
    %2640 = vmatprep.subr.mxu0 0.0
    %2641 = vmatpush1.msra.mxu0 %v2181
    %2642 = vmatprep.subr.mxu0 0.0
    %2643 = vmatpush1.msra.mxu0 %v2178
    %2644 = vmatprep.subr.mxu0 0.0
    %2645 = vmatpush1.msra.mxu0 %v2175
    %2646 = vmatprep.subr.mxu0 0.0
    %2647 = vmatpush1.msra.mxu0 %v2172
    %2648 = vmatprep.subr.mxu0 0.0
    %2649 = vmatpush1.msra.mxu0 %v2169
    %2650 = vmatprep.subr.mxu0 0.0
    %2651 = vmatpush1.msra.mxu0 %v2166
    %2652 = vmatprep.subr.mxu0 0.0
    %2653 = vmatpush1.msra.mxu0 %v2163
    %2654 = vmatprep.subr.mxu0 0.0
    %2655 = vmatpush1.msra.mxu0 %v2160
    %2656 = vmatprep.subr.mxu0 0.0
    %2657 = vmatpush2.msra.mxu0 0.0
    %2658 = vmatprep.subr.mxu0 0.0
    %2659 = vmatpush2.msra.mxu0 0.0
    %2660 = vmatprep.subr.mxu0 0.0
    %2661 = vmatpush2.msra.mxu0 0.0
    %2662 = vmatprep.subr.mxu0 0.0
    %2663 = vmatpush2.msra.mxu0 0.0
    %2664 = vmatprep.subr.mxu0 0.0
    %2665 = vmatpush2.msra.mxu0 0.0
    %2666 = vmatprep.subr.mxu0 0.0
    %2667 = vmatpush2.msra.mxu0 0.0
    %2668 = vmatprep.subr.mxu0 0.0
    %2669 = vmatpush2.msra.mxu0 0.0
    %2670 = vmatprep.subr.mxu0 0.0
    %2671 = vmatpush2.msra.mxu0 0.0
    %2672 = vmatprep.subr.mxu0 0.0
    %2673 = vmatpush2.msra.mxu0 0.0
    %2674 = vmatprep.subr.mxu0 0.0
    %2675 = vmatpush2.msra.mxu0 0.0
    %2676 = vmatprep.subr.mxu0 0.0
    %2677 = vmatpush2.msra.mxu0 0.0
    %2678 = vmatprep.subr.mxu0 0.0
    %2679 = vmatpush2.msra.mxu0 0.0
    %2680 = vmatprep.subr.mxu0 0.0
    %2681 = vmatpush2.msra.mxu0 0.0
    %2682 = vmatprep.subr.mxu0 0.0
    %2683 = vmatpush2.msra.mxu0 0.0
    %2684 = vmatprep.subr.mxu0 0.0
    %2685 = vmatpush2.msra.mxu0 0.0
    %2686 = vmatprep.subr.mxu0 0.0
    %2687 = vmatpush2.msra.mxu0 0.0
    %2688 = vmatprep.mubr.f32.mxu0 0.0
    %2689 = vmatmul.mubr.f32.gmra.mxu0 %v2548
    %v2690 = vpop.f32.mrf.mxu0
    %v2691 = vadd.f32 0.0, %v2690
    %v2692 = vpop.f32.mrf.mxu0
    %2693 = vdwg.mxu0
    %v2694 = vadd.f32 %v2550, %v2620
    %v2695 = vxor.u32 %v2694, 2147483648
    %v2696 = vmul.f32 %v2695, 1.442695
    %v2697 = vpow.pop %v2696
    %v2698 = vadd.f32 %v2697, 1.0
    %v2699 = vrcp.pop %v2698
    %v2700 = vmul.f32 1.0, %v2699
    %v2701 = vadd.f32 %v2551, %v2622
    %v2702 = vxor.u32 %v2701, 2147483648
    %v2703 = vmul.f32 %v2702, 1.442695
    %v2704 = vpow.pop %v2703
    %v2705 = vadd.f32 %v2704, 1.0
    %v2706 = vrcp.pop %v2705
    %v2707 = vmul.f32 1.0, %v2706
    %v2708 = vadd.f32 %v2691, %v2372
    %v2709 = vmul.f32 %v2700, %v2708
    %v2710 = vadd.f32 %v2552, %v2709
    %v2711 = vtanh.pop %v2710
    %v2712 = vsub.f32 1.0, %v2707
    %v2713 = vmul.f32 %v2712, %v2711
    %v2714 = vmul.f32 %v2707, %v2548
    %v2715 = vadd.f32 %v2713, %v2714
    %2716 = vst [vmem:[%s992] sm:$0xff] %v2715
    %v2717 = vld [vmem:[%s994] sm:$0xff]
    %v2718 = vld [vmem:[%s994 + $0x8] sm:$0xff]
    %v2719 = vld [vmem:[%s994 + $0x10] sm:$0xff]
    %2720 = vmatprep.subr.mxu0 %v2204
    %2721 = vmatpush1.msra.mxu0 %v2203
    %2722 = vmatprep.subr.mxu0 %v2201
    %2723 = vmatpush1.msra.mxu0 %v2200
    %2724 = vmatprep.subr.mxu0 %v2198
    %2725 = vmatpush1.msra.mxu0 %v2197
    %2726 = vmatprep.subr.mxu0 %v2195
    %2727 = vmatpush1.msra.mxu0 %v2194
    %2728 = vmatprep.subr.mxu0 %v2192
    %2729 = vmatpush1.msra.mxu0 %v2191
    %2730 = vmatprep.subr.mxu0 %v2189
    %2731 = vmatpush1.msra.mxu0 %v2188
    %2732 = vmatprep.subr.mxu0 %v2186
    %2733 = vmatpush1.msra.mxu0 %v2185
    %2734 = vmatprep.subr.mxu0 %v2183
    %2735 = vmatpush1.msra.mxu0 %v2182
    %2736 = vmatprep.subr.mxu0 %v2180
    %2737 = vmatpush1.msra.mxu0 %v2179
    %2738 = vmatprep.subr.mxu0 %v2177
    %2739 = vmatpush1.msra.mxu0 %v2176
    %2740 = vmatprep.subr.mxu0 %v2174
    %2741 = vmatpush1.msra.mxu0 %v2173
    %2742 = vmatprep.subr.mxu0 %v2171
    %2743 = vmatpush1.msra.mxu0 %v2170
    %2744 = vmatprep.subr.mxu0 %v2168
    %2745 = vmatpush1.msra.mxu0 %v2167
    %2746 = vmatprep.subr.mxu0 %v2165
    %2747 = vmatpush1.msra.mxu0 %v2164
    %2748 = vmatprep.subr.mxu0 %v2162
    %2749 = vmatpush1.msra.mxu0 %v2161
    %2750 = vmatprep.subr.mxu0 %v2159
    %2751 = vmatpush1.msra.mxu0 %v2158
    %2752 = vmatprep.subr.mxu0 0.0
    %2753 = vmatpush2.msra.mxu0 0.0
    %2754 = vmatprep.subr.mxu0 0.0
    %2755 = vmatpush2.msra.mxu0 0.0
    %2756 = vmatprep.subr.mxu0 0.0
    %2757 = vmatpush2.msra.mxu0 0.0
    %2758 = vmatprep.subr.mxu0 0.0
    %2759 = vmatpush2.msra.mxu0 0.0
    %2760 = vmatprep.subr.mxu0 0.0
    %2761 = vmatpush2.msra.mxu0 0.0
    %2762 = vmatprep.subr.mxu0 0.0
    %2763 = vmatpush2.msra.mxu0 0.0
    %2764 = vmatprep.subr.mxu0 0.0
    %2765 = vmatpush2.msra.mxu0 0.0
    %2766 = vmatprep.subr.mxu0 0.0
    %2767 = vmatpush2.msra.mxu0 0.0
    %2768 = vmatprep.subr.mxu0 0.0
    %2769 = vmatpush2.msra.mxu0 0.0
    %2770 = vmatprep.subr.mxu0 0.0
    %2771 = vmatpush2.msra.mxu0 0.0
    %2772 = vmatprep.subr.mxu0 0.0
    %2773 = vmatpush2.msra.mxu0 0.0
    %2774 = vmatprep.subr.mxu0 0.0
    %2775 = vmatpush2.msra.mxu0 0.0
    %2776 = vmatprep.subr.mxu0 0.0
    %2777 = vmatpush2.msra.mxu0 0.0
    %2778 = vmatprep.subr.mxu0 0.0
    %2779 = vmatpush2.msra.mxu0 0.0
    %2780 = vmatprep.subr.mxu0 0.0
    %2781 = vmatpush2.msra.mxu0 0.0
    %2782 = vmatprep.subr.mxu0 0.0
    %2783 = vmatpush2.msra.mxu0 0.0
    %2784 = vmatprep.mubr.f32.mxu0 0.0
    %2785 = vmatmul.mubr.f32.gmra.mxu0 %v2715
    %v2786 = vpop.f32.mrf.mxu0
    %v2787 = vadd.f32 0.0, %v2786
    %v2788 = vpop.f32.mrf.mxu0
    %v2789 = vadd.f32 0.0, %v2788
    %2790 = vdwg.mxu0
    %2791 = vmatprep.subr.mxu0 0.0
    %2792 = vmatpush1.msra.mxu0 %v2205
    %2793 = vmatprep.subr.mxu0 0.0
    %2794 = vmatpush1.msra.mxu0 %v2202
    %2795 = vmatprep.subr.mxu0 0.0
    %2796 = vmatpush1.msra.mxu0 %v2199
    %2797 = vmatprep.subr.mxu0 0.0
    %2798 = vmatpush1.msra.mxu0 %v2196
    %2799 = vmatprep.subr.mxu0 0.0
    %2800 = vmatpush1.msra.mxu0 %v2193
    %2801 = vmatprep.subr.mxu0 0.0
    %2802 = vmatpush1.msra.mxu0 %v2190
    %2803 = vmatprep.subr.mxu0 0.0
    %2804 = vmatpush1.msra.mxu0 %v2187
    %2805 = vmatprep.subr.mxu0 0.0
    %2806 = vmatpush1.msra.mxu0 %v2184
    %2807 = vmatprep.subr.mxu0 0.0
    %2808 = vmatpush1.msra.mxu0 %v2181
    %2809 = vmatprep.subr.mxu0 0.0
    %2810 = vmatpush1.msra.mxu0 %v2178
    %2811 = vmatprep.subr.mxu0 0.0
    %2812 = vmatpush1.msra.mxu0 %v2175
    %2813 = vmatprep.subr.mxu0 0.0
    %2814 = vmatpush1.msra.mxu0 %v2172
    %2815 = vmatprep.subr.mxu0 0.0
    %2816 = vmatpush1.msra.mxu0 %v2169
    %2817 = vmatprep.subr.mxu0 0.0
    %2818 = vmatpush1.msra.mxu0 %v2166
    %2819 = vmatprep.subr.mxu0 0.0
    %2820 = vmatpush1.msra.mxu0 %v2163
    %2821 = vmatprep.subr.mxu0 0.0
    %2822 = vmatpush1.msra.mxu0 %v2160
    %2823 = vmatprep.subr.mxu0 0.0
    %2824 = vmatpush2.msra.mxu0 0.0
    %2825 = vmatprep.subr.mxu0 0.0
    %2826 = vmatpush2.msra.mxu0 0.0
    %2827 = vmatprep.subr.mxu0 0.0
    %2828 = vmatpush2.msra.mxu0 0.0
    %2829 = vmatprep.subr.mxu0 0.0
    %2830 = vmatpush2.msra.mxu0 0.0
    %2831 = vmatprep.subr.mxu0 0.0
    %2832 = vmatpush2.msra.mxu0 0.0
    %2833 = vmatprep.subr.mxu0 0.0
    %2834 = vmatpush2.msra.mxu0 0.0
    %2835 = vmatprep.subr.mxu0 0.0
    %2836 = vmatpush2.msra.mxu0 0.0
    %2837 = vmatprep.subr.mxu0 0.0
    %2838 = vmatpush2.msra.mxu0 0.0
    %2839 = vmatprep.subr.mxu0 0.0
    %2840 = vmatpush2.msra.mxu0 0.0
    %2841 = vmatprep.subr.mxu0 0.0
    %2842 = vmatpush2.msra.mxu0 0.0
    %2843 = vmatprep.subr.mxu0 0.0
    %2844 = vmatpush2.msra.mxu0 0.0
    %2845 = vmatprep.subr.mxu0 0.0
    %2846 = vmatpush2.msra.mxu0 0.0
    %2847 = vmatprep.subr.mxu0 0.0
    %2848 = vmatpush2.msra.mxu0 0.0
    %2849 = vmatprep.subr.mxu0 0.0
    %2850 = vmatpush2.msra.mxu0 0.0
    %2851 = vmatprep.subr.mxu0 0.0
    %2852 = vmatpush2.msra.mxu0 0.0
    %2853 = vmatprep.subr.mxu0 0.0
    %2854 = vmatpush2.msra.mxu0 0.0
    %2855 = vmatprep.mubr.f32.mxu0 0.0
    %2856 = vmatmul.mubr.f32.gmra.mxu0 %v2715
    %v2857 = vpop.f32.mrf.mxu0
    %v2858 = vadd.f32 0.0, %v2857
    %v2859 = vpop.f32.mrf.mxu0
    %2860 = vdwg.mxu0
    %v2861 = vadd.f32 %v2717, %v2787
    %v2862 = vxor.u32 %v2861, 2147483648
    %v2863 = vmul.f32 %v2862, 1.442695
    %v2864 = vpow.pop %v2863
    %v2865 = vadd.f32 %v2864, 1.0
    %v2866 = vrcp.pop %v2865
    %v2867 = vmul.f32 1.0, %v2866
    %v2868 = vadd.f32 %v2718, %v2789
    %v2869 = vxor.u32 %v2868, 2147483648
    %v2870 = vmul.f32 %v2869, 1.442695
    %v2871 = vpow.pop %v2870
    %v2872 = vadd.f32 %v2871, 1.0
    %v2873 = vrcp.pop %v2872
    %v2874 = vmul.f32 1.0, %v2873
    %v2875 = vadd.f32 %v2858, %v2372
    %v2876 = vmul.f32 %v2867, %v2875
    %v2877 = vadd.f32 %v2719, %v2876
    %v2878 = vtanh.pop %v2877
    %v2879 = vsub.f32 1.0, %v2874
    %v2880 = vmul.f32 %v2879, %v2878
    %v2881 = vmul.f32 %v2874, %v2715
    %v2882 = vadd.f32 %v2880, %v2881
    %2883 = vst [vmem:[%s1161] sm:$0xff] %v2882
    %v2884 = vld [vmem:[%s1163] sm:$0xff]
    %v2885 = vld [vmem:[%s1163 + $0x8] sm:$0xff]
    %v2886 = vld [vmem:[%s1163 + $0x10] sm:$0xff]
    %2887 = vmatprep.subr.mxu0 %v2204
    %2888 = vmatpush1.msra.mxu0 %v2203
    %2889 = vmatprep.subr.mxu0 %v2201
    %2890 = vmatpush1.msra.mxu0 %v2200
    %2891 = vmatprep.subr.mxu0 %v2198
    %2892 = vmatpush1.msra.mxu0 %v2197
    %2893 = vmatprep.subr.mxu0 %v2195
    %2894 = vmatpush1.msra.mxu0 %v2194
    %2895 = vmatprep.subr.mxu0 %v2192
    %2896 = vmatpush1.msra.mxu0 %v2191
    %2897 = vmatprep.subr.mxu0 %v2189
    %2898 = vmatpush1.msra.mxu0 %v2188
    %2899 = vmatprep.subr.mxu0 %v2186
    %2900 = vmatpush1.msra.mxu0 %v2185
    %2901 = vmatprep.subr.mxu0 %v2183
    %2902 = vmatpush1.msra.mxu0 %v2182
    %2903 = vmatprep.subr.mxu0 %v2180
    %2904 = vmatpush1.msra.mxu0 %v2179
    %2905 = vmatprep.subr.mxu0 %v2177
    %2906 = vmatpush1.msra.mxu0 %v2176
    %2907 = vmatprep.subr.mxu0 %v2174
    %2908 = vmatpush1.msra.mxu0 %v2173
    %2909 = vmatprep.subr.mxu0 %v2171
    %2910 = vmatpush1.msra.mxu0 %v2170
    %2911 = vmatprep.subr.mxu0 %v2168
    %2912 = vmatpush1.msra.mxu0 %v2167
    %2913 = vmatprep.subr.mxu0 %v2165
    %2914 = vmatpush1.msra.mxu0 %v2164
    %2915 = vmatprep.subr.mxu0 %v2162
    %2916 = vmatpush1.msra.mxu0 %v2161
    %2917 = vmatprep.subr.mxu0 %v2159
    %2918 = vmatpush1.msra.mxu0 %v2158
    %2919 = vmatprep.subr.mxu0 0.0
    %2920 = vmatpush2.msra.mxu0 0.0
    %2921 = vmatprep.subr.mxu0 0.0
    %2922 = vmatpush2.msra.mxu0 0.0
    %2923 = vmatprep.subr.mxu0 0.0
    %2924 = vmatpush2.msra.mxu0 0.0
    %2925 = vmatprep.subr.mxu0 0.0
    %2926 = vmatpush2.msra.mxu0 0.0
    %2927 = vmatprep.subr.mxu0 0.0
    %2928 = vmatpush2.msra.mxu0 0.0
    %2929 = vmatprep.subr.mxu0 0.0
    %2930 = vmatpush2.msra.mxu0 0.0
    %2931 = vmatprep.subr.mxu0 0.0
    %2932 = vmatpush2.msra.mxu0 0.0
    %2933 = vmatprep.subr.mxu0 0.0
    %2934 = vmatpush2.msra.mxu0 0.0
    %2935 = vmatprep.subr.mxu0 0.0
    %2936 = vmatpush2.msra.mxu0 0.0
    %2937 = vmatprep.subr.mxu0 0.0
    %2938 = vmatpush2.msra.mxu0 0.0
    %2939 = vmatprep.subr.mxu0 0.0
    %2940 = vmatpush2.msra.mxu0 0.0
    %2941 = vmatprep.subr.mxu0 0.0
    %2942 = vmatpush2.msra.mxu0 0.0
    %2943 = vmatprep.subr.mxu0 0.0
    %2944 = vmatpush2.msra.mxu0 0.0
    %2945 = vmatprep.subr.mxu0 0.0
    %2946 = vmatpush2.msra.mxu0 0.0
    %2947 = vmatprep.subr.mxu0 0.0
    %2948 = vmatpush2.msra.mxu0 0.0
    %2949 = vmatprep.subr.mxu0 0.0
    %2950 = vmatpush2.msra.mxu0 0.0
    %2951 = vmatprep.mubr.f32.mxu0 0.0
    %2952 = vmatmul.mubr.f32.gmra.mxu0 %v2882
    %v2953 = vpop.f32.mrf.mxu0
    %v2954 = vadd.f32 0.0, %v2953
    %v2955 = vpop.f32.mrf.mxu0
    %v2956 = vadd.f32 0.0, %v2955
    %2957 = vdwg.mxu0
    %2958 = vmatprep.subr.mxu0 0.0
    %2959 = vmatpush1.msra.mxu0 %v2205
    %2960 = vmatprep.subr.mxu0 0.0
    %2961 = vmatpush1.msra.mxu0 %v2202
    %2962 = vmatprep.subr.mxu0 0.0
    %2963 = vmatpush1.msra.mxu0 %v2199
    %2964 = vmatprep.subr.mxu0 0.0
    %2965 = vmatpush1.msra.mxu0 %v2196
    %2966 = vmatprep.subr.mxu0 0.0
    %2967 = vmatpush1.msra.mxu0 %v2193
    %2968 = vmatprep.subr.mxu0 0.0
    %2969 = vmatpush1.msra.mxu0 %v2190
    %2970 = vmatprep.subr.mxu0 0.0
    %2971 = vmatpush1.msra.mxu0 %v2187
    %2972 = vmatprep.subr.mxu0 0.0
    %2973 = vmatpush1.msra.mxu0 %v2184
    %2974 = vmatprep.subr.mxu0 0.0
    %2975 = vmatpush1.msra.mxu0 %v2181
    %2976 = vmatprep.subr.mxu0 0.0
    %2977 = vmatpush1.msra.mxu0 %v2178
    %2978 = vmatprep.subr.mxu0 0.0
    %2979 = vmatpush1.msra.mxu0 %v2175
    %2980 = vmatprep.subr.mxu0 0.0
    %2981 = vmatpush1.msra.mxu0 %v2172
    %2982 = vmatprep.subr.mxu0 0.0
    %2983 = vmatpush1.msra.mxu0 %v2169
    %2984 = vmatprep.subr.mxu0 0.0
    %2985 = vmatpush1.msra.mxu0 %v2166
    %2986 = vmatprep.subr.mxu0 0.0
    %2987 = vmatpush1.msra.mxu0 %v2163
    %2988 = vmatprep.subr.mxu0 0.0
    %2989 = vmatpush1.msra.mxu0 %v2160
    %2990 = vmatprep.subr.mxu0 0.0
    %2991 = vmatpush2.msra.mxu0 0.0
    %2992 = vmatprep.subr.mxu0 0.0
    %2993 = vmatpush2.msra.mxu0 0.0
    %2994 = vmatprep.subr.mxu0 0.0
    %2995 = vmatpush2.msra.mxu0 0.0
    %2996 = vmatprep.subr.mxu0 0.0
    %2997 = vmatpush2.msra.mxu0 0.0
    %2998 = vmatprep.subr.mxu0 0.0
    %2999 = vmatpush2.msra.mxu0 0.0
    %3000 = vmatprep.subr.mxu0 0.0
    %3001 = vmatpush2.msra.mxu0 0.0
    %3002 = vmatprep.subr.mxu0 0.0
    %3003 = vmatpush2.msra.mxu0 0.0
    %3004 = vmatprep.subr.mxu0 0.0
    %3005 = vmatpush2.msra.mxu0 0.0
    %3006 = vmatprep.subr.mxu0 0.0
    %3007 = vmatpush2.msra.mxu0 0.0
    %3008 = vmatprep.subr.mxu0 0.0
    %3009 = vmatpush2.msra.mxu0 0.0
    %3010 = vmatprep.subr.mxu0 0.0
    %3011 = vmatpush2.msra.mxu0 0.0
    %3012 = vmatprep.subr.mxu0 0.0
    %3013 = vmatpush2.msra.mxu0 0.0
    %3014 = vmatprep.subr.mxu0 0.0
    %3015 = vmatpush2.msra.mxu0 0.0
    %3016 = vmatprep.subr.mxu0 0.0
    %3017 = vmatpush2.msra.mxu0 0.0
    %3018 = vmatprep.subr.mxu0 0.0
    %3019 = vmatpush2.msra.mxu0 0.0
    %3020 = vmatprep.subr.mxu0 0.0
    %3021 = vmatpush2.msra.mxu0 0.0
    %3022 = vmatprep.mubr.f32.mxu0 0.0
    %3023 = vmatmul.mubr.f32.gmra.mxu0 %v2882
    %v3024 = vpop.f32.mrf.mxu0
    %v3025 = vadd.f32 0.0, %v3024
    %v3026 = vpop.f32.mrf.mxu0
    %3027 = vdwg.mxu0
    %v3028 = vadd.f32 %v2884, %v2954
    %v3029 = vxor.u32 %v3028, 2147483648
    %v3030 = vmul.f32 %v3029, 1.442695
    %v3031 = vpow.pop %v3030
    %v3032 = vadd.f32 %v3031, 1.0
    %v3033 = vrcp.pop %v3032
    %v3034 = vmul.f32 1.0, %v3033
    %v3035 = vadd.f32 %v2885, %v2956
    %v3036 = vxor.u32 %v3035, 2147483648
    %v3037 = vmul.f32 %v3036, 1.442695
    %v3038 = vpow.pop %v3037
    %v3039 = vadd.f32 %v3038, 1.0
    %v3040 = vrcp.pop %v3039
    %v3041 = vmul.f32 1.0, %v3040
    %v3042 = vadd.f32 %v3025, %v2372
    %v3043 = vmul.f32 %v3034, %v3042
    %v3044 = vadd.f32 %v2886, %v3043
    %v3045 = vtanh.pop %v3044
    %v3046 = vsub.f32 1.0, %v3041
    %v3047 = vmul.f32 %v3046, %v3045
    %v3048 = vmul.f32 %v3041, %v2882
    %v3049 = vadd.f32 %v3047, %v3048
    %3050 = vst [vmem:[%s1330] sm:$0xff] %v3049
    %v3051 = vld [vmem:[%s1332] sm:$0xff]
    %v3052 = vld [vmem:[%s1332 + $0x8] sm:$0xff]
    %v3053 = vld [vmem:[%s1332 + $0x10] sm:$0xff]
    %3054 = vmatprep.subr.mxu0 %v2204
    %3055 = vmatpush1.msra.mxu0 %v2203
    %3056 = vmatprep.subr.mxu0 %v2201
    %3057 = vmatpush1.msra.mxu0 %v2200
    %3058 = vmatprep.subr.mxu0 %v2198
    %3059 = vmatpush1.msra.mxu0 %v2197
    %3060 = vmatprep.subr.mxu0 %v2195
    %3061 = vmatpush1.msra.mxu0 %v2194
    %3062 = vmatprep.subr.mxu0 %v2192
    %3063 = vmatpush1.msra.mxu0 %v2191
    %3064 = vmatprep.subr.mxu0 %v2189
    %3065 = vmatpush1.msra.mxu0 %v2188
    %3066 = vmatprep.subr.mxu0 %v2186
    %3067 = vmatpush1.msra.mxu0 %v2185
    %3068 = vmatprep.subr.mxu0 %v2183
    %3069 = vmatpush1.msra.mxu0 %v2182
    %3070 = vmatprep.subr.mxu0 %v2180
    %3071 = vmatpush1.msra.mxu0 %v2179
    %3072 = vmatprep.subr.mxu0 %v2177
    %3073 = vmatpush1.msra.mxu0 %v2176
    %3074 = vmatprep.subr.mxu0 %v2174
    %3075 = vmatpush1.msra.mxu0 %v2173
    %3076 = vmatprep.subr.mxu0 %v2171
    %3077 = vmatpush1.msra.mxu0 %v2170
    %3078 = vmatprep.subr.mxu0 %v2168
    %3079 = vmatpush1.msra.mxu0 %v2167
    %3080 = vmatprep.subr.mxu0 %v2165
    %3081 = vmatpush1.msra.mxu0 %v2164
    %3082 = vmatprep.subr.mxu0 %v2162
    %3083 = vmatpush1.msra.mxu0 %v2161
    %3084 = vmatprep.subr.mxu0 %v2159
    %3085 = vmatpush1.msra.mxu0 %v2158
    %3086 = vmatprep.subr.mxu0 0.0
    %3087 = vmatpush2.msra.mxu0 0.0
    %3088 = vmatprep.subr.mxu0 0.0
    %3089 = vmatpush2.msra.mxu0 0.0
    %3090 = vmatprep.subr.mxu0 0.0
    %3091 = vmatpush2.msra.mxu0 0.0
    %3092 = vmatprep.subr.mxu0 0.0
    %3093 = vmatpush2.msra.mxu0 0.0
    %3094 = vmatprep.subr.mxu0 0.0
    %3095 = vmatpush2.msra.mxu0 0.0
    %3096 = vmatprep.subr.mxu0 0.0
    %3097 = vmatpush2.msra.mxu0 0.0
    %3098 = vmatprep.subr.mxu0 0.0
    %3099 = vmatpush2.msra.mxu0 0.0
    %3100 = vmatprep.subr.mxu0 0.0
    %3101 = vmatpush2.msra.mxu0 0.0
    %3102 = vmatprep.subr.mxu0 0.0
    %3103 = vmatpush2.msra.mxu0 0.0
    %3104 = vmatprep.subr.mxu0 0.0
    %3105 = vmatpush2.msra.mxu0 0.0
    %3106 = vmatprep.subr.mxu0 0.0
    %3107 = vmatpush2.msra.mxu0 0.0
    %3108 = vmatprep.subr.mxu0 0.0
    %3109 = vmatpush2.msra.mxu0 0.0
    %3110 = vmatprep.subr.mxu0 0.0
    %3111 = vmatpush2.msra.mxu0 0.0
    %3112 = vmatprep.subr.mxu0 0.0
    %3113 = vmatpush2.msra.mxu0 0.0
    %3114 = vmatprep.subr.mxu0 0.0
    %3115 = vmatpush2.msra.mxu0 0.0
    %3116 = vmatprep.subr.mxu0 0.0
    %3117 = vmatpush2.msra.mxu0 0.0
    %3118 = vmatprep.mubr.f32.mxu0 0.0
    %3119 = vmatmul.mubr.f32.gmra.mxu0 %v3049
    %v3120 = vpop.f32.mrf.mxu0
    %v3121 = vadd.f32 0.0, %v3120
    %v3122 = vpop.f32.mrf.mxu0
    %v3123 = vadd.f32 0.0, %v3122
    %3124 = vdwg.mxu0
    %3125 = vmatprep.subr.mxu0 0.0
    %3126 = vmatpush1.msra.mxu0 %v2205
    %3127 = vmatprep.subr.mxu0 0.0
    %3128 = vmatpush1.msra.mxu0 %v2202
    %3129 = vmatprep.subr.mxu0 0.0
    %3130 = vmatpush1.msra.mxu0 %v2199
    %3131 = vmatprep.subr.mxu0 0.0
    %3132 = vmatpush1.msra.mxu0 %v2196
    %3133 = vmatprep.subr.mxu0 0.0
    %3134 = vmatpush1.msra.mxu0 %v2193
    %3135 = vmatprep.subr.mxu0 0.0
    %3136 = vmatpush1.msra.mxu0 %v2190
    %3137 = vmatprep.subr.mxu0 0.0
    %3138 = vmatpush1.msra.mxu0 %v2187
    %3139 = vmatprep.subr.mxu0 0.0
    %3140 = vmatpush1.msra.mxu0 %v2184
    %3141 = vmatprep.subr.mxu0 0.0
    %3142 = vmatpush1.msra.mxu0 %v2181
    %3143 = vmatprep.subr.mxu0 0.0
    %3144 = vmatpush1.msra.mxu0 %v2178
    %3145 = vmatprep.subr.mxu0 0.0
    %3146 = vmatpush1.msra.mxu0 %v2175
    %3147 = vmatprep.subr.mxu0 0.0
    %3148 = vmatpush1.msra.mxu0 %v2172
    %3149 = vmatprep.subr.mxu0 0.0
    %3150 = vmatpush1.msra.mxu0 %v2169
    %3151 = vmatprep.subr.mxu0 0.0
    %3152 = vmatpush1.msra.mxu0 %v2166
    %3153 = vmatprep.subr.mxu0 0.0
    %3154 = vmatpush1.msra.mxu0 %v2163
    %3155 = vmatprep.subr.mxu0 0.0
    %3156 = vmatpush1.msra.mxu0 %v2160
    %3157 = vmatprep.subr.mxu0 0.0
    %3158 = vmatpush2.msra.mxu0 0.0
    %3159 = vmatprep.subr.mxu0 0.0
    %3160 = vmatpush2.msra.mxu0 0.0
    %3161 = vmatprep.subr.mxu0 0.0
    %3162 = vmatpush2.msra.mxu0 0.0
    %3163 = vmatprep.subr.mxu0 0.0
    %3164 = vmatpush2.msra.mxu0 0.0
    %3165 = vmatprep.subr.mxu0 0.0
    %3166 = vmatpush2.msra.mxu0 0.0
    %3167 = vmatprep.subr.mxu0 0.0
    %3168 = vmatpush2.msra.mxu0 0.0
    %3169 = vmatprep.subr.mxu0 0.0
    %3170 = vmatpush2.msra.mxu0 0.0
    %3171 = vmatprep.subr.mxu0 0.0
    %3172 = vmatpush2.msra.mxu0 0.0
    %3173 = vmatprep.subr.mxu0 0.0
    %3174 = vmatpush2.msra.mxu0 0.0
    %3175 = vmatprep.subr.mxu0 0.0
    %3176 = vmatpush2.msra.mxu0 0.0
    %3177 = vmatprep.subr.mxu0 0.0
    %3178 = vmatpush2.msra.mxu0 0.0
    %3179 = vmatprep.subr.mxu0 0.0
    %3180 = vmatpush2.msra.mxu0 0.0
    %3181 = vmatprep.subr.mxu0 0.0
    %3182 = vmatpush2.msra.mxu0 0.0
    %3183 = vmatprep.subr.mxu0 0.0
    %3184 = vmatpush2.msra.mxu0 0.0
    %3185 = vmatprep.subr.mxu0 0.0
    %3186 = vmatpush2.msra.mxu0 0.0
    %3187 = vmatprep.subr.mxu0 0.0
    %3188 = vmatpush2.msra.mxu0 0.0
    %3189 = vmatprep.mubr.f32.mxu0 0.0
    %3190 = vmatmul.mubr.f32.gmra.mxu0 %v3049
    %v3191 = vpop.f32.mrf.mxu0
    %v3192 = vadd.f32 0.0, %v3191
    %v3193 = vpop.f32.mrf.mxu0
    %3194 = vdwg.mxu0
    %v3195 = vadd.f32 %v3051, %v3121
    %v3196 = vxor.u32 %v3195, 2147483648
    %v3197 = vmul.f32 %v3196, 1.442695
    %v3198 = vpow.pop %v3197
    %v3199 = vadd.f32 %v3198, 1.0
    %v3200 = vrcp.pop %v3199
    %v3201 = vmul.f32 1.0, %v3200
    %v3202 = vadd.f32 %v3052, %v3123
    %v3203 = vxor.u32 %v3202, 2147483648
    %v3204 = vmul.f32 %v3203, 1.442695
    %v3205 = vpow.pop %v3204
    %v3206 = vadd.f32 %v3205, 1.0
    %v3207 = vrcp.pop %v3206
    %v3208 = vmul.f32 1.0, %v3207
    %v3209 = vadd.f32 %v3192, %v2372
    %v3210 = vmul.f32 %v3201, %v3209
    %v3211 = vadd.f32 %v3053, %v3210
    %v3212 = vtanh.pop %v3211
    %v3213 = vsub.f32 1.0, %v3208
    %v3214 = vmul.f32 %v3213, %v3212
    %v3215 = vmul.f32 %v3208, %v3049
    %v3216 = vadd.f32 %v3214, %v3215
    %3217 = vst [vmem:[%s1499] sm:$0xff] %v3216
    %v3218 = vld [vmem:[%s1501] sm:$0xff]
    %v3219 = vld [vmem:[%s1501 + $0x8] sm:$0xff]
    %v3220 = vld [vmem:[%s1501 + $0x10] sm:$0xff]
    %3221 = vmatprep.subr.mxu0 %v2204
    %3222 = vmatpush1.msra.mxu0 %v2203
    %3223 = vmatprep.subr.mxu0 %v2201
    %3224 = vmatpush1.msra.mxu0 %v2200
    %3225 = vmatprep.subr.mxu0 %v2198
    %3226 = vmatpush1.msra.mxu0 %v2197
    %3227 = vmatprep.subr.mxu0 %v2195
    %3228 = vmatpush1.msra.mxu0 %v2194
    %3229 = vmatprep.subr.mxu0 %v2192
    %3230 = vmatpush1.msra.mxu0 %v2191
    %3231 = vmatprep.subr.mxu0 %v2189
    %3232 = vmatpush1.msra.mxu0 %v2188
    %3233 = vmatprep.subr.mxu0 %v2186
    %3234 = vmatpush1.msra.mxu0 %v2185
    %3235 = vmatprep.subr.mxu0 %v2183
    %3236 = vmatpush1.msra.mxu0 %v2182
    %3237 = vmatprep.subr.mxu0 %v2180
    %3238 = vmatpush1.msra.mxu0 %v2179
    %3239 = vmatprep.subr.mxu0 %v2177
    %3240 = vmatpush1.msra.mxu0 %v2176
    %3241 = vmatprep.subr.mxu0 %v2174
    %3242 = vmatpush1.msra.mxu0 %v2173
    %3243 = vmatprep.subr.mxu0 %v2171
    %3244 = vmatpush1.msra.mxu0 %v2170
    %3245 = vmatprep.subr.mxu0 %v2168
    %3246 = vmatpush1.msra.mxu0 %v2167
    %3247 = vmatprep.subr.mxu0 %v2165
    %3248 = vmatpush1.msra.mxu0 %v2164
    %3249 = vmatprep.subr.mxu0 %v2162
    %3250 = vmatpush1.msra.mxu0 %v2161
    %3251 = vmatprep.subr.mxu0 %v2159
    %3252 = vmatpush1.msra.mxu0 %v2158
    %3253 = vmatprep.subr.mxu0 0.0
    %3254 = vmatpush2.msra.mxu0 0.0
    %3255 = vmatprep.subr.mxu0 0.0
    %3256 = vmatpush2.msra.mxu0 0.0
    %3257 = vmatprep.subr.mxu0 0.0
    %3258 = vmatpush2.msra.mxu0 0.0
    %3259 = vmatprep.subr.mxu0 0.0
    %3260 = vmatpush2.msra.mxu0 0.0
    %3261 = vmatprep.subr.mxu0 0.0
    %3262 = vmatpush2.msra.mxu0 0.0
    %3263 = vmatprep.subr.mxu0 0.0
    %3264 = vmatpush2.msra.mxu0 0.0
    %3265 = vmatprep.subr.mxu0 0.0
    %3266 = vmatpush2.msra.mxu0 0.0
    %3267 = vmatprep.subr.mxu0 0.0
    %3268 = vmatpush2.msra.mxu0 0.0
    %3269 = vmatprep.subr.mxu0 0.0
    %3270 = vmatpush2.msra.mxu0 0.0
    %3271 = vmatprep.subr.mxu0 0.0
    %3272 = vmatpush2.msra.mxu0 0.0
    %3273 = vmatprep.subr.mxu0 0.0
    %3274 = vmatpush2.msra.mxu0 0.0
    %3275 = vmatprep.subr.mxu0 0.0
    %3276 = vmatpush2.msra.mxu0 0.0
    %3277 = vmatprep.subr.mxu0 0.0
    %3278 = vmatpush2.msra.mxu0 0.0
    %3279 = vmatprep.subr.mxu0 0.0
    %3280 = vmatpush2.msra.mxu0 0.0
    %3281 = vmatprep.subr.mxu0 0.0
    %3282 = vmatpush2.msra.mxu0 0.0
    %3283 = vmatprep.subr.mxu0 0.0
    %3284 = vmatpush2.msra.mxu0 0.0
    %3285 = vmatprep.mubr.f32.mxu0 0.0
    %3286 = vmatmul.mubr.f32.gmra.mxu0 %v3216
    %v3287 = vpop.f32.mrf.mxu0
    %v3288 = vadd.f32 0.0, %v3287
    %v3289 = vpop.f32.mrf.mxu0
    %v3290 = vadd.f32 0.0, %v3289
    %3291 = vdwg.mxu0
    %3292 = vmatprep.subr.mxu0 0.0
    %3293 = vmatpush1.msra.mxu0 %v2205
    %3294 = vmatprep.subr.mxu0 0.0
    %3295 = vmatpush1.msra.mxu0 %v2202
    %3296 = vmatprep.subr.mxu0 0.0
    %3297 = vmatpush1.msra.mxu0 %v2199
    %3298 = vmatprep.subr.mxu0 0.0
    %3299 = vmatpush1.msra.mxu0 %v2196
    %3300 = vmatprep.subr.mxu0 0.0
    %3301 = vmatpush1.msra.mxu0 %v2193
    %3302 = vmatprep.subr.mxu0 0.0
    %3303 = vmatpush1.msra.mxu0 %v2190
    %3304 = vmatprep.subr.mxu0 0.0
    %3305 = vmatpush1.msra.mxu0 %v2187
    %3306 = vmatprep.subr.mxu0 0.0
    %3307 = vmatpush1.msra.mxu0 %v2184
    %3308 = vmatprep.subr.mxu0 0.0
    %3309 = vmatpush1.msra.mxu0 %v2181
    %3310 = vmatprep.subr.mxu0 0.0
    %3311 = vmatpush1.msra.mxu0 %v2178
    %3312 = vmatprep.subr.mxu0 0.0
    %3313 = vmatpush1.msra.mxu0 %v2175
    %3314 = vmatprep.subr.mxu0 0.0
    %3315 = vmatpush1.msra.mxu0 %v2172
    %3316 = vmatprep.subr.mxu0 0.0
    %3317 = vmatpush1.msra.mxu0 %v2169
    %3318 = vmatprep.subr.mxu0 0.0
    %3319 = vmatpush1.msra.mxu0 %v2166
    %3320 = vmatprep.subr.mxu0 0.0
    %3321 = vmatpush1.msra.mxu0 %v2163
    %3322 = vmatprep.subr.mxu0 0.0
    %3323 = vmatpush1.msra.mxu0 %v2160
    %3324 = vmatprep.subr.mxu0 0.0
    %3325 = vmatpush2.msra.mxu0 0.0
    %3326 = vmatprep.subr.mxu0 0.0
    %3327 = vmatpush2.msra.mxu0 0.0
    %3328 = vmatprep.subr.mxu0 0.0
    %3329 = vmatpush2.msra.mxu0 0.0
    %3330 = vmatprep.subr.mxu0 0.0
    %3331 = vmatpush2.msra.mxu0 0.0
    %3332 = vmatprep.subr.mxu0 0.0
    %3333 = vmatpush2.msra.mxu0 0.0
    %3334 = vmatprep.subr.mxu0 0.0
    %3335 = vmatpush2.msra.mxu0 0.0
    %3336 = vmatprep.subr.mxu0 0.0
    %3337 = vmatpush2.msra.mxu0 0.0
    %3338 = vmatprep.subr.mxu0 0.0
    %3339 = vmatpush2.msra.mxu0 0.0
    %3340 = vmatprep.subr.mxu0 0.0
    %3341 = vmatpush2.msra.mxu0 0.0
    %3342 = vmatprep.subr.mxu0 0.0
    %3343 = vmatpush2.msra.mxu0 0.0
    %3344 = vmatprep.subr.mxu0 0.0
    %3345 = vmatpush2.msra.mxu0 0.0
    %3346 = vmatprep.subr.mxu0 0.0
    %3347 = vmatpush2.msra.mxu0 0.0
    %3348 = vmatprep.subr.mxu0 0.0
    %3349 = vmatpush2.msra.mxu0 0.0
    %3350 = vmatprep.subr.mxu0 0.0
    %3351 = vmatpush2.msra.mxu0 0.0
    %3352 = vmatprep.subr.mxu0 0.0
    %3353 = vmatpush2.msra.mxu0 0.0
    %3354 = vmatprep.subr.mxu0 0.0
    %3355 = vmatpush2.msra.mxu0 0.0
    %3356 = vmatprep.mubr.f32.mxu0 0.0
    %3357 = vmatmul.mubr.f32.gmra.mxu0 %v3216
    %v3358 = vpop.f32.mrf.mxu0
    %v3359 = vadd.f32 0.0, %v3358
    %v3360 = vpop.f32.mrf.mxu0
    %3361 = vdwg.mxu0
    %v3362 = vadd.f32 %v3218, %v3288
    %v3363 = vxor.u32 %v3362, 2147483648
    %v3364 = vmul.f32 %v3363, 1.442695
    %v3365 = vpow.pop %v3364
    %v3366 = vadd.f32 %v3365, 1.0
    %v3367 = vrcp.pop %v3366
    %v3368 = vmul.f32 1.0, %v3367
    %v3369 = vadd.f32 %v3219, %v3290
    %v3370 = vxor.u32 %v3369, 2147483648
    %v3371 = vmul.f32 %v3370, 1.442695
    %v3372 = vpow.pop %v3371
    %v3373 = vadd.f32 %v3372, 1.0
    %v3374 = vrcp.pop %v3373
    %v3375 = vmul.f32 1.0, %v3374
    %v3376 = vadd.f32 %v3359, %v2372
    %v3377 = vmul.f32 %v3368, %v3376
    %v3378 = vadd.f32 %v3220, %v3377
    %v3379 = vtanh.pop %v3378
    %v3380 = vsub.f32 1.0, %v3375
    %v3381 = vmul.f32 %v3380, %v3379
    %v3382 = vmul.f32 %v3375, %v3216
    %v3383 = vadd.f32 %v3381, %v3382
    %3384 = vst [vmem:[%s1668] sm:$0xff] %v3383
    %v3385 = vld [vmem:[%s1670] sm:$0xff]
    %v3386 = vld [vmem:[%s1670 + $0x8] sm:$0xff]
    %v3387 = vld [vmem:[%s1670 + $0x10] sm:$0xff]
    %3388 = vmatprep.subr.mxu0 %v2204
    %3389 = vmatpush1.msra.mxu0 %v2203
    %3390 = vmatprep.subr.mxu0 %v2201
    %3391 = vmatpush1.msra.mxu0 %v2200
    %3392 = vmatprep.subr.mxu0 %v2198
    %3393 = vmatpush1.msra.mxu0 %v2197
    %3394 = vmatprep.subr.mxu0 %v2195
    %3395 = vmatpush1.msra.mxu0 %v2194
    %3396 = vmatprep.subr.mxu0 %v2192
    %3397 = vmatpush1.msra.mxu0 %v2191
    %3398 = vmatprep.subr.mxu0 %v2189
    %3399 = vmatpush1.msra.mxu0 %v2188
    %3400 = vmatprep.subr.mxu0 %v2186
    %3401 = vmatpush1.msra.mxu0 %v2185
    %3402 = vmatprep.subr.mxu0 %v2183
    %3403 = vmatpush1.msra.mxu0 %v2182
    %3404 = vmatprep.subr.mxu0 %v2180
    %3405 = vmatpush1.msra.mxu0 %v2179
    %3406 = vmatprep.subr.mxu0 %v2177
    %3407 = vmatpush1.msra.mxu0 %v2176
    %3408 = vmatprep.subr.mxu0 %v2174
    %3409 = vmatpush1.msra.mxu0 %v2173
    %3410 = vmatprep.subr.mxu0 %v2171
    %3411 = vmatpush1.msra.mxu0 %v2170
    %3412 = vmatprep.subr.mxu0 %v2168
    %3413 = vmatpush1.msra.mxu0 %v2167
    %3414 = vmatprep.subr.mxu0 %v2165
    %3415 = vmatpush1.msra.mxu0 %v2164
    %3416 = vmatprep.subr.mxu0 %v2162
    %3417 = vmatpush1.msra.mxu0 %v2161
    %3418 = vmatprep.subr.mxu0 %v2159
    %3419 = vmatpush1.msra.mxu0 %v2158
    %3420 = vmatprep.subr.mxu0 0.0
    %3421 = vmatpush2.msra.mxu0 0.0
    %3422 = vmatprep.subr.mxu0 0.0
    %3423 = vmatpush2.msra.mxu0 0.0
    %3424 = vmatprep.subr.mxu0 0.0
    %3425 = vmatpush2.msra.mxu0 0.0
    %3426 = vmatprep.subr.mxu0 0.0
    %3427 = vmatpush2.msra.mxu0 0.0
    %3428 = vmatprep.subr.mxu0 0.0
    %3429 = vmatpush2.msra.mxu0 0.0
    %3430 = vmatprep.subr.mxu0 0.0
    %3431 = vmatpush2.msra.mxu0 0.0
    %3432 = vmatprep.subr.mxu0 0.0
    %3433 = vmatpush2.msra.mxu0 0.0
    %3434 = vmatprep.subr.mxu0 0.0
    %3435 = vmatpush2.msra.mxu0 0.0
    %3436 = vmatprep.subr.mxu0 0.0
    %3437 = vmatpush2.msra.mxu0 0.0
    %3438 = vmatprep.subr.mxu0 0.0
    %3439 = vmatpush2.msra.mxu0 0.0
    %3440 = vmatprep.subr.mxu0 0.0
    %3441 = vmatpush2.msra.mxu0 0.0
    %3442 = vmatprep.subr.mxu0 0.0
    %3443 = vmatpush2.msra.mxu0 0.0
    %3444 = vmatprep.subr.mxu0 0.0
    %3445 = vmatpush2.msra.mxu0 0.0
    %3446 = vmatprep.subr.mxu0 0.0
    %3447 = vmatpush2.msra.mxu0 0.0
    %3448 = vmatprep.subr.mxu0 0.0
    %3449 = vmatpush2.msra.mxu0 0.0
    %3450 = vmatprep.subr.mxu0 0.0
    %3451 = vmatpush2.msra.mxu0 0.0
    %3452 = vmatprep.mubr.f32.mxu0 0.0
    %3453 = vmatmul.mubr.f32.gmra.mxu0 %v3383
    %v3454 = vpop.f32.mrf.mxu0
    %v3455 = vadd.f32 0.0, %v3454
    %v3456 = vpop.f32.mrf.mxu0
    %v3457 = vadd.f32 0.0, %v3456
    %3458 = vdwg.mxu0
    %3459 = vmatprep.subr.mxu0 0.0
    %3460 = vmatpush1.msra.mxu0 %v2205
    %3461 = vmatprep.subr.mxu0 0.0
    %3462 = vmatpush1.msra.mxu0 %v2202
    %3463 = vmatprep.subr.mxu0 0.0
    %3464 = vmatpush1.msra.mxu0 %v2199
    %3465 = vmatprep.subr.mxu0 0.0
    %3466 = vmatpush1.msra.mxu0 %v2196
    %3467 = vmatprep.subr.mxu0 0.0
    %3468 = vmatpush1.msra.mxu0 %v2193
    %3469 = vmatprep.subr.mxu0 0.0
    %3470 = vmatpush1.msra.mxu0 %v2190
    %3471 = vmatprep.subr.mxu0 0.0
    %3472 = vmatpush1.msra.mxu0 %v2187
    %3473 = vmatprep.subr.mxu0 0.0
    %3474 = vmatpush1.msra.mxu0 %v2184
    %3475 = vmatprep.subr.mxu0 0.0
    %3476 = vmatpush1.msra.mxu0 %v2181
    %3477 = vmatprep.subr.mxu0 0.0
    %3478 = vmatpush1.msra.mxu0 %v2178
    %3479 = vmatprep.subr.mxu0 0.0
    %3480 = vmatpush1.msra.mxu0 %v2175
    %3481 = vmatprep.subr.mxu0 0.0
    %3482 = vmatpush1.msra.mxu0 %v2172
    %3483 = vmatprep.subr.mxu0 0.0
    %3484 = vmatpush1.msra.mxu0 %v2169
    %3485 = vmatprep.subr.mxu0 0.0
    %3486 = vmatpush1.msra.mxu0 %v2166
    %3487 = vmatprep.subr.mxu0 0.0
    %3488 = vmatpush1.msra.mxu0 %v2163
    %3489 = vmatprep.subr.mxu0 0.0
    %3490 = vmatpush1.msra.mxu0 %v2160
    %3491 = vmatprep.subr.mxu0 0.0
    %3492 = vmatpush2.msra.mxu0 0.0
    %3493 = vmatprep.subr.mxu0 0.0
    %3494 = vmatpush2.msra.mxu0 0.0
    %3495 = vmatprep.subr.mxu0 0.0
    %3496 = vmatpush2.msra.mxu0 0.0
    %3497 = vmatprep.subr.mxu0 0.0
    %3498 = vmatpush2.msra.mxu0 0.0
    %3499 = vmatprep.subr.mxu0 0.0
    %3500 = vmatpush2.msra.mxu0 0.0
    %3501 = vmatprep.subr.mxu0 0.0
    %3502 = vmatpush2.msra.mxu0 0.0
    %3503 = vmatprep.subr.mxu0 0.0
    %3504 = vmatpush2.msra.mxu0 0.0
    %3505 = vmatprep.subr.mxu0 0.0
    %3506 = vmatpush2.msra.mxu0 0.0
    %3507 = vmatprep.subr.mxu0 0.0
    %3508 = vmatpush2.msra.mxu0 0.0
    %3509 = vmatprep.subr.mxu0 0.0
    %3510 = vmatpush2.msra.mxu0 0.0
    %3511 = vmatprep.subr.mxu0 0.0
    %3512 = vmatpush2.msra.mxu0 0.0
    %3513 = vmatprep.subr.mxu0 0.0
    %3514 = vmatpush2.msra.mxu0 0.0
    %3515 = vmatprep.subr.mxu0 0.0
    %3516 = vmatpush2.msra.mxu0 0.0
    %3517 = vmatprep.subr.mxu0 0.0
    %3518 = vmatpush2.msra.mxu0 0.0
    %3519 = vmatprep.subr.mxu0 0.0
    %3520 = vmatpush2.msra.mxu0 0.0
    %3521 = vmatprep.subr.mxu0 0.0
    %3522 = vmatpush2.msra.mxu0 0.0
    %3523 = vmatprep.mubr.f32.mxu0 0.0
    %3524 = vmatmul.mubr.f32.gmra.mxu0 %v3383
    %v3525 = vpop.f32.mrf.mxu0
    %v3526 = vadd.f32 0.0, %v3525
    %v3527 = vpop.f32.mrf.mxu0
    %3528 = vdwg.mxu0
    %v3529 = vadd.f32 %v3385, %v3455
    %v3530 = vxor.u32 %v3529, 2147483648
    %v3531 = vmul.f32 %v3530, 1.442695
    %v3532 = vpow.pop %v3531
    %v3533 = vadd.f32 %v3532, 1.0
    %v3534 = vrcp.pop %v3533
    %v3535 = vmul.f32 1.0, %v3534
    %v3536 = vadd.f32 %v3386, %v3457
    %v3537 = vxor.u32 %v3536, 2147483648
    %v3538 = vmul.f32 %v3537, 1.442695
    %v3539 = vpow.pop %v3538
    %v3540 = vadd.f32 %v3539, 1.0
    %v3541 = vrcp.pop %v3540
    %v3542 = vmul.f32 1.0, %v3541
    %v3543 = vadd.f32 %v3526, %v2372
    %v3544 = vmul.f32 %v3535, %v3543
    %v3545 = vadd.f32 %v3387, %v3544
    %v3546 = vtanh.pop %v3545
    %v3547 = vsub.f32 1.0, %v3542
    %v3548 = vmul.f32 %v3547, %v3546
    %v3549 = vmul.f32 %v3542, %v3383
    %v3550 = vadd.f32 %v3548, %v3549
    %3551 = vst [vmem:[%s1837] sm:$0xff] %v3550
    %s3552 = scalar_lea.vmem [#allocation16], 8
    %3553 = vst [vmem:[%s3552] sm:$0xff] %v3550
    %v3554 = vld [vmem:[#allocation2] sm:$0xff]
    %v3555 = vld [vmem:[#allocation2 + $0x8] sm:$0xff]
    %v3556 = vld [vmem:[#allocation2 + $0x10] sm:$0xff]
    %v3557 = vld [vmem:[#allocation2 + $0x18] sm:$0xff]
    %v3558 = vld [vmem:[#allocation2 + $0x20] sm:$0xff]
    %v3559 = vld [vmem:[#allocation2 + $0x28] sm:$0xff]
    %v3560 = vld [vmem:[#allocation2 + $0x30] sm:$0xff]
    %v3561 = vld [vmem:[#allocation2 + $0x38] sm:$0xff]
    %v3562 = vld [vmem:[#allocation12] sm:$0xff]
    %v3563 = vld [vmem:[#allocation12 + $0x8] sm:$0xff]
    %v3564 = vld [vmem:[#allocation12 + $0x10] sm:$0xff]
    %v3565 = vld [vmem:[#allocation12 + $0x18] sm:$0xff]
    %v3566 = vld [vmem:[#allocation12 + $0x20] sm:$0xff]
    %v3567 = vld [vmem:[#allocation12 + $0x28] sm:$0xff]
    %v3568 = vld [vmem:[#allocation12 + $0x30] sm:$0xff]
    %v3569 = vld [vmem:[#allocation12 + $0x38] sm:$0xff]
    %v3570 = vmul.f32 %v3554, %v3562
    %v3571 = vmul.f32 %v3555, %v3563
    %v3572 = vmul.f32 %v3556, %v3564
    %v3573 = vmul.f32 %v3557, %v3565
    %v3574 = vmul.f32 %v3558, %v3566
    %v3575 = vmul.f32 %v3559, %v3567
    %v3576 = vmul.f32 %v3560, %v3568
    %v3577 = vmul.f32 %v3561, %v3569
    %v3578 = vld [vmem:[#allocation13] sm:$0xff]
    %v3579 = vld [vmem:[#allocation13 + $0x8] sm:$0xff]
    %v3580 = vld [vmem:[#allocation13 + $0x10] sm:$0xff]
    %v3581 = vld [vmem:[#allocation13 + $0x18] sm:$0xff]
    %v3582 = vld [vmem:[#allocation13 + $0x20] sm:$0xff]
    %v3583 = vld [vmem:[#allocation13 + $0x28] sm:$0xff]
    %v3584 = vld [vmem:[#allocation13 + $0x30] sm:$0xff]
    %v3585 = vld [vmem:[#allocation13 + $0x38] sm:$0xff]
    %v3586 = vld [vmem:[#allocation13 + $0x40] sm:$0xff]
    %v3587 = vld [vmem:[#allocation13 + $0x48] sm:$0xff]
    %v3588 = vld [vmem:[#allocation13 + $0x50] sm:$0xff]
    %v3589 = vld [vmem:[#allocation13 + $0x58] sm:$0xff]
    %v3590 = vld [vmem:[#allocation13 + $0x60] sm:$0xff]
    %v3591 = vld [vmem:[#allocation13 + $0x68] sm:$0xff]
    %v3592 = vld [vmem:[#allocation13 + $0x70] sm:$0xff]
    %v3593 = vld [vmem:[#allocation13 + $0x78] sm:$0xff]
    %v3594 = vld [vmem:[%s8] sm:$0x1]
    %v3596 = vlaneseq
    %v3597 = vshrl.u32 %v3596, 7
    %v3598 = vsub.s32 0, %v3597
    %v3599 = vrot.slane %v3594, %v3598
    %3601 = vmatprep.subr.mxu0 0.0
    %3602 = vmatpush1.msra.mxu0 %v3593
    %3603 = vmatprep.subr.mxu0 0.0
    %3604 = vmatpush1.msra.mxu0 %v3592
    %3605 = vmatprep.subr.mxu0 0.0
    %3606 = vmatpush1.msra.mxu0 %v3591
    %3607 = vmatprep.subr.mxu0 0.0
    %3608 = vmatpush1.msra.mxu0 %v3590
    %3609 = vmatprep.subr.mxu0 0.0
    %3610 = vmatpush1.msra.mxu0 %v3589
    %3611 = vmatprep.subr.mxu0 0.0
    %3612 = vmatpush1.msra.mxu0 %v3588
    %3613 = vmatprep.subr.mxu0 0.0
    %3614 = vmatpush1.msra.mxu0 %v3587
    %3615 = vmatprep.subr.mxu0 0.0
    %3616 = vmatpush1.msra.mxu0 %v3586
    %3617 = vmatprep.subr.mxu0 0.0
    %3618 = vmatpush1.msra.mxu0 %v3585
    %3619 = vmatprep.subr.mxu0 0.0
    %3620 = vmatpush1.msra.mxu0 %v3584
    %3621 = vmatprep.subr.mxu0 0.0
    %3622 = vmatpush1.msra.mxu0 %v3583
    %3623 = vmatprep.subr.mxu0 0.0
    %3624 = vmatpush1.msra.mxu0 %v3582
    %3625 = vmatprep.subr.mxu0 0.0
    %3626 = vmatpush1.msra.mxu0 %v3581
    %3627 = vmatprep.subr.mxu0 0.0
    %3628 = vmatpush1.msra.mxu0 %v3580
    %3629 = vmatprep.subr.mxu0 0.0
    %3630 = vmatpush1.msra.mxu0 %v3579
    %3631 = vmatprep.subr.mxu0 0.0
    %3632 = vmatpush1.msra.mxu0 %v3578
    %3633 = vmatprep.subr.mxu0 0.0
    %3634 = vmatpush2.msra.mxu0 0.0
    %3635 = vmatprep.subr.mxu0 0.0
    %3636 = vmatpush2.msra.mxu0 0.0
    %3637 = vmatprep.subr.mxu0 0.0
    %3638 = vmatpush2.msra.mxu0 0.0
    %3639 = vmatprep.subr.mxu0 0.0
    %3640 = vmatpush2.msra.mxu0 0.0
    %3641 = vmatprep.subr.mxu0 0.0
    %3642 = vmatpush2.msra.mxu0 0.0
    %3643 = vmatprep.subr.mxu0 0.0
    %3644 = vmatpush2.msra.mxu0 0.0
    %3645 = vmatprep.subr.mxu0 0.0
    %3646 = vmatpush2.msra.mxu0 0.0
    %3647 = vmatprep.subr.mxu0 0.0
    %3648 = vmatpush2.msra.mxu0 0.0
    %3649 = vmatprep.subr.mxu0 0.0
    %3650 = vmatpush2.msra.mxu0 0.0
    %3651 = vmatprep.subr.mxu0 0.0
    %3652 = vmatpush2.msra.mxu0 0.0
    %3653 = vmatprep.subr.mxu0 0.0
    %3654 = vmatpush2.msra.mxu0 0.0
    %3655 = vmatprep.subr.mxu0 0.0
    %3656 = vmatpush2.msra.mxu0 0.0
    %3657 = vmatprep.subr.mxu0 0.0
    %3658 = vmatpush2.msra.mxu0 0.0
    %3659 = vmatprep.subr.mxu0 0.0
    %3660 = vmatpush2.msra.mxu0 0.0
    %3661 = vmatprep.subr.mxu0 0.0
    %3662 = vmatpush2.msra.mxu0 0.0
    %3663 = vmatprep.subr.mxu0 0.0
    %3664 = vmatpush2.msra.mxu0 0.0
    %3665 = vmatprep.mubr.f32.mxu0 0.0
    %3666 = vmatmul.mubr.f32.gmra.mxu0 %v3570
    %v3667 = vpop.f32.mrf.mxu0
    %v3668 = vadd.f32 %v3599, %v3667
    %v3669 = vpop.f32.mrf.mxu0
    %3670 = vmatprep.mubr.f32.mxu0 0.0
    %3671 = vmatmul.mubr.f32.gmra.mxu0 %v3571
    %v3672 = vpop.f32.mrf.mxu0
    %v3673 = vadd.f32 %v3599, %v3672
    %v3674 = vpop.f32.mrf.mxu0
    %3675 = vmatprep.mubr.f32.mxu0 0.0
    %3676 = vmatmul.mubr.f32.gmra.mxu0 %v3572
    %v3677 = vpop.f32.mrf.mxu0
    %v3678 = vadd.f32 %v3599, %v3677
    %v3679 = vpop.f32.mrf.mxu0
    %3680 = vmatprep.mubr.f32.mxu0 0.0
    %3681 = vmatmul.mubr.f32.gmra.mxu0 %v3573
    %v3682 = vpop.f32.mrf.mxu0
    %v3683 = vadd.f32 %v3599, %v3682
    %v3684 = vpop.f32.mrf.mxu0
    %3685 = vmatprep.mubr.f32.mxu0 0.0
    %3686 = vmatmul.mubr.f32.gmra.mxu0 %v3574
    %v3687 = vpop.f32.mrf.mxu0
    %v3688 = vadd.f32 %v3599, %v3687
    %v3689 = vpop.f32.mrf.mxu0
    %3690 = vmatprep.mubr.f32.mxu0 0.0
    %3691 = vmatmul.mubr.f32.gmra.mxu0 %v3575
    %v3692 = vpop.f32.mrf.mxu0
    %v3693 = vadd.f32 %v3599, %v3692
    %v3694 = vpop.f32.mrf.mxu0
    %3695 = vmatprep.mubr.f32.mxu0 0.0
    %3696 = vmatmul.mubr.f32.gmra.mxu0 %v3576
    %v3697 = vpop.f32.mrf.mxu0
    %v3698 = vadd.f32 %v3599, %v3697
    %v3699 = vpop.f32.mrf.mxu0
    %3700 = vmatprep.mubr.f32.mxu0 0.0
    %3701 = vmatmul.mubr.f32.gmra.mxu0 %v3577
    %v3702 = vpop.f32.mrf.mxu0
    %v3703 = vadd.f32 %v3599, %v3702
    %v3704 = vpop.f32.mrf.mxu0
    %3705 = vdwg.mxu0
    %3706 = vst [vmem:[#allocation15] sm:$0xff] %v3668
    %3707 = vst [vmem:[#allocation15 + $0x8] sm:$0xff] %v3673
    %3708 = vst [vmem:[#allocation15 + $0x10] sm:$0xff] %v3678
    %3709 = vst [vmem:[#allocation15 + $0x18] sm:$0xff] %v3683
    %3710 = vst [vmem:[#allocation15 + $0x20] sm:$0xff] %v3688
    %3711 = vst [vmem:[#allocation15 + $0x28] sm:$0xff] %v3693
    %3712 = vst [vmem:[#allocation15 + $0x30] sm:$0xff] %v3698
    %3713 = vst [vmem:[#allocation15 + $0x38] sm:$0xff] %v3703
    // Predicated region
    $region62: #{tpu_custom_call.1} parent=1 // pred_check
      _
    $region63: #{tpu_custom_call.1} parent=1 // pred_check_branch
      %3715 = sbr.rel (0) target = $region65
    $region64: #{tpu_custom_call.1} parent=1 // pred_region
      %s3717 = ssub.s32 1024, 1024
      %3718 = vsyncadd [#allocation6], %s3717
      %s3719 = sshll.u32 [#allocation15], 4
      %s3720 = int_to_ptr.vmem [resolvable:$true] %s3719
      %3725 = dma.vmem_to_hbm [thread:$0]  %s3720, 1024, %s9, [#allocation6], 128, 128, 8
    $region65: #{tpu_custom_call.1} parent=1 // pred_fallthru
      _
    // Predicated region
    $region66: #{tpu_custom_call.1} parent=1 // pred_check
      _
    $region67: #{tpu_custom_call.1} parent=1 // pred_check_branch
      %3727 = sbr.rel (0) target = $region69
    $region68: #{tpu_custom_call.1} parent=1 // pred_region
      %s3729 = ssub.s32 256, 256
      %3730 = vsyncadd [#allocation17], %s3729
      %s3731 = sshll.u32 [#allocation16], 4
      %s3732 = int_to_ptr.vmem [resolvable:$true] %s3731
      %3737 = dma.vmem_to_hbm [thread:$0]  %s3732, 256, %s10, [#allocation17], 128, 128, 8
    $region69: #{tpu_custom_call.1} parent=1 // pred_fallthru
      _
    // Predicated region
    $region70: #{tpu_custom_call.1} parent=1 // pred_check
      _
    $region71: #{tpu_custom_call.1} parent=1 // pred_check_branch
      %3739 = sbr.rel (0) target = $region73
    $region72: #{tpu_custom_call.1} parent=1 // pred_region
      %3740 = dma.done [#allocation6], 1024
    $region73: #{tpu_custom_call.1} parent=1 // pred_fallthru
      _
    // Predicated region
    $region74: #{tpu_custom_call.1} parent=1 // pred_check
      _
    $region75: #{tpu_custom_call.1} parent=1 // pred_check_branch
      %3742 = sbr.rel (0) target = $region77
    $region76: #{tpu_custom_call.1} parent=1 // pred_region
      %3743 = dma.done [#allocation17], 256
    $region77: #{tpu_custom_call.1} parent=1 // pred_fallthru
      _
    %3744 = vsyncpa [#allocation5], 1
    %3745 = vsyncpa [#allocation8], 1
    %3746 = vsyncpa [#allocation11], 1
    %3747 = vsyncpa [#allocation14], 1
    %3748 = vsyncpa [#allocation6], 1
    %3749 = vsyncpa [#allocation17], 1

</llo_original>
